<compile_context>
chip_gen: v6e
topology: v6e:2x2x1
jax: 0.10.0
libtpu: 0.0.40
codegen_flags: <defaults>
</compile_context>

<pallas_src>
import jax
import jax.numpy as jnp
from jax import lax
from jax.experimental import pallas as pl
from jax.experimental.pallas import tpu as pltpu


def _round_up(v, m):
    return ((v + m - 1) // m) * m


def rnn_recurrence_kernel(xw_ref, h0_ref, wh_hbm_ref, out_ref,
                          wh_vmem, h_scratch, wh_sem):
    """One time-chunk of the recurrence.

    xw_ref    : (t_chunk, Bp, Hp) VMEM  precomputed x[t] @ W_in^T + (b_in + b_h)
    h0_ref    : (Bp, Hp)          VMEM  initial hidden state
    wh_hbm_ref: (Hp, Hp)          HBM   W_h^T (pre-transposed)
    out_ref   : (t_chunk, Bp, Hp) VMEM  hidden states (aliases xw in HBM)
    wh_vmem   : (Hp, Hp)          VMEM  resident single-buffered copy of W_h^T
    h_scratch : (Bp, Hp)          VMEM  hidden state carried across chunks
    wh_sem    : DMA semaphore for the one-shot W_h^T copy
    """
    c = pl.program_id(0)

    @pl.when(c == 0)
    def _init():
        # Single-buffer the grid-invariant recurrent weight: one DMA for the
        # whole call instead of a double-buffered pipelined operand.
        cp = pltpu.make_async_copy(wh_hbm_ref, wh_vmem, wh_sem)
        cp.start()
        cp.wait()
        h_scratch[...] = h0_ref[...]

    t_chunk = xw_ref.shape[0]
    wh = wh_vmem[...]                      # (Hp, Hp) f32, loop-invariant

    def step(t, h):
        # Only the sequential part (h @ W_h^T, add, tanh) remains per step.
        h_new = jnp.tanh(
            xw_ref[t]
            + jnp.dot(h, wh,
                      precision=lax.Precision.HIGHEST,
                      preferred_element_type=jnp.float32))
        out_ref[t] = h_new.astype(out_ref.dtype)   # lane-dense (8k,128k) store
        return h_new

    # fori_loop (not a Python for) bounds vreg live ranges; a moderate unroll
    # keeps LLO scheduler visibility without code bloat at large t_chunk.
    unroll = min(t_chunk, 8)
    while t_chunk % unroll:
        unroll -= 1
    h_scratch[...] = lax.fori_loop(0, t_chunk, step, h_scratch[...],
                                   unroll=unroll)


def rnn_forward(x, h0, w_in, b_in, w_h, b_h, *, t_chunk=None):
    """x: (L, B, E); h0: (B, H); w_in: (H, E); w_h: (H, H); biases: (H,)."""
    L, B, E = x.shape
    H = h0.shape[1]
    f32 = jnp.float32

    # --- Pad to the (8, 128) vreg tile: B -> sublanes, H -> lanes. ---------
    # Padded hidden columns / batch rows stay exactly zero / isolated through
    # the recurrence (zero W_h^T rows+cols, zero xw, tanh(0)=0) and are sliced
    # away at the end.
    B_pad = _round_up(B, 8)
    H_pad = _round_up(H, 128)

    w_in_p = jnp.zeros((H_pad, E), f32).at[:H, :].set(w_in.astype(f32))
    b_p = jnp.zeros((H_pad,), f32).at[:H].set((b_in + b_h).astype(f32))
    w_h_tp = jnp.zeros((H_pad, H_pad), f32).at[:H, :H].set(w_h.T.astype(f32))
    x_p = jnp.zeros((L, B_pad, E), f32).at[:, :B, :].set(x.astype(f32))
    h0_p = jnp.zeros((B_pad, H_pad), f32).at[:B, :H].set(h0.astype(f32))

    # --- Hoisted input projection: one MXU matmul, both biases folded in. ---
    # tanh(xW_in^T + b_in + hW_h^T + b_h) == tanh((xW_in^T + (b_in+b_h)) + hW_h^T)
    xw = (jnp.dot(x_p.reshape(L * B_pad, E), w_in_p.T,
                  precision=lax.Precision.HIGHEST,
                  preferred_element_type=f32)
          + b_p).reshape(L, B_pad, H_pad)

    # --- Time-chunk size: amortize ~0.35us/grid-step overhead while keeping ---
    # the double-buffered in/out chunk slabs within a v7x-safe VMEM budget.
    row_bytes = B_pad * H_pad * 4
    resident = (H_pad * H_pad + 3 * B_pad * H_pad) * 4  # W_h + h_scratch + 2x h0
    budget = 32 * 1024 * 1024
    if t_chunk is None:
        cap = max(1, (budget - resident) // (4 * row_bytes))  # 2x in + 2x out
        t_chunk = min(L, 128, cap)
        while L % t_chunk:
            t_chunk -= 1
    assert L % t_chunk == 0, "sequence length must be divisible by t_chunk"
    n_chunks = L // t_chunk

    est_vmem = 4 * t_chunk * row_bytes + resident
    vmem_limit = int(min(max(2 * est_vmem, 8 << 20), 48 << 20))

    grid_spec = pltpu.PrefetchScalarGridSpec(
        num_scalar_prefetch=0,
        grid=(n_chunks,),
        in_specs=[
            pl.BlockSpec((t_chunk, B_pad, H_pad), lambda c: (c, 0, 0)),  # xw
            pl.BlockSpec((B_pad, H_pad), lambda c: (0, 0)),              # h0
            pl.BlockSpec(memory_space=pl.ANY),          # W_h^T stays in HBM
        ],
        out_specs=pl.BlockSpec((t_chunk, B_pad, H_pad), lambda c: (c, 0, 0)),
        scratch_shapes=[
            pltpu.VMEM((H_pad, H_pad), f32),   # resident single-buffered W_h^T
            pltpu.VMEM((B_pad, H_pad), f32),   # hidden state carried across chunks
            pltpu.SemaphoreType.DMA,           # one-shot W_h^T DMA
        ],
    )

    out = pl.pallas_call(
        rnn_recurrence_kernel,
        out_shape=jax.ShapeDtypeStruct((L, B_pad, H_pad), f32),
        grid_spec=grid_spec,
        # xw is consumed in place: the hidden states overwrite the same HBM
        # slab (no separate (L,B,H) output allocation).
        input_output_aliases={0: 0},
        compiler_params=pltpu.CompilerParams(
            # Time MUST stay sequential: h_scratch carries state across chunks.
            dimension_semantics=("arbitrary",),
            vmem_limit_bytes=vmem_limit,
        ),
    )(xw, h0_p, w_h_tp)

    return out[:, :B, :H]


def rnn_forward_ref(x, h0, w_in, b_in, w_h, b_h):
    """Pure-JAX reference mirroring the PyTorch loop (full f32 precision)."""
    def step(h, x_t):
        h_new = jnp.tanh(
            jnp.dot(x_t, w_in.T, precision=lax.Precision.HIGHEST)
            + b_in
            + jnp.dot(h, w_h.T, precision=lax.Precision.HIGHEST)
            + b_h)
        return h_new, h_new
    _, hs = lax.scan(step, h0, x)
    return hs


if __name__ == "__main__":
    # Module hyper-parameters (consistent with __init__ shapes).
    vocab_size = 28          # len(LETTRES) + 2 (synthetic)
    embedding_dim = 16
    hidden_dim = 32
    output_dim = vocab_size
    seq_len = 8
    batch = 4

    key = jax.random.PRNGKey(0)
    keys = jax.random.split(key, 8)

    # Deterministic parameter init.
    emb_w = jax.random.uniform(keys[0], (vocab_size, embedding_dim),
                               jnp.float32, -0.1, 0.1)
    w_in = jax.random.uniform(keys[1], (hidden_dim, embedding_dim),
                              jnp.float32, -0.25, 0.25)
    b_in = jax.random.uniform(keys[2], (hidden_dim,), jnp.float32, -0.25, 0.25)
    w_h = jax.random.uniform(keys[3], (hidden_dim, hidden_dim),
                             jnp.float32, -0.18, 0.18)
    b_h = jax.random.uniform(keys[4], (hidden_dim,), jnp.float32, -0.18, 0.18)
    w_dec = jax.random.uniform(keys[5], (output_dim, hidden_dim),
                               jnp.float32, -0.18, 0.18)
    b_dec = jax.random.uniform(keys[6], (output_dim,), jnp.float32, -0.18, 0.18)

    # Token ids -> embedding lookup (glue, plain JAX), fed as (L, B, E).
    tokens = jax.random.randint(keys[7], (seq_len, batch), 0, vocab_size)
    x = emb_w[tokens]                              # (L, B, E)
    h0 = jnp.zeros((batch, hidden_dim), jnp.float32)

    rnn_fwd = jax.jit(rnn_forward)
    h_seq = jax.block_until_ready(rnn_fwd(x, h0, w_in, b_in, w_h, b_h))

    # Correctness check against a pure-JAX reference of the PyTorch loop.
    h_ref = rnn_forward_ref(x, h0, w_in, b_in, w_h, b_h)
    assert h_seq.shape == (seq_len, batch, hidden_dim)
    err = float(jnp.max(jnp.abs(h_seq - h_ref)))
    assert jnp.allclose(h_seq, h_ref, atol=1e-5, rtol=1e-5), err

    # decode() is a plain Linear on a hidden state (glue; not part of forward()).
    logits = h_seq[-1] @ w_dec.T + b_dec
    jax.block_until_ready(logits)

    print("KERNEL_OK")
</pallas_src>

<mosaic_0001>
module attributes {stable_mosaic.version = 11 : i64} {
  func.func @rnn_recurrence_kernel(%arg0: i32, %arg1: memref<8x8x128xf32, #tpu.memory_space<vmem>>, %arg2: memref<8x128xf32, #tpu.memory_space<vmem>>, %arg3: memref<128x128xf32, #tpu.memory_space<any>>, %arg4: memref<8x8x128xf32, #tpu.memory_space<vmem>>, %arg5: memref<128x128xf32, #tpu.memory_space<vmem>>, %arg6: memref<8x128xf32, #tpu.memory_space<vmem>>, %arg7: memref<!tpu.dma_semaphore, #tpu.memory_space<semaphore_mem>>) attributes {dimension_semantics = [#tpu.dimension_semantics<arbitrary>], iteration_bounds = array<i64: 1>, scalar_prefetch = 0 : i64, scratch_operands = 3 : i64, tpu.core_type = #tpu.core_type<tc>, window_params = [{transform_indices = @transform_0, window_bounds = array<i64: 8, 8, 128>}, {pipeline_mode = #tpu.pipeline_mode<synchronous>, transform_indices = @transform_1, window_bounds = array<i64: 8, 128>}, {}, {transform_indices = @transform_3, window_bounds = array<i64: 8, 8, 128>}]} {
    %c0_i32 = arith.constant 0 : i32
    %0 = arith.cmpi eq, %arg0, %c0_i32 : i32
    %1 = arith.extui %0 : i1 to i32
    %c0_i32_0 = arith.constant 0 : i32
    %2 = arith.cmpi ne, %1, %c0_i32_0 : i32
    scf.if %2 {
      tpu.enqueue_dma source(%arg3 : memref<128x128xf32, #tpu.memory_space<any>>) target(%arg5 : memref<128x128xf32, #tpu.memory_space<vmem>>) target_semaphore(%arg7 : memref<!tpu.dma_semaphore, #tpu.memory_space<semaphore_mem>>)
      tpu.wait_dma2 semaphore(%arg7 : memref<!tpu.dma_semaphore, #tpu.memory_space<semaphore_mem>>) src(%arg3 : memref<128x128xf32, #tpu.memory_space<any>>) dst(%arg5 : memref<128x128xf32, #tpu.memory_space<vmem>>)
      %c0_46 = arith.constant 0 : index
      %c0_47 = arith.constant 0 : index
      %86 = vector.load %arg2[%c0_46, %c0_47] : memref<8x128xf32, #tpu.memory_space<vmem>>, vector<8x128xf32>
      %c0_48 = arith.constant 0 : index
      %c0_49 = arith.constant 0 : index
      %87 = vector.load %arg6[%c0_48, %c0_49] : memref<8x128xf32, #tpu.memory_space<vmem>>, vector<8x128xf32>
      tpu.vector_store %arg6[%c0_48, %c0_49], %86 {strides = array<i32>} : memref<8x128xf32, #tpu.memory_space<vmem>>, vector<8x128xf32>,
    } else {
    }
    %c0 = arith.constant 0 : index
    %c0_1 = arith.constant 0 : index
    %3 = vector.load %arg5[%c0, %c0_1] : memref<128x128xf32, #tpu.memory_space<vmem>>, vector<128x128xf32>
    %c0_2 = arith.constant 0 : index
    %c0_3 = arith.constant 0 : index
    %4 = vector.load %arg6[%c0_2, %c0_3] : memref<8x128xf32, #tpu.memory_space<vmem>>, vector<8x128xf32>
    %c0_i32_4 = arith.constant 0 : i32
    %5 = arith.index_cast %c0_i32_4 : i32 to index
    %c0_5 = arith.constant 0 : index
    %c0_6 = arith.constant 0 : index
    %6 = vector.load %arg1[%5, %c0_5, %c0_6] : memref<8x8x128xf32, #tpu.memory_space<vmem>>, vector<1x8x128xf32>
    %7 = vector.shape_cast %6 : vector<1x8x128xf32> to vector<8x128xf32>
    %cst = arith.constant dense<0.000000e+00> : vector<8x128xf32>
    %8 = tpu.matmul %4, %3, %cst {dimension_numbers = #tpu.dot_dimension_numbers<[1], [0], [0], [1], [0, 0, 1, 1], [], []>, precision = #tpu.contract_precision<fp32>} : vector<8x128xf32>, vector<128x128xf32>, vector<8x128xf32> -> vector<8x128xf32>
    %9 = arith.addf %7, %8 : vector<8x128xf32>
    %10 = math.tanh %9 : vector<8x128xf32>
    %11 = arith.index_cast %c0_i32_4 : i32 to index
    %c0_7 = arith.constant 0 : index
    %c0_8 = arith.constant 0 : index
    %12 = vector.load %arg4[%11, %c0_7, %c0_8] : memref<8x8x128xf32, #tpu.memory_space<vmem>>, vector<1x8x128xf32>
    %13 = vector.shape_cast %12 : vector<1x8x128xf32> to vector<8x128xf32>
    %14 = vector.shape_cast %10 : vector<8x128xf32> to vector<1x8x128xf32>
    tpu.vector_store %arg4[%11, %c0_7, %c0_8], %14 {strides = array<i32>} : memref<8x8x128xf32, #tpu.memory_space<vmem>>, vector<1x8x128xf32>,
    %c1_i32 = arith.constant 1 : i32
    %15 = arith.index_cast %c1_i32 : i32 to index
    %c0_9 = arith.constant 0 : index
    %c0_10 = arith.constant 0 : index
    %16 = vector.load %arg1[%15, %c0_9, %c0_10] : memref<8x8x128xf32, #tpu.memory_space<vmem>>, vector<1x8x128xf32>
    %17 = vector.shape_cast %16 : vector<1x8x128xf32> to vector<8x128xf32>
    %cst_11 = arith.constant dense<0.000000e+00> : vector<8x128xf32>
    %18 = tpu.matmul %10, %3, %cst_11 {dimension_numbers = #tpu.dot_dimension_numbers<[1], [0], [0], [1], [0, 0, 1, 1], [], []>, precision = #tpu.contract_precision<fp32>} : vector<8x128xf32>, vector<128x128xf32>, vector<8x128xf32> -> vector<8x128xf32>
    %19 = arith.addf %17, %18 : vector<8x128xf32>
    %20 = math.tanh %19 : vector<8x128xf32>
    %21 = arith.index_cast %c1_i32 : i32 to index
    %c0_12 = arith.constant 0 : index
    %c0_13 = arith.constant 0 : index
    %22 = vector.load %arg4[%21, %c0_12, %c0_13] : memref<8x8x128xf32, #tpu.memory_space<vmem>>, vector<1x8x128xf32>
    %23 = vector.shape_cast %22 : vector<1x8x128xf32> to vector<8x128xf32>
    %24 = vector.shape_cast %20 : vector<8x128xf32> to vector<1x8x128xf32>
    tpu.vector_store %arg4[%21, %c0_12, %c0_13], %24 {strides = array<i32>} : memref<8x8x128xf32, #tpu.memory_space<vmem>>, vector<1x8x128xf32>,
    %c2_i32 = arith.constant 2 : i32
    %25 = arith.index_cast %c2_i32 : i32 to index
    %c0_14 = arith.constant 0 : index
    %c0_15 = arith.constant 0 : index
    %26 = vector.load %arg1[%25, %c0_14, %c0_15] : memref<8x8x128xf32, #tpu.memory_space<vmem>>, vector<1x8x128xf32>
    %27 = vector.shape_cast %26 : vector<1x8x128xf32> to vector<8x128xf32>
    %cst_16 = arith.constant dense<0.000000e+00> : vector<8x128xf32>
    %28 = tpu.matmul %20, %3, %cst_16 {dimension_numbers = #tpu.dot_dimension_numbers<[1], [0], [0], [1], [0, 0, 1, 1], [], []>, precision = #tpu.contract_precision<fp32>} : vector<8x128xf32>, vector<128x128xf32>, vector<8x128xf32> -> vector<8x128xf32>
    %29 = arith.addf %27, %28 : vector<8x128xf32>
    %30 = math.tanh %29 : vector<8x128xf32>
    %31 = arith.index_cast %c2_i32 : i32 to index
    %c0_17 = arith.constant 0 : index
    %c0_18 = arith.constant 0 : index
    %32 = vector.load %arg4[%31, %c0_17, %c0_18] : memref<8x8x128xf32, #tpu.memory_space<vmem>>, vector<1x8x128xf32>
    %33 = vector.shape_cast %32 : vector<1x8x128xf32> to vector<8x128xf32>
    %34 = vector.shape_cast %30 : vector<8x128xf32> to vector<1x8x128xf32>
    tpu.vector_store %arg4[%31, %c0_17, %c0_18], %34 {strides = array<i32>} : memref<8x8x128xf32, #tpu.memory_space<vmem>>, vector<1x8x128xf32>,
    %c3_i32 = arith.constant 3 : i32
    %35 = arith.index_cast %c3_i32 : i32 to index
    %c0_19 = arith.constant 0 : index
    %c0_20 = arith.constant 0 : index
    %36 = vector.load %arg1[%35, %c0_19, %c0_20] : memref<8x8x128xf32, #tpu.memory_space<vmem>>, vector<1x8x128xf32>
    %37 = vector.shape_cast %36 : vector<1x8x128xf32> to vector<8x128xf32>
    %cst_21 = arith.constant dense<0.000000e+00> : vector<8x128xf32>
    %38 = tpu.matmul %30, %3, %cst_21 {dimension_numbers = #tpu.dot_dimension_numbers<[1], [0], [0], [1], [0, 0, 1, 1], [], []>, precision = #tpu.contract_precision<fp32>} : vector<8x128xf32>, vector<128x128xf32>, vector<8x128xf32> -> vector<8x128xf32>
    %39 = arith.addf %37, %38 : vector<8x128xf32>
    %40 = math.tanh %39 : vector<8x128xf32>
    %41 = arith.index_cast %c3_i32 : i32 to index
    %c0_22 = arith.constant 0 : index
    %c0_23 = arith.constant 0 : index
    %42 = vector.load %arg4[%41, %c0_22, %c0_23] : memref<8x8x128xf32, #tpu.memory_space<vmem>>, vector<1x8x128xf32>
    %43 = vector.shape_cast %42 : vector<1x8x128xf32> to vector<8x128xf32>
    %44 = vector.shape_cast %40 : vector<8x128xf32> to vector<1x8x128xf32>
    tpu.vector_store %arg4[%41, %c0_22, %c0_23], %44 {strides = array<i32>} : memref<8x8x128xf32, #tpu.memory_space<vmem>>, vector<1x8x128xf32>,
    %c4_i32 = arith.constant 4 : i32
    %45 = arith.index_cast %c4_i32 : i32 to index
    %c0_24 = arith.constant 0 : index
    %c0_25 = arith.constant 0 : index
    %46 = vector.load %arg1[%45, %c0_24, %c0_25] : memref<8x8x128xf32, #tpu.memory_space<vmem>>, vector<1x8x128xf32>
    %47 = vector.shape_cast %46 : vector<1x8x128xf32> to vector<8x128xf32>
    %cst_26 = arith.constant dense<0.000000e+00> : vector<8x128xf32>
    %48 = tpu.matmul %40, %3, %cst_26 {dimension_numbers = #tpu.dot_dimension_numbers<[1], [0], [0], [1], [0, 0, 1, 1], [], []>, precision = #tpu.contract_precision<fp32>} : vector<8x128xf32>, vector<128x128xf32>, vector<8x128xf32> -> vector<8x128xf32>
    %49 = arith.addf %47, %48 : vector<8x128xf32>
    %50 = math.tanh %49 : vector<8x128xf32>
    %51 = arith.index_cast %c4_i32 : i32 to index
    %c0_27 = arith.constant 0 : index
    %c0_28 = arith.constant 0 : index
    %52 = vector.load %arg4[%51, %c0_27, %c0_28] : memref<8x8x128xf32, #tpu.memory_space<vmem>>, vector<1x8x128xf32>
    %53 = vector.shape_cast %52 : vector<1x8x128xf32> to vector<8x128xf32>
    %54 = vector.shape_cast %50 : vector<8x128xf32> to vector<1x8x128xf32>
    tpu.vector_store %arg4[%51, %c0_27, %c0_28], %54 {strides = array<i32>} : memref<8x8x128xf32, #tpu.memory_space<vmem>>, vector<1x8x128xf32>,
    %c5_i32 = arith.constant 5 : i32
    %55 = arith.index_cast %c5_i32 : i32 to index
    %c0_29 = arith.constant 0 : index
    %c0_30 = arith.constant 0 : index
    %56 = vector.load %arg1[%55, %c0_29, %c0_30] : memref<8x8x128xf32, #tpu.memory_space<vmem>>, vector<1x8x128xf32>
    %57 = vector.shape_cast %56 : vector<1x8x128xf32> to vector<8x128xf32>
    %cst_31 = arith.constant dense<0.000000e+00> : vector<8x128xf32>
    %58 = tpu.matmul %50, %3, %cst_31 {dimension_numbers = #tpu.dot_dimension_numbers<[1], [0], [0], [1], [0, 0, 1, 1], [], []>, precision = #tpu.contract_precision<fp32>} : vector<8x128xf32>, vector<128x128xf32>, vector<8x128xf32> -> vector<8x128xf32>
    %59 = arith.addf %57, %58 : vector<8x128xf32>
    %60 = math.tanh %59 : vector<8x128xf32>
    %61 = arith.index_cast %c5_i32 : i32 to index
    %c0_32 = arith.constant 0 : index
    %c0_33 = arith.constant 0 : index
    %62 = vector.load %arg4[%61, %c0_32, %c0_33] : memref<8x8x128xf32, #tpu.memory_space<vmem>>, vector<1x8x128xf32>
    %63 = vector.shape_cast %62 : vector<1x8x128xf32> to vector<8x128xf32>
    %64 = vector.shape_cast %60 : vector<8x128xf32> to vector<1x8x128xf32>
    tpu.vector_store %arg4[%61, %c0_32, %c0_33], %64 {strides = array<i32>} : memref<8x8x128xf32, #tpu.memory_space<vmem>>, vector<1x8x128xf32>,
    %c6_i32 = arith.constant 6 : i32
    %65 = arith.index_cast %c6_i32 : i32 to index
    %c0_34 = arith.constant 0 : index
    %c0_35 = arith.constant 0 : index
    %66 = vector.load %arg1[%65, %c0_34, %c0_35] : memref<8x8x128xf32, #tpu.memory_space<vmem>>, vector<1x8x128xf32>
    %67 = vector.shape_cast %66 : vector<1x8x128xf32> to vector<8x128xf32>
    %cst_36 = arith.constant dense<0.000000e+00> : vector<8x128xf32>
    %68 = tpu.matmul %60, %3, %cst_36 {dimension_numbers = #tpu.dot_dimension_numbers<[1], [0], [0], [1], [0, 0, 1, 1], [], []>, precision = #tpu.contract_precision<fp32>} : vector<8x128xf32>, vector<128x128xf32>, vector<8x128xf32> -> vector<8x128xf32>
    %69 = arith.addf %67, %68 : vector<8x128xf32>
    %70 = math.tanh %69 : vector<8x128xf32>
    %71 = arith.index_cast %c6_i32 : i32 to index
    %c0_37 = arith.constant 0 : index
    %c0_38 = arith.constant 0 : index
    %72 = vector.load %arg4[%71, %c0_37, %c0_38] : memref<8x8x128xf32, #tpu.memory_space<vmem>>, vector<1x8x128xf32>
    %73 = vector.shape_cast %72 : vector<1x8x128xf32> to vector<8x128xf32>
    %74 = vector.shape_cast %70 : vector<8x128xf32> to vector<1x8x128xf32>
    tpu.vector_store %arg4[%71, %c0_37, %c0_38], %74 {strides = array<i32>} : memref<8x8x128xf32, #tpu.memory_space<vmem>>, vector<1x8x128xf32>,
    %c7_i32 = arith.constant 7 : i32
    %75 = arith.index_cast %c7_i32 : i32 to index
    %c0_39 = arith.constant 0 : index
    %c0_40 = arith.constant 0 : index
    %76 = vector.load %arg1[%75, %c0_39, %c0_40] : memref<8x8x128xf32, #tpu.memory_space<vmem>>, vector<1x8x128xf32>
    %77 = vector.shape_cast %76 : vector<1x8x128xf32> to vector<8x128xf32>
    %cst_41 = arith.constant dense<0.000000e+00> : vector<8x128xf32>
    %78 = tpu.matmul %70, %3, %cst_41 {dimension_numbers = #tpu.dot_dimension_numbers<[1], [0], [0], [1], [0, 0, 1, 1], [], []>, precision = #tpu.contract_precision<fp32>} : vector<8x128xf32>, vector<128x128xf32>, vector<8x128xf32> -> vector<8x128xf32>
    %79 = arith.addf %77, %78 : vector<8x128xf32>
    %80 = math.tanh %79 : vector<8x128xf32>
    %81 = arith.index_cast %c7_i32 : i32 to index
    %c0_42 = arith.constant 0 : index
    %c0_43 = arith.constant 0 : index
    %82 = vector.load %arg4[%81, %c0_42, %c0_43] : memref<8x8x128xf32, #tpu.memory_space<vmem>>, vector<1x8x128xf32>
    %83 = vector.shape_cast %82 : vector<1x8x128xf32> to vector<8x128xf32>
    %84 = vector.shape_cast %80 : vector<8x128xf32> to vector<1x8x128xf32>
    tpu.vector_store %arg4[%81, %c0_42, %c0_43], %84 {strides = array<i32>} : memref<8x8x128xf32, #tpu.memory_space<vmem>>, vector<1x8x128xf32>,
    %c8_i32 = arith.constant 8 : i32
    %c0_44 = arith.constant 0 : index
    %c0_45 = arith.constant 0 : index
    %85 = vector.load %arg6[%c0_44, %c0_45] : memref<8x128xf32, #tpu.memory_space<vmem>>, vector<8x128xf32>
    tpu.vector_store %arg6[%c0_44, %c0_45], %80 {strides = array<i32>} : memref<8x128xf32, #tpu.memory_space<vmem>>, vector<8x128xf32>,
    return
  }
  func.func @transform_0(%arg0: i32) -> (i32, i32, i32) {
    %c0_i32 = arith.constant 0 : i32
    %c0_i32_0 = arith.constant 0 : i32
    %c0_i32_1 = arith.constant 0 : i32
    return %arg0, %c0_i32, %c0_i32_0 : i32, i32, i32
  }
  func.func @transform_1(%arg0: i32) -> (i32, i32) {
    %c0_i32 = arith.constant 0 : i32
    %c0_i32_0 = arith.constant 0 : i32
    %c0_i32_1 = arith.constant 0 : i32
    return %c0_i32, %c0_i32_0 : i32, i32
  }
  func.func @transform_3(%arg0: i32) -> (i32, i32, i32) {
    %c0_i32 = arith.constant 0 : i32
    %c0_i32_0 = arith.constant 0 : i32
    %c0_i32_1 = arith.constant 0 : i32
    return %arg0, %c0_i32, %c0_i32_0 : i32, i32, i32
  }
}

</mosaic_0001>

<llo_original>
// kernel: rnn_forward.1
$region0: #{rnn_forward.1}
  #allocation0 [shape = 'u32[]', space=smem, size = 0x4, offset = 0x4, fixed_abs, tag = 'smem constant byte address 0x4 - core index']
  #allocation1 [shape = 'u32[144,128]{1,0:T(1,128)}', space=vmem, size = 0x12000, scoped, tag = 'internal scratch']
  #allocation2 [shape = 'f32[128,128]{1,0:T(8,128)}', space=vmem, size = 0x10000, scoped, tag = 'scratch operand']
  #allocation3 [shape = 'f32[8,128]{1,0:T(8,128)}', space=vmem, size = 0x1000, scoped, tag = 'scratch operand']
  #allocation4 [shape = 's32[1]{0}', space=sflag, size = 0x4, scoped, tag = 'scratch operand']
  #allocation5 [shape = 's32[]', space=sflag, size = 0x4, offset = 0, fixed_abs, tag = 'sflag constant byte address 0x0 - dummy sync flag']
  %s0 = inlined_call_operand.vmem [shape: f32[8,8,128], index: 0, kind: input, shape index: {}, may-alias: {0,3}]
  %s1 = inlined_call_operand.vmem [shape: f32[8,128], index: 1, kind: input, shape index: {}]
  %s2 = inlined_call_operand.vmem [shape: f32[128,128], index: 2, kind: input, shape index: {}]
  %s3 = inlined_call_operand.vmem [shape: f32[8,8,128], index: 3, kind: output, shape index: {}, may-alias: {0,3}]
  %s4 = sld [smem:[#allocation0]]
  $region56: #{rnn_forward.1} parent=0
    _
  %s6 = ssub.s32 1, %s4
  %s7 = scalar_select 0, %s6, %s4
  // Predicated region
  $region2: #{rnn_forward.1} parent=0 // pred_check
    _
  $region3: #{rnn_forward.1} parent=0 // pred_check_branch
    %9 = sbr.rel (0) target = $region5
  $region4: #{rnn_forward.1} parent=0 // pred_region
    _
  $region5: #{rnn_forward.1} parent=0 // pred_fallthru
    _
  // Predicated region
  $region6: #{rnn_forward.1} parent=0 // pred_check
    _
  $region7: #{rnn_forward.1} parent=0 // pred_check_branch
    %11 = sbr.rel (0) target = $region9
  $region8: #{rnn_forward.1} parent=0 // pred_region
    _
  $region9: #{rnn_forward.1} parent=0 // pred_fallthru
    _
  %p12 = scmp.eq.s32.totalorder 0, 0
  // Predicated region
  $region10: #{rnn_forward.1} parent=0 // pred_check
    %p13 = pneg %p12
  $region11: #{rnn_forward.1} parent=0 // pred_check_branch
    %15 = sbr.rel (%p13) target = $region13
  $region12: #{rnn_forward.1} parent=0 // pred_region
    %p17 = scmp.lt.u32.totalorder 128, 8
    %p18 = pneg %p17
    // Predicated region
    $region14: #{rnn_forward.1} parent=12 // pred_check
      _
    $region15: #{rnn_forward.1} parent=12 // pred_check_branch
      %20 = sbr.rel (%p17) target = $region17
    $region16: #{rnn_forward.1} parent=12 // pred_region
      %s36 = sand.u32 128, 7
      %p37 = scmp.eq.s32.totalorder %s36, 0
      // Predicated region
      $region29: #{rnn_forward.1} parent=16 // pred_check
        %p38 = pneg %p37
      $region30: #{rnn_forward.1} parent=16 // pred_check_branch
        %40 = sbr.rel (%p38) target = $region32
      $region31: #{rnn_forward.1} parent=16 // pred_region
        loop: start=0, step=1, limit=1
        $region33: #{rnn_forward.1} parent=31 // loop_pre_header
          _
        $region34: #{rnn_forward.1} parent=31 // loop_header
          %s42 = sphi 0, %s46
          %p43 = scmp.ge.s32.totalorder %s42, 1
          %s47 = sphi %s2, %s2
          %s48 = sphi [#allocation2], [#allocation2]
        $region35: #{rnn_forward.1} parent=31 // loop_header_branch
          %45 = sbr.rel (%p43) target = $region39
        $region36: #{rnn_forward.1} parent=31 // loop_body
          %v49 = vld [vmem:[%s47] sm:$0xff]
          %50 = vst [vmem:[%s48] sm:$0xff] %v49
          %v51 = vld [vmem:[%s47 + $0x8] sm:$0xff]
          %52 = vst [vmem:[%s48 + $0x8] sm:$0xff] %v51
          %v53 = vld [vmem:[%s47 + $0x10] sm:$0xff]
          %54 = vst [vmem:[%s48 + $0x10] sm:$0xff] %v53
          %v55 = vld [vmem:[%s47 + $0x18] sm:$0xff]
          %56 = vst [vmem:[%s48 + $0x18] sm:$0xff] %v55
          %v57 = vld [vmem:[%s47 + $0x20] sm:$0xff]
          %58 = vst [vmem:[%s48 + $0x20] sm:$0xff] %v57
          %v59 = vld [vmem:[%s47 + $0x28] sm:$0xff]
          %60 = vst [vmem:[%s48 + $0x28] sm:$0xff] %v59
          %v61 = vld [vmem:[%s47 + $0x30] sm:$0xff]
          %62 = vst [vmem:[%s48 + $0x30] sm:$0xff] %v61
          %v63 = vld [vmem:[%s47 + $0x38] sm:$0xff]
          %64 = vst [vmem:[%s48 + $0x38] sm:$0xff] %v63
          %v65 = vld [vmem:[%s47 + $0x40] sm:$0xff]
          %66 = vst [vmem:[%s48 + $0x40] sm:$0xff] %v65
          %v67 = vld [vmem:[%s47 + $0x48] sm:$0xff]
          %68 = vst [vmem:[%s48 + $0x48] sm:$0xff] %v67
          %v69 = vld [vmem:[%s47 + $0x50] sm:$0xff]
          %70 = vst [vmem:[%s48 + $0x50] sm:$0xff] %v69
          %v71 = vld [vmem:[%s47 + $0x58] sm:$0xff]
          %72 = vst [vmem:[%s48 + $0x58] sm:$0xff] %v71
          %v73 = vld [vmem:[%s47 + $0x60] sm:$0xff]
          %74 = vst [vmem:[%s48 + $0x60] sm:$0xff] %v73
          %v75 = vld [vmem:[%s47 + $0x68] sm:$0xff]
          %76 = vst [vmem:[%s48 + $0x68] sm:$0xff] %v75
          %v77 = vld [vmem:[%s47 + $0x70] sm:$0xff]
          %78 = vst [vmem:[%s48 + $0x70] sm:$0xff] %v77
          %v79 = vld [vmem:[%s47 + $0x78] sm:$0xff]
          %80 = vst [vmem:[%s48 + $0x78] sm:$0xff] %v79
        $region37: #{rnn_forward.1} parent=31 // loop_footer
          %s46 = sadd.s32 1, %s42
        $region38: #{rnn_forward.1} parent=31 // loop_footer_branch
          %41 = sbr.rel target = $region34
        $region39: #{rnn_forward.1} parent=31 // loop_exit
          _
      $region32: #{rnn_forward.1} parent=16 // pred_fallthru
        _
      %p81 = pneg %p37
      // Predicated region
      $region40: #{rnn_forward.1} parent=16 // pred_check
        _
      $region41: #{rnn_forward.1} parent=16 // pred_check_branch
        %83 = sbr.rel (%p37) target = $region43
      $region42: #{rnn_forward.1} parent=16 // pred_region
        %s84 = sand.u32 128, 7
      $region43: #{rnn_forward.1} parent=16 // pred_fallthru
        _
    $region17: #{rnn_forward.1} parent=12 // pred_fallthru
      _
    // Predicated region
    $region18: #{rnn_forward.1} parent=12 // pred_check
      %p21 = pneg %p17
    $region19: #{rnn_forward.1} parent=12 // pred_check_branch
      %23 = sbr.rel (%p21) target = $region21
    $region20: #{rnn_forward.1} parent=12 // pred_region
      %s24 = sshll.u32 1, 128
      %s25 = ssub.s32 %s24, 1
      loop: start=0, step=1, limit=1
      $region22: #{rnn_forward.1} parent=20 // loop_pre_header
        _
      $region23: #{rnn_forward.1} parent=20 // loop_header
        %s27 = sphi 0, %s31
        %p28 = scmp.ge.s32.totalorder %s27, 1
        %s32 = sphi %s2, %s2
        %s33 = sphi [#allocation2], [#allocation2]
      $region24: #{rnn_forward.1} parent=20 // loop_header_branch
        %30 = sbr.rel (%p28) target = $region28
      $region25: #{rnn_forward.1} parent=20 // loop_body
        %v34 = vld [vmem:[%s32] sm:%s25]
        %35 = vst [vmem:[%s33] sm:%s25] %v34
      $region26: #{rnn_forward.1} parent=20 // loop_footer
        %s31 = sadd.s32 1, %s27
      $region27: #{rnn_forward.1} parent=20 // loop_footer_branch
        %26 = sbr.rel target = $region23
      $region28: #{rnn_forward.1} parent=20 // loop_exit
        _
    $region21: #{rnn_forward.1} parent=12 // pred_fallthru
      _
    // Predicated region
    $region44: #{rnn_forward.1} parent=12 // pred_check
      _
    $region45: #{rnn_forward.1} parent=12 // pred_check_branch
      %87 = sbr.rel (0) target = $region47
    $region46: #{rnn_forward.1} parent=12 // pred_region
      %88 = vsyncadd [#allocation4], 2048
    $region47: #{rnn_forward.1} parent=12 // pred_fallthru
      _
    %s89 = smul.u32 128, 1
    %s90 = sshll.u32 %s89, 4
    %91 = dma.done [#allocation4], %s90
    %v92 = vld [vmem:[%s1] sm:$0xff]
    %93 = vst [vmem:[#allocation3] sm:$0xff] %v92
  $region13: #{rnn_forward.1} parent=0 // pred_fallthru
    _
  %v94 = vld [vmem:[#allocation2] sm:$0xff]
  %v95 = vld [vmem:[#allocation2 + $0x8] sm:$0xff]
  %v96 = vld [vmem:[#allocation2 + $0x10] sm:$0xff]
  %v97 = vld [vmem:[#allocation2 + $0x18] sm:$0xff]
  %v98 = vld [vmem:[#allocation2 + $0x20] sm:$0xff]
  %v99 = vld [vmem:[#allocation2 + $0x28] sm:$0xff]
  %v100 = vld [vmem:[#allocation2 + $0x30] sm:$0xff]
  %v101 = vld [vmem:[#allocation2 + $0x38] sm:$0xff]
  %v102 = vld [vmem:[#allocation2 + $0x40] sm:$0xff]
  %v103 = vld [vmem:[#allocation2 + $0x48] sm:$0xff]
  %v104 = vld [vmem:[#allocation2 + $0x50] sm:$0xff]
  %v105 = vld [vmem:[#allocation2 + $0x58] sm:$0xff]
  %v106 = vld [vmem:[#allocation2 + $0x60] sm:$0xff]
  %v107 = vld [vmem:[#allocation2 + $0x68] sm:$0xff]
  %v108 = vld [vmem:[#allocation2 + $0x70] sm:$0xff]
  %v109 = vld [vmem:[#allocation2 + $0x78] sm:$0xff]
  %v110 = vld [vmem:[#allocation3] sm:$0xff]
  %v111 = vld [vmem:[%s0] sm:$0xff]
  %112 = vmatprep.subr.mxu0 0.0
  %v113 = vand.u32 %v109, 4294901760
  %114 = vmatpush1.msra.mxu0 %v113
  %115 = vmatprep.subr.mxu0 0.0
  %v116 = vand.u32 %v108, 4294901760
  %117 = vmatpush1.msra.mxu0 %v116
  %118 = vmatprep.subr.mxu0 0.0
  %v119 = vand.u32 %v107, 4294901760
  %120 = vmatpush1.msra.mxu0 %v119
  %121 = vmatprep.subr.mxu0 0.0
  %v122 = vand.u32 %v106, 4294901760
  %123 = vmatpush1.msra.mxu0 %v122
  %124 = vmatprep.subr.mxu0 0.0
  %v125 = vand.u32 %v105, 4294901760
  %126 = vmatpush1.msra.mxu0 %v125
  %127 = vmatprep.subr.mxu0 0.0
  %v128 = vand.u32 %v104, 4294901760
  %129 = vmatpush1.msra.mxu0 %v128
  %130 = vmatprep.subr.mxu0 0.0
  %v131 = vand.u32 %v103, 4294901760
  %132 = vmatpush1.msra.mxu0 %v131
  %133 = vmatprep.subr.mxu0 0.0
  %v134 = vand.u32 %v102, 4294901760
  %135 = vmatpush1.msra.mxu0 %v134
  %136 = vmatprep.subr.mxu0 0.0
  %v137 = vand.u32 %v101, 4294901760
  %138 = vmatpush1.msra.mxu0 %v137
  %139 = vmatprep.subr.mxu0 0.0
  %v140 = vand.u32 %v100, 4294901760
  %141 = vmatpush1.msra.mxu0 %v140
  %142 = vmatprep.subr.mxu0 0.0
  %v143 = vand.u32 %v99, 4294901760
  %144 = vmatpush1.msra.mxu0 %v143
  %145 = vmatprep.subr.mxu0 0.0
  %v146 = vand.u32 %v98, 4294901760
  %147 = vmatpush1.msra.mxu0 %v146
  %148 = vmatprep.subr.mxu0 0.0
  %v149 = vand.u32 %v97, 4294901760
  %150 = vmatpush1.msra.mxu0 %v149
  %151 = vmatprep.subr.mxu0 0.0
  %v152 = vand.u32 %v96, 4294901760
  %153 = vmatpush1.msra.mxu0 %v152
  %154 = vmatprep.subr.mxu0 0.0
  %v155 = vand.u32 %v95, 4294901760
  %156 = vmatpush1.msra.mxu0 %v155
  %157 = vmatprep.subr.mxu0 0.0
  %v158 = vand.u32 %v94, 4294901760
  %159 = vmatpush1.msra.mxu0 %v158
  %160 = vmatprep.subr.mxu0 0.0
  %161 = vmatpush2.msra.mxu0 0.0
  %162 = vmatprep.subr.mxu0 0.0
  %163 = vmatpush2.msra.mxu0 0.0
  %164 = vmatprep.subr.mxu0 0.0
  %165 = vmatpush2.msra.mxu0 0.0
  %166 = vmatprep.subr.mxu0 0.0
  %167 = vmatpush2.msra.mxu0 0.0
  %168 = vmatprep.subr.mxu0 0.0
  %169 = vmatpush2.msra.mxu0 0.0
  %170 = vmatprep.subr.mxu0 0.0
  %171 = vmatpush2.msra.mxu0 0.0
  %172 = vmatprep.subr.mxu0 0.0
  %173 = vmatpush2.msra.mxu0 0.0
  %174 = vmatprep.subr.mxu0 0.0
  %175 = vmatpush2.msra.mxu0 0.0
  %176 = vmatprep.subr.mxu0 0.0
  %177 = vmatpush2.msra.mxu0 0.0
  %178 = vmatprep.subr.mxu0 0.0
  %179 = vmatpush2.msra.mxu0 0.0
  %180 = vmatprep.subr.mxu0 0.0
  %181 = vmatpush2.msra.mxu0 0.0
  %182 = vmatprep.subr.mxu0 0.0
  %183 = vmatpush2.msra.mxu0 0.0
  %184 = vmatprep.subr.mxu0 0.0
  %185 = vmatpush2.msra.mxu0 0.0
  %186 = vmatprep.subr.mxu0 0.0
  %187 = vmatpush2.msra.mxu0 0.0
  %188 = vmatprep.subr.mxu0 0.0
  %189 = vmatpush2.msra.mxu0 0.0
  %190 = vmatprep.subr.mxu0 0.0
  %191 = vmatpush2.msra.mxu0 0.0
  %192 = vmatprep.mubr.f32.mxu0 0.0
  %v193 = vand.u32 %v110, 4294901760
  %v194 = vsub.f32 %v110, %v193
  %v195 = vand.u32 %v194, 4294901760
  %v196 = vsub.f32 %v194, %v195
  %v197 = vand.u32 %v196, 4294901760
  %198 = vmatmul.mubr.f32.gmra.mxu0 %v197
  %v199 = vpop.f32.mrf.mxu0
  %v200 = vadd.f32 0.0, %v199
  %v201 = vpop.f32.mrf.mxu0
  %202 = vdwg.mxu0
  %203 = vmatprep.subr.mxu0 0.0
  %v204 = vand.u32 %v109, 4294901760
  %v205 = vsub.f32 %v109, %v204
  %v206 = vand.u32 %v205, 4294901760
  %v207 = vsub.f32 %v205, %v206
  %v208 = vand.u32 %v207, 4294901760
  %209 = vmatpush1.msra.mxu0 %v208
  %210 = vmatprep.subr.mxu0 0.0
  %v211 = vand.u32 %v108, 4294901760
  %v212 = vsub.f32 %v108, %v211
  %v213 = vand.u32 %v212, 4294901760
  %v214 = vsub.f32 %v212, %v213
  %v215 = vand.u32 %v214, 4294901760
  %216 = vmatpush1.msra.mxu0 %v215
  %217 = vmatprep.subr.mxu0 0.0
  %v218 = vand.u32 %v107, 4294901760
  %v219 = vsub.f32 %v107, %v218
  %v220 = vand.u32 %v219, 4294901760
  %v221 = vsub.f32 %v219, %v220
  %v222 = vand.u32 %v221, 4294901760
  %223 = vmatpush1.msra.mxu0 %v222
  %224 = vmatprep.subr.mxu0 0.0
  %v225 = vand.u32 %v106, 4294901760
  %v226 = vsub.f32 %v106, %v225
  %v227 = vand.u32 %v226, 4294901760
  %v228 = vsub.f32 %v226, %v227
  %v229 = vand.u32 %v228, 4294901760
  %230 = vmatpush1.msra.mxu0 %v229
  %231 = vmatprep.subr.mxu0 0.0
  %v232 = vand.u32 %v105, 4294901760
  %v233 = vsub.f32 %v105, %v232
  %v234 = vand.u32 %v233, 4294901760
  %v235 = vsub.f32 %v233, %v234
  %v236 = vand.u32 %v235, 4294901760
  %237 = vmatpush1.msra.mxu0 %v236
  %238 = vmatprep.subr.mxu0 0.0
  %v239 = vand.u32 %v104, 4294901760
  %v240 = vsub.f32 %v104, %v239
  %v241 = vand.u32 %v240, 4294901760
  %v242 = vsub.f32 %v240, %v241
  %v243 = vand.u32 %v242, 4294901760
  %244 = vmatpush1.msra.mxu0 %v243
  %245 = vmatprep.subr.mxu0 0.0
  %v246 = vand.u32 %v103, 4294901760
  %v247 = vsub.f32 %v103, %v246
  %v248 = vand.u32 %v247, 4294901760
  %v249 = vsub.f32 %v247, %v248
  %v250 = vand.u32 %v249, 4294901760
  %251 = vmatpush1.msra.mxu0 %v250
  %252 = vmatprep.subr.mxu0 0.0
  %v253 = vand.u32 %v102, 4294901760
  %v254 = vsub.f32 %v102, %v253
  %v255 = vand.u32 %v254, 4294901760
  %v256 = vsub.f32 %v254, %v255
  %v257 = vand.u32 %v256, 4294901760
  %258 = vmatpush1.msra.mxu0 %v257
  %259 = vmatprep.subr.mxu0 0.0
  %v260 = vand.u32 %v101, 4294901760
  %v261 = vsub.f32 %v101, %v260
  %v262 = vand.u32 %v261, 4294901760
  %v263 = vsub.f32 %v261, %v262
  %v264 = vand.u32 %v263, 4294901760
  %265 = vmatpush1.msra.mxu0 %v264
  %266 = vmatprep.subr.mxu0 0.0
  %v267 = vand.u32 %v100, 4294901760
  %v268 = vsub.f32 %v100, %v267
  %v269 = vand.u32 %v268, 4294901760
  %v270 = vsub.f32 %v268, %v269
  %v271 = vand.u32 %v270, 4294901760
  %272 = vmatpush1.msra.mxu0 %v271
  %273 = vmatprep.subr.mxu0 0.0
  %v274 = vand.u32 %v99, 4294901760
  %v275 = vsub.f32 %v99, %v274
  %v276 = vand.u32 %v275, 4294901760
  %v277 = vsub.f32 %v275, %v276
  %v278 = vand.u32 %v277, 4294901760
  %279 = vmatpush1.msra.mxu0 %v278
  %280 = vmatprep.subr.mxu0 0.0
  %v281 = vand.u32 %v98, 4294901760
  %v282 = vsub.f32 %v98, %v281
  %v283 = vand.u32 %v282, 4294901760
  %v284 = vsub.f32 %v282, %v283
  %v285 = vand.u32 %v284, 4294901760
  %286 = vmatpush1.msra.mxu0 %v285
  %287 = vmatprep.subr.mxu0 0.0
  %v288 = vand.u32 %v97, 4294901760
  %v289 = vsub.f32 %v97, %v288
  %v290 = vand.u32 %v289, 4294901760
  %v291 = vsub.f32 %v289, %v290
  %v292 = vand.u32 %v291, 4294901760
  %293 = vmatpush1.msra.mxu0 %v292
  %294 = vmatprep.subr.mxu0 0.0
  %v295 = vand.u32 %v96, 4294901760
  %v296 = vsub.f32 %v96, %v295
  %v297 = vand.u32 %v296, 4294901760
  %v298 = vsub.f32 %v296, %v297
  %v299 = vand.u32 %v298, 4294901760
  %300 = vmatpush1.msra.mxu0 %v299
  %301 = vmatprep.subr.mxu0 0.0
  %v302 = vand.u32 %v95, 4294901760
  %v303 = vsub.f32 %v95, %v302
  %v304 = vand.u32 %v303, 4294901760
  %v305 = vsub.f32 %v303, %v304
  %v306 = vand.u32 %v305, 4294901760
  %307 = vmatpush1.msra.mxu0 %v306
  %308 = vmatprep.subr.mxu0 0.0
  %v309 = vand.u32 %v94, 4294901760
  %v310 = vsub.f32 %v94, %v309
  %v311 = vand.u32 %v310, 4294901760
  %v312 = vsub.f32 %v310, %v311
  %v313 = vand.u32 %v312, 4294901760
  %314 = vmatpush1.msra.mxu0 %v313
  %315 = vmatprep.subr.mxu0 0.0
  %316 = vmatpush2.msra.mxu0 0.0
  %317 = vmatprep.subr.mxu0 0.0
  %318 = vmatpush2.msra.mxu0 0.0
  %319 = vmatprep.subr.mxu0 0.0
  %320 = vmatpush2.msra.mxu0 0.0
  %321 = vmatprep.subr.mxu0 0.0
  %322 = vmatpush2.msra.mxu0 0.0
  %323 = vmatprep.subr.mxu0 0.0
  %324 = vmatpush2.msra.mxu0 0.0
  %325 = vmatprep.subr.mxu0 0.0
  %326 = vmatpush2.msra.mxu0 0.0
  %327 = vmatprep.subr.mxu0 0.0
  %328 = vmatpush2.msra.mxu0 0.0
  %329 = vmatprep.subr.mxu0 0.0
  %330 = vmatpush2.msra.mxu0 0.0
  %331 = vmatprep.subr.mxu0 0.0
  %332 = vmatpush2.msra.mxu0 0.0
  %333 = vmatprep.subr.mxu0 0.0
  %334 = vmatpush2.msra.mxu0 0.0
  %335 = vmatprep.subr.mxu0 0.0
  %336 = vmatpush2.msra.mxu0 0.0
  %337 = vmatprep.subr.mxu0 0.0
  %338 = vmatpush2.msra.mxu0 0.0
  %339 = vmatprep.subr.mxu0 0.0
  %340 = vmatpush2.msra.mxu0 0.0
  %341 = vmatprep.subr.mxu0 0.0
  %342 = vmatpush2.msra.mxu0 0.0
  %343 = vmatprep.subr.mxu0 0.0
  %344 = vmatpush2.msra.mxu0 0.0
  %345 = vmatprep.subr.mxu0 0.0
  %346 = vmatpush2.msra.mxu0 0.0
  %347 = vmatprep.mubr.f32.mxu0 0.0
  %v348 = vand.u32 %v110, 4294901760
  %349 = vmatmul.mubr.f32.gmra.mxu0 %v348
  %v350 = vpop.f32.mrf.mxu0
  %v351 = vadd.f32 %v200, %v350
  %v352 = vpop.f32.mrf.mxu0
  %353 = vdwg.mxu0
  %354 = vmatprep.subr.mxu0 0.0
  %v355 = vand.u32 %v109, 4294901760
  %v356 = vsub.f32 %v109, %v355
  %357 = vmatpush1.msra.mxu0 %v356
  %358 = vmatprep.subr.mxu0 0.0
  %v359 = vand.u32 %v108, 4294901760
  %v360 = vsub.f32 %v108, %v359
  %361 = vmatpush1.msra.mxu0 %v360
  %362 = vmatprep.subr.mxu0 0.0
  %v363 = vand.u32 %v107, 4294901760
  %v364 = vsub.f32 %v107, %v363
  %365 = vmatpush1.msra.mxu0 %v364
  %366 = vmatprep.subr.mxu0 0.0
  %v367 = vand.u32 %v106, 4294901760
  %v368 = vsub.f32 %v106, %v367
  %369 = vmatpush1.msra.mxu0 %v368
  %370 = vmatprep.subr.mxu0 0.0
  %v371 = vand.u32 %v105, 4294901760
  %v372 = vsub.f32 %v105, %v371
  %373 = vmatpush1.msra.mxu0 %v372
  %374 = vmatprep.subr.mxu0 0.0
  %v375 = vand.u32 %v104, 4294901760
  %v376 = vsub.f32 %v104, %v375
  %377 = vmatpush1.msra.mxu0 %v376
  %378 = vmatprep.subr.mxu0 0.0
  %v379 = vand.u32 %v103, 4294901760
  %v380 = vsub.f32 %v103, %v379
  %381 = vmatpush1.msra.mxu0 %v380
  %382 = vmatprep.subr.mxu0 0.0
  %v383 = vand.u32 %v102, 4294901760
  %v384 = vsub.f32 %v102, %v383
  %385 = vmatpush1.msra.mxu0 %v384
  %386 = vmatprep.subr.mxu0 0.0
  %v387 = vand.u32 %v101, 4294901760
  %v388 = vsub.f32 %v101, %v387
  %389 = vmatpush1.msra.mxu0 %v388
  %390 = vmatprep.subr.mxu0 0.0
  %v391 = vand.u32 %v100, 4294901760
  %v392 = vsub.f32 %v100, %v391
  %393 = vmatpush1.msra.mxu0 %v392
  %394 = vmatprep.subr.mxu0 0.0
  %v395 = vand.u32 %v99, 4294901760
  %v396 = vsub.f32 %v99, %v395
  %397 = vmatpush1.msra.mxu0 %v396
  %398 = vmatprep.subr.mxu0 0.0
  %v399 = vand.u32 %v98, 4294901760
  %v400 = vsub.f32 %v98, %v399
  %401 = vmatpush1.msra.mxu0 %v400
  %402 = vmatprep.subr.mxu0 0.0
  %v403 = vand.u32 %v97, 4294901760
  %v404 = vsub.f32 %v97, %v403
  %405 = vmatpush1.msra.mxu0 %v404
  %406 = vmatprep.subr.mxu0 0.0
  %v407 = vand.u32 %v96, 4294901760
  %v408 = vsub.f32 %v96, %v407
  %409 = vmatpush1.msra.mxu0 %v408
  %410 = vmatprep.subr.mxu0 0.0
  %v411 = vand.u32 %v95, 4294901760
  %v412 = vsub.f32 %v95, %v411
  %413 = vmatpush1.msra.mxu0 %v412
  %414 = vmatprep.subr.mxu0 0.0
  %v415 = vand.u32 %v94, 4294901760
  %v416 = vsub.f32 %v94, %v415
  %417 = vmatpush1.msra.mxu0 %v416
  %418 = vmatprep.subr.mxu0 0.0
  %419 = vmatpush2.msra.mxu0 0.0
  %420 = vmatprep.subr.mxu0 0.0
  %421 = vmatpush2.msra.mxu0 0.0
  %422 = vmatprep.subr.mxu0 0.0
  %423 = vmatpush2.msra.mxu0 0.0
  %424 = vmatprep.subr.mxu0 0.0
  %425 = vmatpush2.msra.mxu0 0.0
  %426 = vmatprep.subr.mxu0 0.0
  %427 = vmatpush2.msra.mxu0 0.0
  %428 = vmatprep.subr.mxu0 0.0
  %429 = vmatpush2.msra.mxu0 0.0
  %430 = vmatprep.subr.mxu0 0.0
  %431 = vmatpush2.msra.mxu0 0.0
  %432 = vmatprep.subr.mxu0 0.0
  %433 = vmatpush2.msra.mxu0 0.0
  %434 = vmatprep.subr.mxu0 0.0
  %435 = vmatpush2.msra.mxu0 0.0
  %436 = vmatprep.subr.mxu0 0.0
  %437 = vmatpush2.msra.mxu0 0.0
  %438 = vmatprep.subr.mxu0 0.0
  %439 = vmatpush2.msra.mxu0 0.0
  %440 = vmatprep.subr.mxu0 0.0
  %441 = vmatpush2.msra.mxu0 0.0
  %442 = vmatprep.subr.mxu0 0.0
  %443 = vmatpush2.msra.mxu0 0.0
  %444 = vmatprep.subr.mxu0 0.0
  %445 = vmatpush2.msra.mxu0 0.0
  %446 = vmatprep.subr.mxu0 0.0
  %447 = vmatpush2.msra.mxu0 0.0
  %448 = vmatprep.subr.mxu0 0.0
  %449 = vmatpush2.msra.mxu0 0.0
  %450 = vmatprep.mubr.f32.mxu0 0.0
  %v451 = vand.u32 %v110, 4294901760
  %v452 = vsub.f32 %v110, %v451
  %453 = vmatmul.mubr.f32.gmra.mxu0 %v452
  %v454 = vpop.f32.mrf.mxu0
  %v455 = vadd.f32 %v351, %v454
  %v456 = vpop.f32.mrf.mxu0
  %457 = vdwg.mxu0
  %458 = vmatprep.subr.mxu0 0.0
  %v459 = vand.u32 %v109, 4294901760
  %460 = vmatpush1.msra.mxu0 %v459
  %461 = vmatprep.subr.mxu0 0.0
  %v462 = vand.u32 %v108, 4294901760
  %463 = vmatpush1.msra.mxu0 %v462
  %464 = vmatprep.subr.mxu0 0.0
  %v465 = vand.u32 %v107, 4294901760
  %466 = vmatpush1.msra.mxu0 %v465
  %467 = vmatprep.subr.mxu0 0.0
  %v468 = vand.u32 %v106, 4294901760
  %469 = vmatpush1.msra.mxu0 %v468
  %470 = vmatprep.subr.mxu0 0.0
  %v471 = vand.u32 %v105, 4294901760
  %472 = vmatpush1.msra.mxu0 %v471
  %473 = vmatprep.subr.mxu0 0.0
  %v474 = vand.u32 %v104, 4294901760
  %475 = vmatpush1.msra.mxu0 %v474
  %476 = vmatprep.subr.mxu0 0.0
  %v477 = vand.u32 %v103, 4294901760
  %478 = vmatpush1.msra.mxu0 %v477
  %479 = vmatprep.subr.mxu0 0.0
  %v480 = vand.u32 %v102, 4294901760
  %481 = vmatpush1.msra.mxu0 %v480
  %482 = vmatprep.subr.mxu0 0.0
  %v483 = vand.u32 %v101, 4294901760
  %484 = vmatpush1.msra.mxu0 %v483
  %485 = vmatprep.subr.mxu0 0.0
  %v486 = vand.u32 %v100, 4294901760
  %487 = vmatpush1.msra.mxu0 %v486
  %488 = vmatprep.subr.mxu0 0.0
  %v489 = vand.u32 %v99, 4294901760
  %490 = vmatpush1.msra.mxu0 %v489
  %491 = vmatprep.subr.mxu0 0.0
  %v492 = vand.u32 %v98, 4294901760
  %493 = vmatpush1.msra.mxu0 %v492
  %494 = vmatprep.subr.mxu0 0.0
  %v495 = vand.u32 %v97, 4294901760
  %496 = vmatpush1.msra.mxu0 %v495
  %497 = vmatprep.subr.mxu0 0.0
  %v498 = vand.u32 %v96, 4294901760
  %499 = vmatpush1.msra.mxu0 %v498
  %500 = vmatprep.subr.mxu0 0.0
  %v501 = vand.u32 %v95, 4294901760
  %502 = vmatpush1.msra.mxu0 %v501
  %503 = vmatprep.subr.mxu0 0.0
  %v504 = vand.u32 %v94, 4294901760
  %505 = vmatpush1.msra.mxu0 %v504
  %506 = vmatprep.subr.mxu0 0.0
  %507 = vmatpush2.msra.mxu0 0.0
  %508 = vmatprep.subr.mxu0 0.0
  %509 = vmatpush2.msra.mxu0 0.0
  %510 = vmatprep.subr.mxu0 0.0
  %511 = vmatpush2.msra.mxu0 0.0
  %512 = vmatprep.subr.mxu0 0.0
  %513 = vmatpush2.msra.mxu0 0.0
  %514 = vmatprep.subr.mxu0 0.0
  %515 = vmatpush2.msra.mxu0 0.0
  %516 = vmatprep.subr.mxu0 0.0
  %517 = vmatpush2.msra.mxu0 0.0
  %518 = vmatprep.subr.mxu0 0.0
  %519 = vmatpush2.msra.mxu0 0.0
  %520 = vmatprep.subr.mxu0 0.0
  %521 = vmatpush2.msra.mxu0 0.0
  %522 = vmatprep.subr.mxu0 0.0
  %523 = vmatpush2.msra.mxu0 0.0
  %524 = vmatprep.subr.mxu0 0.0
  %525 = vmatpush2.msra.mxu0 0.0
  %526 = vmatprep.subr.mxu0 0.0
  %527 = vmatpush2.msra.mxu0 0.0
  %528 = vmatprep.subr.mxu0 0.0
  %529 = vmatpush2.msra.mxu0 0.0
  %530 = vmatprep.subr.mxu0 0.0
  %531 = vmatpush2.msra.mxu0 0.0
  %532 = vmatprep.subr.mxu0 0.0
  %533 = vmatpush2.msra.mxu0 0.0
  %534 = vmatprep.subr.mxu0 0.0
  %535 = vmatpush2.msra.mxu0 0.0
  %536 = vmatprep.subr.mxu0 0.0
  %537 = vmatpush2.msra.mxu0 0.0
  %538 = vmatprep.mubr.f32.mxu0 0.0
  %v539 = vand.u32 %v110, 4294901760
  %v540 = vsub.f32 %v110, %v539
  %v541 = vand.u32 %v540, 4294901760
  %542 = vmatmul.mubr.f32.gmra.mxu0 %v541
  %v543 = vpop.f32.mrf.mxu0
  %v544 = vadd.f32 %v455, %v543
  %v545 = vpop.f32.mrf.mxu0
  %546 = vdwg.mxu0
  %547 = vmatprep.subr.mxu0 0.0
  %v548 = vand.u32 %v109, 4294901760
  %v549 = vsub.f32 %v109, %v548
  %v550 = vand.u32 %v549, 4294901760
  %551 = vmatpush1.msra.mxu0 %v550
  %552 = vmatprep.subr.mxu0 0.0
  %v553 = vand.u32 %v108, 4294901760
  %v554 = vsub.f32 %v108, %v553
  %v555 = vand.u32 %v554, 4294901760
  %556 = vmatpush1.msra.mxu0 %v555
  %557 = vmatprep.subr.mxu0 0.0
  %v558 = vand.u32 %v107, 4294901760
  %v559 = vsub.f32 %v107, %v558
  %v560 = vand.u32 %v559, 4294901760
  %561 = vmatpush1.msra.mxu0 %v560
  %562 = vmatprep.subr.mxu0 0.0
  %v563 = vand.u32 %v106, 4294901760
  %v564 = vsub.f32 %v106, %v563
  %v565 = vand.u32 %v564, 4294901760
  %566 = vmatpush1.msra.mxu0 %v565
  %567 = vmatprep.subr.mxu0 0.0
  %v568 = vand.u32 %v105, 4294901760
  %v569 = vsub.f32 %v105, %v568
  %v570 = vand.u32 %v569, 4294901760
  %571 = vmatpush1.msra.mxu0 %v570
  %572 = vmatprep.subr.mxu0 0.0
  %v573 = vand.u32 %v104, 4294901760
  %v574 = vsub.f32 %v104, %v573
  %v575 = vand.u32 %v574, 4294901760
  %576 = vmatpush1.msra.mxu0 %v575
  %577 = vmatprep.subr.mxu0 0.0
  %v578 = vand.u32 %v103, 4294901760
  %v579 = vsub.f32 %v103, %v578
  %v580 = vand.u32 %v579, 4294901760
  %581 = vmatpush1.msra.mxu0 %v580
  %582 = vmatprep.subr.mxu0 0.0
  %v583 = vand.u32 %v102, 4294901760
  %v584 = vsub.f32 %v102, %v583
  %v585 = vand.u32 %v584, 4294901760
  %586 = vmatpush1.msra.mxu0 %v585
  %587 = vmatprep.subr.mxu0 0.0
  %v588 = vand.u32 %v101, 4294901760
  %v589 = vsub.f32 %v101, %v588
  %v590 = vand.u32 %v589, 4294901760
  %591 = vmatpush1.msra.mxu0 %v590
  %592 = vmatprep.subr.mxu0 0.0
  %v593 = vand.u32 %v100, 4294901760
  %v594 = vsub.f32 %v100, %v593
  %v595 = vand.u32 %v594, 4294901760
  %596 = vmatpush1.msra.mxu0 %v595
  %597 = vmatprep.subr.mxu0 0.0
  %v598 = vand.u32 %v99, 4294901760
  %v599 = vsub.f32 %v99, %v598
  %v600 = vand.u32 %v599, 4294901760
  %601 = vmatpush1.msra.mxu0 %v600
  %602 = vmatprep.subr.mxu0 0.0
  %v603 = vand.u32 %v98, 4294901760
  %v604 = vsub.f32 %v98, %v603
  %v605 = vand.u32 %v604, 4294901760
  %606 = vmatpush1.msra.mxu0 %v605
  %607 = vmatprep.subr.mxu0 0.0
  %v608 = vand.u32 %v97, 4294901760
  %v609 = vsub.f32 %v97, %v608
  %v610 = vand.u32 %v609, 4294901760
  %611 = vmatpush1.msra.mxu0 %v610
  %612 = vmatprep.subr.mxu0 0.0
  %v613 = vand.u32 %v96, 4294901760
  %v614 = vsub.f32 %v96, %v613
  %v615 = vand.u32 %v614, 4294901760
  %616 = vmatpush1.msra.mxu0 %v615
  %617 = vmatprep.subr.mxu0 0.0
  %v618 = vand.u32 %v95, 4294901760
  %v619 = vsub.f32 %v95, %v618
  %v620 = vand.u32 %v619, 4294901760
  %621 = vmatpush1.msra.mxu0 %v620
  %622 = vmatprep.subr.mxu0 0.0
  %v623 = vand.u32 %v94, 4294901760
  %v624 = vsub.f32 %v94, %v623
  %v625 = vand.u32 %v624, 4294901760
  %626 = vmatpush1.msra.mxu0 %v625
  %627 = vmatprep.subr.mxu0 0.0
  %628 = vmatpush2.msra.mxu0 0.0
  %629 = vmatprep.subr.mxu0 0.0
  %630 = vmatpush2.msra.mxu0 0.0
  %631 = vmatprep.subr.mxu0 0.0
  %632 = vmatpush2.msra.mxu0 0.0
  %633 = vmatprep.subr.mxu0 0.0
  %634 = vmatpush2.msra.mxu0 0.0
  %635 = vmatprep.subr.mxu0 0.0
  %636 = vmatpush2.msra.mxu0 0.0
  %637 = vmatprep.subr.mxu0 0.0
  %638 = vmatpush2.msra.mxu0 0.0
  %639 = vmatprep.subr.mxu0 0.0
  %640 = vmatpush2.msra.mxu0 0.0
  %641 = vmatprep.subr.mxu0 0.0
  %642 = vmatpush2.msra.mxu0 0.0
  %643 = vmatprep.subr.mxu0 0.0
  %644 = vmatpush2.msra.mxu0 0.0
  %645 = vmatprep.subr.mxu0 0.0
  %646 = vmatpush2.msra.mxu0 0.0
  %647 = vmatprep.subr.mxu0 0.0
  %648 = vmatpush2.msra.mxu0 0.0
  %649 = vmatprep.subr.mxu0 0.0
  %650 = vmatpush2.msra.mxu0 0.0
  %651 = vmatprep.subr.mxu0 0.0
  %652 = vmatpush2.msra.mxu0 0.0
  %653 = vmatprep.subr.mxu0 0.0
  %654 = vmatpush2.msra.mxu0 0.0
  %655 = vmatprep.subr.mxu0 0.0
  %656 = vmatpush2.msra.mxu0 0.0
  %657 = vmatprep.subr.mxu0 0.0
  %658 = vmatpush2.msra.mxu0 0.0
  %659 = vmatprep.mubr.f32.mxu0 0.0
  %v660 = vand.u32 %v110, 4294901760
  %661 = vmatmul.mubr.f32.gmra.mxu0 %v660
  %v662 = vpop.f32.mrf.mxu0
  %v663 = vadd.f32 %v544, %v662
  %v664 = vpop.f32.mrf.mxu0
  %665 = vdwg.mxu0
  %666 = vmatprep.subr.mxu0 0.0
  %v667 = vand.u32 %v109, 4294901760
  %668 = vmatpush1.msra.mxu0 %v667
  %669 = vmatprep.subr.mxu0 0.0
  %v670 = vand.u32 %v108, 4294901760
  %671 = vmatpush1.msra.mxu0 %v670
  %672 = vmatprep.subr.mxu0 0.0
  %v673 = vand.u32 %v107, 4294901760
  %674 = vmatpush1.msra.mxu0 %v673
  %675 = vmatprep.subr.mxu0 0.0
  %v676 = vand.u32 %v106, 4294901760
  %677 = vmatpush1.msra.mxu0 %v676
  %678 = vmatprep.subr.mxu0 0.0
  %v679 = vand.u32 %v105, 4294901760
  %680 = vmatpush1.msra.mxu0 %v679
  %681 = vmatprep.subr.mxu0 0.0
  %v682 = vand.u32 %v104, 4294901760
  %683 = vmatpush1.msra.mxu0 %v682
  %684 = vmatprep.subr.mxu0 0.0
  %v685 = vand.u32 %v103, 4294901760
  %686 = vmatpush1.msra.mxu0 %v685
  %687 = vmatprep.subr.mxu0 0.0
  %v688 = vand.u32 %v102, 4294901760
  %689 = vmatpush1.msra.mxu0 %v688
  %690 = vmatprep.subr.mxu0 0.0
  %v691 = vand.u32 %v101, 4294901760
  %692 = vmatpush1.msra.mxu0 %v691
  %693 = vmatprep.subr.mxu0 0.0
  %v694 = vand.u32 %v100, 4294901760
  %695 = vmatpush1.msra.mxu0 %v694
  %696 = vmatprep.subr.mxu0 0.0
  %v697 = vand.u32 %v99, 4294901760
  %698 = vmatpush1.msra.mxu0 %v697
  %699 = vmatprep.subr.mxu0 0.0
  %v700 = vand.u32 %v98, 4294901760
  %701 = vmatpush1.msra.mxu0 %v700
  %702 = vmatprep.subr.mxu0 0.0
  %v703 = vand.u32 %v97, 4294901760
  %704 = vmatpush1.msra.mxu0 %v703
  %705 = vmatprep.subr.mxu0 0.0
  %v706 = vand.u32 %v96, 4294901760
  %707 = vmatpush1.msra.mxu0 %v706
  %708 = vmatprep.subr.mxu0 0.0
  %v709 = vand.u32 %v95, 4294901760
  %710 = vmatpush1.msra.mxu0 %v709
  %711 = vmatprep.subr.mxu0 0.0
  %v712 = vand.u32 %v94, 4294901760
  %713 = vmatpush1.msra.mxu0 %v712
  %714 = vmatprep.subr.mxu0 0.0
  %715 = vmatpush2.msra.mxu0 0.0
  %716 = vmatprep.subr.mxu0 0.0
  %717 = vmatpush2.msra.mxu0 0.0
  %718 = vmatprep.subr.mxu0 0.0
  %719 = vmatpush2.msra.mxu0 0.0
  %720 = vmatprep.subr.mxu0 0.0
  %721 = vmatpush2.msra.mxu0 0.0
  %722 = vmatprep.subr.mxu0 0.0
  %723 = vmatpush2.msra.mxu0 0.0
  %724 = vmatprep.subr.mxu0 0.0
  %725 = vmatpush2.msra.mxu0 0.0
  %726 = vmatprep.subr.mxu0 0.0
  %727 = vmatpush2.msra.mxu0 0.0
  %728 = vmatprep.subr.mxu0 0.0
  %729 = vmatpush2.msra.mxu0 0.0
  %730 = vmatprep.subr.mxu0 0.0
  %731 = vmatpush2.msra.mxu0 0.0
  %732 = vmatprep.subr.mxu0 0.0
  %733 = vmatpush2.msra.mxu0 0.0
  %734 = vmatprep.subr.mxu0 0.0
  %735 = vmatpush2.msra.mxu0 0.0
  %736 = vmatprep.subr.mxu0 0.0
  %737 = vmatpush2.msra.mxu0 0.0
  %738 = vmatprep.subr.mxu0 0.0
  %739 = vmatpush2.msra.mxu0 0.0
  %740 = vmatprep.subr.mxu0 0.0
  %741 = vmatpush2.msra.mxu0 0.0
  %742 = vmatprep.subr.mxu0 0.0
  %743 = vmatpush2.msra.mxu0 0.0
  %744 = vmatprep.subr.mxu0 0.0
  %745 = vmatpush2.msra.mxu0 0.0
  %746 = vmatprep.mubr.f32.mxu0 0.0
  %v747 = vand.u32 %v110, 4294901760
  %748 = vmatmul.mubr.f32.gmra.mxu0 %v747
  %v749 = vpop.f32.mrf.mxu0
  %v750 = vadd.f32 %v663, %v749
  %v751 = vpop.f32.mrf.mxu0
  %752 = vdwg.mxu0
  %v753 = vadd.f32 %v111, %v750
  %v754 = vtanh.pop %v753
  %755 = vst [vmem:[%s3] sm:$0xff] %v754
  %s756 = scalar_lea.vmem %s0, 8
  %v757 = vld [vmem:[%s756] sm:$0xff]
  %758 = vmatprep.subr.mxu0 0.0
  %v759 = vand.u32 %v109, 4294901760
  %760 = vmatpush1.msra.mxu0 %v759
  %761 = vmatprep.subr.mxu0 0.0
  %v762 = vand.u32 %v108, 4294901760
  %763 = vmatpush1.msra.mxu0 %v762
  %764 = vmatprep.subr.mxu0 0.0
  %v765 = vand.u32 %v107, 4294901760
  %766 = vmatpush1.msra.mxu0 %v765
  %767 = vmatprep.subr.mxu0 0.0
  %v768 = vand.u32 %v106, 4294901760
  %769 = vmatpush1.msra.mxu0 %v768
  %770 = vmatprep.subr.mxu0 0.0
  %v771 = vand.u32 %v105, 4294901760
  %772 = vmatpush1.msra.mxu0 %v771
  %773 = vmatprep.subr.mxu0 0.0
  %v774 = vand.u32 %v104, 4294901760
  %775 = vmatpush1.msra.mxu0 %v774
  %776 = vmatprep.subr.mxu0 0.0
  %v777 = vand.u32 %v103, 4294901760
  %778 = vmatpush1.msra.mxu0 %v777
  %779 = vmatprep.subr.mxu0 0.0
  %v780 = vand.u32 %v102, 4294901760
  %781 = vmatpush1.msra.mxu0 %v780
  %782 = vmatprep.subr.mxu0 0.0
  %v783 = vand.u32 %v101, 4294901760
  %784 = vmatpush1.msra.mxu0 %v783
  %785 = vmatprep.subr.mxu0 0.0
  %v786 = vand.u32 %v100, 4294901760
  %787 = vmatpush1.msra.mxu0 %v786
  %788 = vmatprep.subr.mxu0 0.0
  %v789 = vand.u32 %v99, 4294901760
  %790 = vmatpush1.msra.mxu0 %v789
  %791 = vmatprep.subr.mxu0 0.0
  %v792 = vand.u32 %v98, 4294901760
  %793 = vmatpush1.msra.mxu0 %v792
  %794 = vmatprep.subr.mxu0 0.0
  %v795 = vand.u32 %v97, 4294901760
  %796 = vmatpush1.msra.mxu0 %v795
  %797 = vmatprep.subr.mxu0 0.0
  %v798 = vand.u32 %v96, 4294901760
  %799 = vmatpush1.msra.mxu0 %v798
  %800 = vmatprep.subr.mxu0 0.0
  %v801 = vand.u32 %v95, 4294901760
  %802 = vmatpush1.msra.mxu0 %v801
  %803 = vmatprep.subr.mxu0 0.0
  %v804 = vand.u32 %v94, 4294901760
  %805 = vmatpush1.msra.mxu0 %v804
  %806 = vmatprep.subr.mxu0 0.0
  %807 = vmatpush2.msra.mxu0 0.0
  %808 = vmatprep.subr.mxu0 0.0
  %809 = vmatpush2.msra.mxu0 0.0
  %810 = vmatprep.subr.mxu0 0.0
  %811 = vmatpush2.msra.mxu0 0.0
  %812 = vmatprep.subr.mxu0 0.0
  %813 = vmatpush2.msra.mxu0 0.0
  %814 = vmatprep.subr.mxu0 0.0
  %815 = vmatpush2.msra.mxu0 0.0
  %816 = vmatprep.subr.mxu0 0.0
  %817 = vmatpush2.msra.mxu0 0.0
  %818 = vmatprep.subr.mxu0 0.0
  %819 = vmatpush2.msra.mxu0 0.0
  %820 = vmatprep.subr.mxu0 0.0
  %821 = vmatpush2.msra.mxu0 0.0
  %822 = vmatprep.subr.mxu0 0.0
  %823 = vmatpush2.msra.mxu0 0.0
  %824 = vmatprep.subr.mxu0 0.0
  %825 = vmatpush2.msra.mxu0 0.0
  %826 = vmatprep.subr.mxu0 0.0
  %827 = vmatpush2.msra.mxu0 0.0
  %828 = vmatprep.subr.mxu0 0.0
  %829 = vmatpush2.msra.mxu0 0.0
  %830 = vmatprep.subr.mxu0 0.0
  %831 = vmatpush2.msra.mxu0 0.0
  %832 = vmatprep.subr.mxu0 0.0
  %833 = vmatpush2.msra.mxu0 0.0
  %834 = vmatprep.subr.mxu0 0.0
  %835 = vmatpush2.msra.mxu0 0.0
  %836 = vmatprep.subr.mxu0 0.0
  %837 = vmatpush2.msra.mxu0 0.0
  %838 = vmatprep.mubr.f32.mxu0 0.0
  %v839 = vand.u32 %v754, 4294901760
  %v840 = vsub.f32 %v754, %v839
  %v841 = vand.u32 %v840, 4294901760
  %v842 = vsub.f32 %v840, %v841
  %v843 = vand.u32 %v842, 4294901760
  %844 = vmatmul.mubr.f32.gmra.mxu0 %v843
  %v845 = vpop.f32.mrf.mxu0
  %v846 = vadd.f32 0.0, %v845
  %v847 = vpop.f32.mrf.mxu0
  %848 = vdwg.mxu0
  %849 = vmatprep.subr.mxu0 0.0
  %v850 = vand.u32 %v109, 4294901760
  %v851 = vsub.f32 %v109, %v850
  %v852 = vand.u32 %v851, 4294901760
  %v853 = vsub.f32 %v851, %v852
  %v854 = vand.u32 %v853, 4294901760
  %855 = vmatpush1.msra.mxu0 %v854
  %856 = vmatprep.subr.mxu0 0.0
  %v857 = vand.u32 %v108, 4294901760
  %v858 = vsub.f32 %v108, %v857
  %v859 = vand.u32 %v858, 4294901760
  %v860 = vsub.f32 %v858, %v859
  %v861 = vand.u32 %v860, 4294901760
  %862 = vmatpush1.msra.mxu0 %v861
  %863 = vmatprep.subr.mxu0 0.0
  %v864 = vand.u32 %v107, 4294901760
  %v865 = vsub.f32 %v107, %v864
  %v866 = vand.u32 %v865, 4294901760
  %v867 = vsub.f32 %v865, %v866
  %v868 = vand.u32 %v867, 4294901760
  %869 = vmatpush1.msra.mxu0 %v868
  %870 = vmatprep.subr.mxu0 0.0
  %v871 = vand.u32 %v106, 4294901760
  %v872 = vsub.f32 %v106, %v871
  %v873 = vand.u32 %v872, 4294901760
  %v874 = vsub.f32 %v872, %v873
  %v875 = vand.u32 %v874, 4294901760
  %876 = vmatpush1.msra.mxu0 %v875
  %877 = vmatprep.subr.mxu0 0.0
  %v878 = vand.u32 %v105, 4294901760
  %v879 = vsub.f32 %v105, %v878
  %v880 = vand.u32 %v879, 4294901760
  %v881 = vsub.f32 %v879, %v880
  %v882 = vand.u32 %v881, 4294901760
  %883 = vmatpush1.msra.mxu0 %v882
  %884 = vmatprep.subr.mxu0 0.0
  %v885 = vand.u32 %v104, 4294901760
  %v886 = vsub.f32 %v104, %v885
  %v887 = vand.u32 %v886, 4294901760
  %v888 = vsub.f32 %v886, %v887
  %v889 = vand.u32 %v888, 4294901760
  %890 = vmatpush1.msra.mxu0 %v889
  %891 = vmatprep.subr.mxu0 0.0
  %v892 = vand.u32 %v103, 4294901760
  %v893 = vsub.f32 %v103, %v892
  %v894 = vand.u32 %v893, 4294901760
  %v895 = vsub.f32 %v893, %v894
  %v896 = vand.u32 %v895, 4294901760
  %897 = vmatpush1.msra.mxu0 %v896
  %898 = vmatprep.subr.mxu0 0.0
  %v899 = vand.u32 %v102, 4294901760
  %v900 = vsub.f32 %v102, %v899
  %v901 = vand.u32 %v900, 4294901760
  %v902 = vsub.f32 %v900, %v901
  %v903 = vand.u32 %v902, 4294901760
  %904 = vmatpush1.msra.mxu0 %v903
  %905 = vmatprep.subr.mxu0 0.0
  %v906 = vand.u32 %v101, 4294901760
  %v907 = vsub.f32 %v101, %v906
  %v908 = vand.u32 %v907, 4294901760
  %v909 = vsub.f32 %v907, %v908
  %v910 = vand.u32 %v909, 4294901760
  %911 = vmatpush1.msra.mxu0 %v910
  %912 = vmatprep.subr.mxu0 0.0
  %v913 = vand.u32 %v100, 4294901760
  %v914 = vsub.f32 %v100, %v913
  %v915 = vand.u32 %v914, 4294901760
  %v916 = vsub.f32 %v914, %v915
  %v917 = vand.u32 %v916, 4294901760
  %918 = vmatpush1.msra.mxu0 %v917
  %919 = vmatprep.subr.mxu0 0.0
  %v920 = vand.u32 %v99, 4294901760
  %v921 = vsub.f32 %v99, %v920
  %v922 = vand.u32 %v921, 4294901760
  %v923 = vsub.f32 %v921, %v922
  %v924 = vand.u32 %v923, 4294901760
  %925 = vmatpush1.msra.mxu0 %v924
  %926 = vmatprep.subr.mxu0 0.0
  %v927 = vand.u32 %v98, 4294901760
  %v928 = vsub.f32 %v98, %v927
  %v929 = vand.u32 %v928, 4294901760
  %v930 = vsub.f32 %v928, %v929
  %v931 = vand.u32 %v930, 4294901760
  %932 = vmatpush1.msra.mxu0 %v931
  %933 = vmatprep.subr.mxu0 0.0
  %v934 = vand.u32 %v97, 4294901760
  %v935 = vsub.f32 %v97, %v934
  %v936 = vand.u32 %v935, 4294901760
  %v937 = vsub.f32 %v935, %v936
  %v938 = vand.u32 %v937, 4294901760
  %939 = vmatpush1.msra.mxu0 %v938
  %940 = vmatprep.subr.mxu0 0.0
  %v941 = vand.u32 %v96, 4294901760
  %v942 = vsub.f32 %v96, %v941
  %v943 = vand.u32 %v942, 4294901760
  %v944 = vsub.f32 %v942, %v943
  %v945 = vand.u32 %v944, 4294901760
  %946 = vmatpush1.msra.mxu0 %v945
  %947 = vmatprep.subr.mxu0 0.0
  %v948 = vand.u32 %v95, 4294901760
  %v949 = vsub.f32 %v95, %v948
  %v950 = vand.u32 %v949, 4294901760
  %v951 = vsub.f32 %v949, %v950
  %v952 = vand.u32 %v951, 4294901760
  %953 = vmatpush1.msra.mxu0 %v952
  %954 = vmatprep.subr.mxu0 0.0
  %v955 = vand.u32 %v94, 4294901760
  %v956 = vsub.f32 %v94, %v955
  %v957 = vand.u32 %v956, 4294901760
  %v958 = vsub.f32 %v956, %v957
  %v959 = vand.u32 %v958, 4294901760
  %960 = vmatpush1.msra.mxu0 %v959
  %961 = vmatprep.subr.mxu0 0.0
  %962 = vmatpush2.msra.mxu0 0.0
  %963 = vmatprep.subr.mxu0 0.0
  %964 = vmatpush2.msra.mxu0 0.0
  %965 = vmatprep.subr.mxu0 0.0
  %966 = vmatpush2.msra.mxu0 0.0
  %967 = vmatprep.subr.mxu0 0.0
  %968 = vmatpush2.msra.mxu0 0.0
  %969 = vmatprep.subr.mxu0 0.0
  %970 = vmatpush2.msra.mxu0 0.0
  %971 = vmatprep.subr.mxu0 0.0
  %972 = vmatpush2.msra.mxu0 0.0
  %973 = vmatprep.subr.mxu0 0.0
  %974 = vmatpush2.msra.mxu0 0.0
  %975 = vmatprep.subr.mxu0 0.0
  %976 = vmatpush2.msra.mxu0 0.0
  %977 = vmatprep.subr.mxu0 0.0
  %978 = vmatpush2.msra.mxu0 0.0
  %979 = vmatprep.subr.mxu0 0.0
  %980 = vmatpush2.msra.mxu0 0.0
  %981 = vmatprep.subr.mxu0 0.0
  %982 = vmatpush2.msra.mxu0 0.0
  %983 = vmatprep.subr.mxu0 0.0
  %984 = vmatpush2.msra.mxu0 0.0
  %985 = vmatprep.subr.mxu0 0.0
  %986 = vmatpush2.msra.mxu0 0.0
  %987 = vmatprep.subr.mxu0 0.0
  %988 = vmatpush2.msra.mxu0 0.0
  %989 = vmatprep.subr.mxu0 0.0
  %990 = vmatpush2.msra.mxu0 0.0
  %991 = vmatprep.subr.mxu0 0.0
  %992 = vmatpush2.msra.mxu0 0.0
  %993 = vmatprep.mubr.f32.mxu0 0.0
  %v994 = vand.u32 %v754, 4294901760
  %995 = vmatmul.mubr.f32.gmra.mxu0 %v994
  %v996 = vpop.f32.mrf.mxu0
  %v997 = vadd.f32 %v846, %v996
  %v998 = vpop.f32.mrf.mxu0
  %999 = vdwg.mxu0
  %1000 = vmatprep.subr.mxu0 0.0
  %v1001 = vand.u32 %v109, 4294901760
  %v1002 = vsub.f32 %v109, %v1001
  %1003 = vmatpush1.msra.mxu0 %v1002
  %1004 = vmatprep.subr.mxu0 0.0
  %v1005 = vand.u32 %v108, 4294901760
  %v1006 = vsub.f32 %v108, %v1005
  %1007 = vmatpush1.msra.mxu0 %v1006
  %1008 = vmatprep.subr.mxu0 0.0
  %v1009 = vand.u32 %v107, 4294901760
  %v1010 = vsub.f32 %v107, %v1009
  %1011 = vmatpush1.msra.mxu0 %v1010
  %1012 = vmatprep.subr.mxu0 0.0
  %v1013 = vand.u32 %v106, 4294901760
  %v1014 = vsub.f32 %v106, %v1013
  %1015 = vmatpush1.msra.mxu0 %v1014
  %1016 = vmatprep.subr.mxu0 0.0
  %v1017 = vand.u32 %v105, 4294901760
  %v1018 = vsub.f32 %v105, %v1017
  %1019 = vmatpush1.msra.mxu0 %v1018
  %1020 = vmatprep.subr.mxu0 0.0
  %v1021 = vand.u32 %v104, 4294901760
  %v1022 = vsub.f32 %v104, %v1021
  %1023 = vmatpush1.msra.mxu0 %v1022
  %1024 = vmatprep.subr.mxu0 0.0
  %v1025 = vand.u32 %v103, 4294901760
  %v1026 = vsub.f32 %v103, %v1025
  %1027 = vmatpush1.msra.mxu0 %v1026
  %1028 = vmatprep.subr.mxu0 0.0
  %v1029 = vand.u32 %v102, 4294901760
  %v1030 = vsub.f32 %v102, %v1029
  %1031 = vmatpush1.msra.mxu0 %v1030
  %1032 = vmatprep.subr.mxu0 0.0
  %v1033 = vand.u32 %v101, 4294901760
  %v1034 = vsub.f32 %v101, %v1033
  %1035 = vmatpush1.msra.mxu0 %v1034
  %1036 = vmatprep.subr.mxu0 0.0
  %v1037 = vand.u32 %v100, 4294901760
  %v1038 = vsub.f32 %v100, %v1037
  %1039 = vmatpush1.msra.mxu0 %v1038
  %1040 = vmatprep.subr.mxu0 0.0
  %v1041 = vand.u32 %v99, 4294901760
  %v1042 = vsub.f32 %v99, %v1041
  %1043 = vmatpush1.msra.mxu0 %v1042
  %1044 = vmatprep.subr.mxu0 0.0
  %v1045 = vand.u32 %v98, 4294901760
  %v1046 = vsub.f32 %v98, %v1045
  %1047 = vmatpush1.msra.mxu0 %v1046
  %1048 = vmatprep.subr.mxu0 0.0
  %v1049 = vand.u32 %v97, 4294901760
  %v1050 = vsub.f32 %v97, %v1049
  %1051 = vmatpush1.msra.mxu0 %v1050
  %1052 = vmatprep.subr.mxu0 0.0
  %v1053 = vand.u32 %v96, 4294901760
  %v1054 = vsub.f32 %v96, %v1053
  %1055 = vmatpush1.msra.mxu0 %v1054
  %1056 = vmatprep.subr.mxu0 0.0
  %v1057 = vand.u32 %v95, 4294901760
  %v1058 = vsub.f32 %v95, %v1057
  %1059 = vmatpush1.msra.mxu0 %v1058
  %1060 = vmatprep.subr.mxu0 0.0
  %v1061 = vand.u32 %v94, 4294901760
  %v1062 = vsub.f32 %v94, %v1061
  %1063 = vmatpush1.msra.mxu0 %v1062
  %1064 = vmatprep.subr.mxu0 0.0
  %1065 = vmatpush2.msra.mxu0 0.0
  %1066 = vmatprep.subr.mxu0 0.0
  %1067 = vmatpush2.msra.mxu0 0.0
  %1068 = vmatprep.subr.mxu0 0.0
  %1069 = vmatpush2.msra.mxu0 0.0
  %1070 = vmatprep.subr.mxu0 0.0
  %1071 = vmatpush2.msra.mxu0 0.0
  %1072 = vmatprep.subr.mxu0 0.0
  %1073 = vmatpush2.msra.mxu0 0.0
  %1074 = vmatprep.subr.mxu0 0.0
  %1075 = vmatpush2.msra.mxu0 0.0
  %1076 = vmatprep.subr.mxu0 0.0
  %1077 = vmatpush2.msra.mxu0 0.0
  %1078 = vmatprep.subr.mxu0 0.0
  %1079 = vmatpush2.msra.mxu0 0.0
  %1080 = vmatprep.subr.mxu0 0.0
  %1081 = vmatpush2.msra.mxu0 0.0
  %1082 = vmatprep.subr.mxu0 0.0
  %1083 = vmatpush2.msra.mxu0 0.0
  %1084 = vmatprep.subr.mxu0 0.0
  %1085 = vmatpush2.msra.mxu0 0.0
  %1086 = vmatprep.subr.mxu0 0.0
  %1087 = vmatpush2.msra.mxu0 0.0
  %1088 = vmatprep.subr.mxu0 0.0
  %1089 = vmatpush2.msra.mxu0 0.0
  %1090 = vmatprep.subr.mxu0 0.0
  %1091 = vmatpush2.msra.mxu0 0.0
  %1092 = vmatprep.subr.mxu0 0.0
  %1093 = vmatpush2.msra.mxu0 0.0
  %1094 = vmatprep.subr.mxu0 0.0
  %1095 = vmatpush2.msra.mxu0 0.0
  %1096 = vmatprep.mubr.f32.mxu0 0.0
  %v1097 = vand.u32 %v754, 4294901760
  %v1098 = vsub.f32 %v754, %v1097
  %1099 = vmatmul.mubr.f32.gmra.mxu0 %v1098
  %v1100 = vpop.f32.mrf.mxu0
  %v1101 = vadd.f32 %v997, %v1100
  %v1102 = vpop.f32.mrf.mxu0
  %1103 = vdwg.mxu0
  %1104 = vmatprep.subr.mxu0 0.0
  %v1105 = vand.u32 %v109, 4294901760
  %1106 = vmatpush1.msra.mxu0 %v1105
  %1107 = vmatprep.subr.mxu0 0.0
  %v1108 = vand.u32 %v108, 4294901760
  %1109 = vmatpush1.msra.mxu0 %v1108
  %1110 = vmatprep.subr.mxu0 0.0
  %v1111 = vand.u32 %v107, 4294901760
  %1112 = vmatpush1.msra.mxu0 %v1111
  %1113 = vmatprep.subr.mxu0 0.0
  %v1114 = vand.u32 %v106, 4294901760
  %1115 = vmatpush1.msra.mxu0 %v1114
  %1116 = vmatprep.subr.mxu0 0.0
  %v1117 = vand.u32 %v105, 4294901760
  %1118 = vmatpush1.msra.mxu0 %v1117
  %1119 = vmatprep.subr.mxu0 0.0
  %v1120 = vand.u32 %v104, 4294901760
  %1121 = vmatpush1.msra.mxu0 %v1120
  %1122 = vmatprep.subr.mxu0 0.0
  %v1123 = vand.u32 %v103, 4294901760
  %1124 = vmatpush1.msra.mxu0 %v1123
  %1125 = vmatprep.subr.mxu0 0.0
  %v1126 = vand.u32 %v102, 4294901760
  %1127 = vmatpush1.msra.mxu0 %v1126
  %1128 = vmatprep.subr.mxu0 0.0
  %v1129 = vand.u32 %v101, 4294901760
  %1130 = vmatpush1.msra.mxu0 %v1129
  %1131 = vmatprep.subr.mxu0 0.0
  %v1132 = vand.u32 %v100, 4294901760
  %1133 = vmatpush1.msra.mxu0 %v1132
  %1134 = vmatprep.subr.mxu0 0.0
  %v1135 = vand.u32 %v99, 4294901760
  %1136 = vmatpush1.msra.mxu0 %v1135
  %1137 = vmatprep.subr.mxu0 0.0
  %v1138 = vand.u32 %v98, 4294901760
  %1139 = vmatpush1.msra.mxu0 %v1138
  %1140 = vmatprep.subr.mxu0 0.0
  %v1141 = vand.u32 %v97, 4294901760
  %1142 = vmatpush1.msra.mxu0 %v1141
  %1143 = vmatprep.subr.mxu0 0.0
  %v1144 = vand.u32 %v96, 4294901760
  %1145 = vmatpush1.msra.mxu0 %v1144
  %1146 = vmatprep.subr.mxu0 0.0
  %v1147 = vand.u32 %v95, 4294901760
  %1148 = vmatpush1.msra.mxu0 %v1147
  %1149 = vmatprep.subr.mxu0 0.0
  %v1150 = vand.u32 %v94, 4294901760
  %1151 = vmatpush1.msra.mxu0 %v1150
  %1152 = vmatprep.subr.mxu0 0.0
  %1153 = vmatpush2.msra.mxu0 0.0
  %1154 = vmatprep.subr.mxu0 0.0
  %1155 = vmatpush2.msra.mxu0 0.0
  %1156 = vmatprep.subr.mxu0 0.0
  %1157 = vmatpush2.msra.mxu0 0.0
  %1158 = vmatprep.subr.mxu0 0.0
  %1159 = vmatpush2.msra.mxu0 0.0
  %1160 = vmatprep.subr.mxu0 0.0
  %1161 = vmatpush2.msra.mxu0 0.0
  %1162 = vmatprep.subr.mxu0 0.0
  %1163 = vmatpush2.msra.mxu0 0.0
  %1164 = vmatprep.subr.mxu0 0.0
  %1165 = vmatpush2.msra.mxu0 0.0
  %1166 = vmatprep.subr.mxu0 0.0
  %1167 = vmatpush2.msra.mxu0 0.0
  %1168 = vmatprep.subr.mxu0 0.0
  %1169 = vmatpush2.msra.mxu0 0.0
  %1170 = vmatprep.subr.mxu0 0.0
  %1171 = vmatpush2.msra.mxu0 0.0
  %1172 = vmatprep.subr.mxu0 0.0
  %1173 = vmatpush2.msra.mxu0 0.0
  %1174 = vmatprep.subr.mxu0 0.0
  %1175 = vmatpush2.msra.mxu0 0.0
  %1176 = vmatprep.subr.mxu0 0.0
  %1177 = vmatpush2.msra.mxu0 0.0
  %1178 = vmatprep.subr.mxu0 0.0
  %1179 = vmatpush2.msra.mxu0 0.0
  %1180 = vmatprep.subr.mxu0 0.0
  %1181 = vmatpush2.msra.mxu0 0.0
  %1182 = vmatprep.subr.mxu0 0.0
  %1183 = vmatpush2.msra.mxu0 0.0
  %1184 = vmatprep.mubr.f32.mxu0 0.0
  %v1185 = vand.u32 %v754, 4294901760
  %v1186 = vsub.f32 %v754, %v1185
  %v1187 = vand.u32 %v1186, 4294901760
  %1188 = vmatmul.mubr.f32.gmra.mxu0 %v1187
  %v1189 = vpop.f32.mrf.mxu0
  %v1190 = vadd.f32 %v1101, %v1189
  %v1191 = vpop.f32.mrf.mxu0
  %1192 = vdwg.mxu0
  %1193 = vmatprep.subr.mxu0 0.0
  %v1194 = vand.u32 %v109, 4294901760
  %v1195 = vsub.f32 %v109, %v1194
  %v1196 = vand.u32 %v1195, 4294901760
  %1197 = vmatpush1.msra.mxu0 %v1196
  %1198 = vmatprep.subr.mxu0 0.0
  %v1199 = vand.u32 %v108, 4294901760
  %v1200 = vsub.f32 %v108, %v1199
  %v1201 = vand.u32 %v1200, 4294901760
  %1202 = vmatpush1.msra.mxu0 %v1201
  %1203 = vmatprep.subr.mxu0 0.0
  %v1204 = vand.u32 %v107, 4294901760
  %v1205 = vsub.f32 %v107, %v1204
  %v1206 = vand.u32 %v1205, 4294901760
  %1207 = vmatpush1.msra.mxu0 %v1206
  %1208 = vmatprep.subr.mxu0 0.0
  %v1209 = vand.u32 %v106, 4294901760
  %v1210 = vsub.f32 %v106, %v1209
  %v1211 = vand.u32 %v1210, 4294901760
  %1212 = vmatpush1.msra.mxu0 %v1211
  %1213 = vmatprep.subr.mxu0 0.0
  %v1214 = vand.u32 %v105, 4294901760
  %v1215 = vsub.f32 %v105, %v1214
  %v1216 = vand.u32 %v1215, 4294901760
  %1217 = vmatpush1.msra.mxu0 %v1216
  %1218 = vmatprep.subr.mxu0 0.0
  %v1219 = vand.u32 %v104, 4294901760
  %v1220 = vsub.f32 %v104, %v1219
  %v1221 = vand.u32 %v1220, 4294901760
  %1222 = vmatpush1.msra.mxu0 %v1221
  %1223 = vmatprep.subr.mxu0 0.0
  %v1224 = vand.u32 %v103, 4294901760
  %v1225 = vsub.f32 %v103, %v1224
  %v1226 = vand.u32 %v1225, 4294901760
  %1227 = vmatpush1.msra.mxu0 %v1226
  %1228 = vmatprep.subr.mxu0 0.0
  %v1229 = vand.u32 %v102, 4294901760
  %v1230 = vsub.f32 %v102, %v1229
  %v1231 = vand.u32 %v1230, 4294901760
  %1232 = vmatpush1.msra.mxu0 %v1231
  %1233 = vmatprep.subr.mxu0 0.0
  %v1234 = vand.u32 %v101, 4294901760
  %v1235 = vsub.f32 %v101, %v1234
  %v1236 = vand.u32 %v1235, 4294901760
  %1237 = vmatpush1.msra.mxu0 %v1236
  %1238 = vmatprep.subr.mxu0 0.0
  %v1239 = vand.u32 %v100, 4294901760
  %v1240 = vsub.f32 %v100, %v1239
  %v1241 = vand.u32 %v1240, 4294901760
  %1242 = vmatpush1.msra.mxu0 %v1241
  %1243 = vmatprep.subr.mxu0 0.0
  %v1244 = vand.u32 %v99, 4294901760
  %v1245 = vsub.f32 %v99, %v1244
  %v1246 = vand.u32 %v1245, 4294901760
  %1247 = vmatpush1.msra.mxu0 %v1246
  %1248 = vmatprep.subr.mxu0 0.0
  %v1249 = vand.u32 %v98, 4294901760
  %v1250 = vsub.f32 %v98, %v1249
  %v1251 = vand.u32 %v1250, 4294901760
  %1252 = vmatpush1.msra.mxu0 %v1251
  %1253 = vmatprep.subr.mxu0 0.0
  %v1254 = vand.u32 %v97, 4294901760
  %v1255 = vsub.f32 %v97, %v1254
  %v1256 = vand.u32 %v1255, 4294901760
  %1257 = vmatpush1.msra.mxu0 %v1256
  %1258 = vmatprep.subr.mxu0 0.0
  %v1259 = vand.u32 %v96, 4294901760
  %v1260 = vsub.f32 %v96, %v1259
  %v1261 = vand.u32 %v1260, 4294901760
  %1262 = vmatpush1.msra.mxu0 %v1261
  %1263 = vmatprep.subr.mxu0 0.0
  %v1264 = vand.u32 %v95, 4294901760
  %v1265 = vsub.f32 %v95, %v1264
  %v1266 = vand.u32 %v1265, 4294901760
  %1267 = vmatpush1.msra.mxu0 %v1266
  %1268 = vmatprep.subr.mxu0 0.0
  %v1269 = vand.u32 %v94, 4294901760
  %v1270 = vsub.f32 %v94, %v1269
  %v1271 = vand.u32 %v1270, 4294901760
  %1272 = vmatpush1.msra.mxu0 %v1271
  %1273 = vmatprep.subr.mxu0 0.0
  %1274 = vmatpush2.msra.mxu0 0.0
  %1275 = vmatprep.subr.mxu0 0.0
  %1276 = vmatpush2.msra.mxu0 0.0
  %1277 = vmatprep.subr.mxu0 0.0
  %1278 = vmatpush2.msra.mxu0 0.0
  %1279 = vmatprep.subr.mxu0 0.0
  %1280 = vmatpush2.msra.mxu0 0.0
  %1281 = vmatprep.subr.mxu0 0.0
  %1282 = vmatpush2.msra.mxu0 0.0
  %1283 = vmatprep.subr.mxu0 0.0
  %1284 = vmatpush2.msra.mxu0 0.0
  %1285 = vmatprep.subr.mxu0 0.0
  %1286 = vmatpush2.msra.mxu0 0.0
  %1287 = vmatprep.subr.mxu0 0.0
  %1288 = vmatpush2.msra.mxu0 0.0
  %1289 = vmatprep.subr.mxu0 0.0
  %1290 = vmatpush2.msra.mxu0 0.0
  %1291 = vmatprep.subr.mxu0 0.0
  %1292 = vmatpush2.msra.mxu0 0.0
  %1293 = vmatprep.subr.mxu0 0.0
  %1294 = vmatpush2.msra.mxu0 0.0
  %1295 = vmatprep.subr.mxu0 0.0
  %1296 = vmatpush2.msra.mxu0 0.0
  %1297 = vmatprep.subr.mxu0 0.0
  %1298 = vmatpush2.msra.mxu0 0.0
  %1299 = vmatprep.subr.mxu0 0.0
  %1300 = vmatpush2.msra.mxu0 0.0
  %1301 = vmatprep.subr.mxu0 0.0
  %1302 = vmatpush2.msra.mxu0 0.0
  %1303 = vmatprep.subr.mxu0 0.0
  %1304 = vmatpush2.msra.mxu0 0.0
  %1305 = vmatprep.mubr.f32.mxu0 0.0
  %v1306 = vand.u32 %v754, 4294901760
  %1307 = vmatmul.mubr.f32.gmra.mxu0 %v1306
  %v1308 = vpop.f32.mrf.mxu0
  %v1309 = vadd.f32 %v1190, %v1308
  %v1310 = vpop.f32.mrf.mxu0
  %1311 = vdwg.mxu0
  %1312 = vmatprep.subr.mxu0 0.0
  %v1313 = vand.u32 %v109, 4294901760
  %1314 = vmatpush1.msra.mxu0 %v1313
  %1315 = vmatprep.subr.mxu0 0.0
  %v1316 = vand.u32 %v108, 4294901760
  %1317 = vmatpush1.msra.mxu0 %v1316
  %1318 = vmatprep.subr.mxu0 0.0
  %v1319 = vand.u32 %v107, 4294901760
  %1320 = vmatpush1.msra.mxu0 %v1319
  %1321 = vmatprep.subr.mxu0 0.0
  %v1322 = vand.u32 %v106, 4294901760
  %1323 = vmatpush1.msra.mxu0 %v1322
  %1324 = vmatprep.subr.mxu0 0.0
  %v1325 = vand.u32 %v105, 4294901760
  %1326 = vmatpush1.msra.mxu0 %v1325
  %1327 = vmatprep.subr.mxu0 0.0
  %v1328 = vand.u32 %v104, 4294901760
  %1329 = vmatpush1.msra.mxu0 %v1328
  %1330 = vmatprep.subr.mxu0 0.0
  %v1331 = vand.u32 %v103, 4294901760
  %1332 = vmatpush1.msra.mxu0 %v1331
  %1333 = vmatprep.subr.mxu0 0.0
  %v1334 = vand.u32 %v102, 4294901760
  %1335 = vmatpush1.msra.mxu0 %v1334
  %1336 = vmatprep.subr.mxu0 0.0
  %v1337 = vand.u32 %v101, 4294901760
  %1338 = vmatpush1.msra.mxu0 %v1337
  %1339 = vmatprep.subr.mxu0 0.0
  %v1340 = vand.u32 %v100, 4294901760
  %1341 = vmatpush1.msra.mxu0 %v1340
  %1342 = vmatprep.subr.mxu0 0.0
  %v1343 = vand.u32 %v99, 4294901760
  %1344 = vmatpush1.msra.mxu0 %v1343
  %1345 = vmatprep.subr.mxu0 0.0
  %v1346 = vand.u32 %v98, 4294901760
  %1347 = vmatpush1.msra.mxu0 %v1346
  %1348 = vmatprep.subr.mxu0 0.0
  %v1349 = vand.u32 %v97, 4294901760
  %1350 = vmatpush1.msra.mxu0 %v1349
  %1351 = vmatprep.subr.mxu0 0.0
  %v1352 = vand.u32 %v96, 4294901760
  %1353 = vmatpush1.msra.mxu0 %v1352
  %1354 = vmatprep.subr.mxu0 0.0
  %v1355 = vand.u32 %v95, 4294901760
  %1356 = vmatpush1.msra.mxu0 %v1355
  %1357 = vmatprep.subr.mxu0 0.0
  %v1358 = vand.u32 %v94, 4294901760
  %1359 = vmatpush1.msra.mxu0 %v1358
  %1360 = vmatprep.subr.mxu0 0.0
  %1361 = vmatpush2.msra.mxu0 0.0
  %1362 = vmatprep.subr.mxu0 0.0
  %1363 = vmatpush2.msra.mxu0 0.0
  %1364 = vmatprep.subr.mxu0 0.0
  %1365 = vmatpush2.msra.mxu0 0.0
  %1366 = vmatprep.subr.mxu0 0.0
  %1367 = vmatpush2.msra.mxu0 0.0
  %1368 = vmatprep.subr.mxu0 0.0
  %1369 = vmatpush2.msra.mxu0 0.0
  %1370 = vmatprep.subr.mxu0 0.0
  %1371 = vmatpush2.msra.mxu0 0.0
  %1372 = vmatprep.subr.mxu0 0.0
  %1373 = vmatpush2.msra.mxu0 0.0
  %1374 = vmatprep.subr.mxu0 0.0
  %1375 = vmatpush2.msra.mxu0 0.0
  %1376 = vmatprep.subr.mxu0 0.0
  %1377 = vmatpush2.msra.mxu0 0.0
  %1378 = vmatprep.subr.mxu0 0.0
  %1379 = vmatpush2.msra.mxu0 0.0
  %1380 = vmatprep.subr.mxu0 0.0
  %1381 = vmatpush2.msra.mxu0 0.0
  %1382 = vmatprep.subr.mxu0 0.0
  %1383 = vmatpush2.msra.mxu0 0.0
  %1384 = vmatprep.subr.mxu0 0.0
  %1385 = vmatpush2.msra.mxu0 0.0
  %1386 = vmatprep.subr.mxu0 0.0
  %1387 = vmatpush2.msra.mxu0 0.0
  %1388 = vmatprep.subr.mxu0 0.0
  %1389 = vmatpush2.msra.mxu0 0.0
  %1390 = vmatprep.subr.mxu0 0.0
  %1391 = vmatpush2.msra.mxu0 0.0
  %1392 = vmatprep.mubr.f32.mxu0 0.0
  %v1393 = vand.u32 %v754, 4294901760
  %1394 = vmatmul.mubr.f32.gmra.mxu0 %v1393
  %v1395 = vpop.f32.mrf.mxu0
  %v1396 = vadd.f32 %v1309, %v1395
  %v1397 = vpop.f32.mrf.mxu0
  %1398 = vdwg.mxu0
  %v1399 = vadd.f32 %v757, %v1396
  %v1400 = vtanh.pop %v1399
  %s1401 = scalar_lea.vmem %s3, 8
  %1402 = vst [vmem:[%s1401] sm:$0xff] %v1400
  %s1403 = scalar_lea.vmem %s0, 16
  %v1404 = vld [vmem:[%s1403] sm:$0xff]
  %1405 = vmatprep.subr.mxu0 0.0
  %v1406 = vand.u32 %v109, 4294901760
  %1407 = vmatpush1.msra.mxu0 %v1406
  %1408 = vmatprep.subr.mxu0 0.0
  %v1409 = vand.u32 %v108, 4294901760
  %1410 = vmatpush1.msra.mxu0 %v1409
  %1411 = vmatprep.subr.mxu0 0.0
  %v1412 = vand.u32 %v107, 4294901760
  %1413 = vmatpush1.msra.mxu0 %v1412
  %1414 = vmatprep.subr.mxu0 0.0
  %v1415 = vand.u32 %v106, 4294901760
  %1416 = vmatpush1.msra.mxu0 %v1415
  %1417 = vmatprep.subr.mxu0 0.0
  %v1418 = vand.u32 %v105, 4294901760
  %1419 = vmatpush1.msra.mxu0 %v1418
  %1420 = vmatprep.subr.mxu0 0.0
  %v1421 = vand.u32 %v104, 4294901760
  %1422 = vmatpush1.msra.mxu0 %v1421
  %1423 = vmatprep.subr.mxu0 0.0
  %v1424 = vand.u32 %v103, 4294901760
  %1425 = vmatpush1.msra.mxu0 %v1424
  %1426 = vmatprep.subr.mxu0 0.0
  %v1427 = vand.u32 %v102, 4294901760
  %1428 = vmatpush1.msra.mxu0 %v1427
  %1429 = vmatprep.subr.mxu0 0.0
  %v1430 = vand.u32 %v101, 4294901760
  %1431 = vmatpush1.msra.mxu0 %v1430
  %1432 = vmatprep.subr.mxu0 0.0
  %v1433 = vand.u32 %v100, 4294901760
  %1434 = vmatpush1.msra.mxu0 %v1433
  %1435 = vmatprep.subr.mxu0 0.0
  %v1436 = vand.u32 %v99, 4294901760
  %1437 = vmatpush1.msra.mxu0 %v1436
  %1438 = vmatprep.subr.mxu0 0.0
  %v1439 = vand.u32 %v98, 4294901760
  %1440 = vmatpush1.msra.mxu0 %v1439
  %1441 = vmatprep.subr.mxu0 0.0
  %v1442 = vand.u32 %v97, 4294901760
  %1443 = vmatpush1.msra.mxu0 %v1442
  %1444 = vmatprep.subr.mxu0 0.0
  %v1445 = vand.u32 %v96, 4294901760
  %1446 = vmatpush1.msra.mxu0 %v1445
  %1447 = vmatprep.subr.mxu0 0.0
  %v1448 = vand.u32 %v95, 4294901760
  %1449 = vmatpush1.msra.mxu0 %v1448
  %1450 = vmatprep.subr.mxu0 0.0
  %v1451 = vand.u32 %v94, 4294901760
  %1452 = vmatpush1.msra.mxu0 %v1451
  %1453 = vmatprep.subr.mxu0 0.0
  %1454 = vmatpush2.msra.mxu0 0.0
  %1455 = vmatprep.subr.mxu0 0.0
  %1456 = vmatpush2.msra.mxu0 0.0
  %1457 = vmatprep.subr.mxu0 0.0
  %1458 = vmatpush2.msra.mxu0 0.0
  %1459 = vmatprep.subr.mxu0 0.0
  %1460 = vmatpush2.msra.mxu0 0.0
  %1461 = vmatprep.subr.mxu0 0.0
  %1462 = vmatpush2.msra.mxu0 0.0
  %1463 = vmatprep.subr.mxu0 0.0
  %1464 = vmatpush2.msra.mxu0 0.0
  %1465 = vmatprep.subr.mxu0 0.0
  %1466 = vmatpush2.msra.mxu0 0.0
  %1467 = vmatprep.subr.mxu0 0.0
  %1468 = vmatpush2.msra.mxu0 0.0
  %1469 = vmatprep.subr.mxu0 0.0
  %1470 = vmatpush2.msra.mxu0 0.0
  %1471 = vmatprep.subr.mxu0 0.0
  %1472 = vmatpush2.msra.mxu0 0.0
  %1473 = vmatprep.subr.mxu0 0.0
  %1474 = vmatpush2.msra.mxu0 0.0
  %1475 = vmatprep.subr.mxu0 0.0
  %1476 = vmatpush2.msra.mxu0 0.0
  %1477 = vmatprep.subr.mxu0 0.0
  %1478 = vmatpush2.msra.mxu0 0.0
  %1479 = vmatprep.subr.mxu0 0.0
  %1480 = vmatpush2.msra.mxu0 0.0
  %1481 = vmatprep.subr.mxu0 0.0
  %1482 = vmatpush2.msra.mxu0 0.0
  %1483 = vmatprep.subr.mxu0 0.0
  %1484 = vmatpush2.msra.mxu0 0.0
  %1485 = vmatprep.mubr.f32.mxu0 0.0
  %v1486 = vand.u32 %v1400, 4294901760
  %v1487 = vsub.f32 %v1400, %v1486
  %v1488 = vand.u32 %v1487, 4294901760
  %v1489 = vsub.f32 %v1487, %v1488
  %v1490 = vand.u32 %v1489, 4294901760
  %1491 = vmatmul.mubr.f32.gmra.mxu0 %v1490
  %v1492 = vpop.f32.mrf.mxu0
  %v1493 = vadd.f32 0.0, %v1492
  %v1494 = vpop.f32.mrf.mxu0
  %1495 = vdwg.mxu0
  %1496 = vmatprep.subr.mxu0 0.0
  %v1497 = vand.u32 %v109, 4294901760
  %v1498 = vsub.f32 %v109, %v1497
  %v1499 = vand.u32 %v1498, 4294901760
  %v1500 = vsub.f32 %v1498, %v1499
  %v1501 = vand.u32 %v1500, 4294901760
  %1502 = vmatpush1.msra.mxu0 %v1501
  %1503 = vmatprep.subr.mxu0 0.0
  %v1504 = vand.u32 %v108, 4294901760
  %v1505 = vsub.f32 %v108, %v1504
  %v1506 = vand.u32 %v1505, 4294901760
  %v1507 = vsub.f32 %v1505, %v1506
  %v1508 = vand.u32 %v1507, 4294901760
  %1509 = vmatpush1.msra.mxu0 %v1508
  %1510 = vmatprep.subr.mxu0 0.0
  %v1511 = vand.u32 %v107, 4294901760
  %v1512 = vsub.f32 %v107, %v1511
  %v1513 = vand.u32 %v1512, 4294901760
  %v1514 = vsub.f32 %v1512, %v1513
  %v1515 = vand.u32 %v1514, 4294901760
  %1516 = vmatpush1.msra.mxu0 %v1515
  %1517 = vmatprep.subr.mxu0 0.0
  %v1518 = vand.u32 %v106, 4294901760
  %v1519 = vsub.f32 %v106, %v1518
  %v1520 = vand.u32 %v1519, 4294901760
  %v1521 = vsub.f32 %v1519, %v1520
  %v1522 = vand.u32 %v1521, 4294901760
  %1523 = vmatpush1.msra.mxu0 %v1522
  %1524 = vmatprep.subr.mxu0 0.0
  %v1525 = vand.u32 %v105, 4294901760
  %v1526 = vsub.f32 %v105, %v1525
  %v1527 = vand.u32 %v1526, 4294901760
  %v1528 = vsub.f32 %v1526, %v1527
  %v1529 = vand.u32 %v1528, 4294901760
  %1530 = vmatpush1.msra.mxu0 %v1529
  %1531 = vmatprep.subr.mxu0 0.0
  %v1532 = vand.u32 %v104, 4294901760
  %v1533 = vsub.f32 %v104, %v1532
  %v1534 = vand.u32 %v1533, 4294901760
  %v1535 = vsub.f32 %v1533, %v1534
  %v1536 = vand.u32 %v1535, 4294901760
  %1537 = vmatpush1.msra.mxu0 %v1536
  %1538 = vmatprep.subr.mxu0 0.0
  %v1539 = vand.u32 %v103, 4294901760
  %v1540 = vsub.f32 %v103, %v1539
  %v1541 = vand.u32 %v1540, 4294901760
  %v1542 = vsub.f32 %v1540, %v1541
  %v1543 = vand.u32 %v1542, 4294901760
  %1544 = vmatpush1.msra.mxu0 %v1543
  %1545 = vmatprep.subr.mxu0 0.0
  %v1546 = vand.u32 %v102, 4294901760
  %v1547 = vsub.f32 %v102, %v1546
  %v1548 = vand.u32 %v1547, 4294901760
  %v1549 = vsub.f32 %v1547, %v1548
  %v1550 = vand.u32 %v1549, 4294901760
  %1551 = vmatpush1.msra.mxu0 %v1550
  %1552 = vmatprep.subr.mxu0 0.0
  %v1553 = vand.u32 %v101, 4294901760
  %v1554 = vsub.f32 %v101, %v1553
  %v1555 = vand.u32 %v1554, 4294901760
  %v1556 = vsub.f32 %v1554, %v1555
  %v1557 = vand.u32 %v1556, 4294901760
  %1558 = vmatpush1.msra.mxu0 %v1557
  %1559 = vmatprep.subr.mxu0 0.0
  %v1560 = vand.u32 %v100, 4294901760
  %v1561 = vsub.f32 %v100, %v1560
  %v1562 = vand.u32 %v1561, 4294901760
  %v1563 = vsub.f32 %v1561, %v1562
  %v1564 = vand.u32 %v1563, 4294901760
  %1565 = vmatpush1.msra.mxu0 %v1564
  %1566 = vmatprep.subr.mxu0 0.0
  %v1567 = vand.u32 %v99, 4294901760
  %v1568 = vsub.f32 %v99, %v1567
  %v1569 = vand.u32 %v1568, 4294901760
  %v1570 = vsub.f32 %v1568, %v1569
  %v1571 = vand.u32 %v1570, 4294901760
  %1572 = vmatpush1.msra.mxu0 %v1571
  %1573 = vmatprep.subr.mxu0 0.0
  %v1574 = vand.u32 %v98, 4294901760
  %v1575 = vsub.f32 %v98, %v1574
  %v1576 = vand.u32 %v1575, 4294901760
  %v1577 = vsub.f32 %v1575, %v1576
  %v1578 = vand.u32 %v1577, 4294901760
  %1579 = vmatpush1.msra.mxu0 %v1578
  %1580 = vmatprep.subr.mxu0 0.0
  %v1581 = vand.u32 %v97, 4294901760
  %v1582 = vsub.f32 %v97, %v1581
  %v1583 = vand.u32 %v1582, 4294901760
  %v1584 = vsub.f32 %v1582, %v1583
  %v1585 = vand.u32 %v1584, 4294901760
  %1586 = vmatpush1.msra.mxu0 %v1585
  %1587 = vmatprep.subr.mxu0 0.0
  %v1588 = vand.u32 %v96, 4294901760
  %v1589 = vsub.f32 %v96, %v1588
  %v1590 = vand.u32 %v1589, 4294901760
  %v1591 = vsub.f32 %v1589, %v1590
  %v1592 = vand.u32 %v1591, 4294901760
  %1593 = vmatpush1.msra.mxu0 %v1592
  %1594 = vmatprep.subr.mxu0 0.0
  %v1595 = vand.u32 %v95, 4294901760
  %v1596 = vsub.f32 %v95, %v1595
  %v1597 = vand.u32 %v1596, 4294901760
  %v1598 = vsub.f32 %v1596, %v1597
  %v1599 = vand.u32 %v1598, 4294901760
  %1600 = vmatpush1.msra.mxu0 %v1599
  %1601 = vmatprep.subr.mxu0 0.0
  %v1602 = vand.u32 %v94, 4294901760
  %v1603 = vsub.f32 %v94, %v1602
  %v1604 = vand.u32 %v1603, 4294901760
  %v1605 = vsub.f32 %v1603, %v1604
  %v1606 = vand.u32 %v1605, 4294901760
  %1607 = vmatpush1.msra.mxu0 %v1606
  %1608 = vmatprep.subr.mxu0 0.0
  %1609 = vmatpush2.msra.mxu0 0.0
  %1610 = vmatprep.subr.mxu0 0.0
  %1611 = vmatpush2.msra.mxu0 0.0
  %1612 = vmatprep.subr.mxu0 0.0
  %1613 = vmatpush2.msra.mxu0 0.0
  %1614 = vmatprep.subr.mxu0 0.0
  %1615 = vmatpush2.msra.mxu0 0.0
  %1616 = vmatprep.subr.mxu0 0.0
  %1617 = vmatpush2.msra.mxu0 0.0
  %1618 = vmatprep.subr.mxu0 0.0
  %1619 = vmatpush2.msra.mxu0 0.0
  %1620 = vmatprep.subr.mxu0 0.0
  %1621 = vmatpush2.msra.mxu0 0.0
  %1622 = vmatprep.subr.mxu0 0.0
  %1623 = vmatpush2.msra.mxu0 0.0
  %1624 = vmatprep.subr.mxu0 0.0
  %1625 = vmatpush2.msra.mxu0 0.0
  %1626 = vmatprep.subr.mxu0 0.0
  %1627 = vmatpush2.msra.mxu0 0.0
  %1628 = vmatprep.subr.mxu0 0.0
  %1629 = vmatpush2.msra.mxu0 0.0
  %1630 = vmatprep.subr.mxu0 0.0
  %1631 = vmatpush2.msra.mxu0 0.0
  %1632 = vmatprep.subr.mxu0 0.0
  %1633 = vmatpush2.msra.mxu0 0.0
  %1634 = vmatprep.subr.mxu0 0.0
  %1635 = vmatpush2.msra.mxu0 0.0
  %1636 = vmatprep.subr.mxu0 0.0
  %1637 = vmatpush2.msra.mxu0 0.0
  %1638 = vmatprep.subr.mxu0 0.0
  %1639 = vmatpush2.msra.mxu0 0.0
  %1640 = vmatprep.mubr.f32.mxu0 0.0
  %v1641 = vand.u32 %v1400, 4294901760
  %1642 = vmatmul.mubr.f32.gmra.mxu0 %v1641
  %v1643 = vpop.f32.mrf.mxu0
  %v1644 = vadd.f32 %v1493, %v1643
  %v1645 = vpop.f32.mrf.mxu0
  %1646 = vdwg.mxu0
  %1647 = vmatprep.subr.mxu0 0.0
  %v1648 = vand.u32 %v109, 4294901760
  %v1649 = vsub.f32 %v109, %v1648
  %1650 = vmatpush1.msra.mxu0 %v1649
  %1651 = vmatprep.subr.mxu0 0.0
  %v1652 = vand.u32 %v108, 4294901760
  %v1653 = vsub.f32 %v108, %v1652
  %1654 = vmatpush1.msra.mxu0 %v1653
  %1655 = vmatprep.subr.mxu0 0.0
  %v1656 = vand.u32 %v107, 4294901760
  %v1657 = vsub.f32 %v107, %v1656
  %1658 = vmatpush1.msra.mxu0 %v1657
  %1659 = vmatprep.subr.mxu0 0.0
  %v1660 = vand.u32 %v106, 4294901760
  %v1661 = vsub.f32 %v106, %v1660
  %1662 = vmatpush1.msra.mxu0 %v1661
  %1663 = vmatprep.subr.mxu0 0.0
  %v1664 = vand.u32 %v105, 4294901760
  %v1665 = vsub.f32 %v105, %v1664
  %1666 = vmatpush1.msra.mxu0 %v1665
  %1667 = vmatprep.subr.mxu0 0.0
  %v1668 = vand.u32 %v104, 4294901760
  %v1669 = vsub.f32 %v104, %v1668
  %1670 = vmatpush1.msra.mxu0 %v1669
  %1671 = vmatprep.subr.mxu0 0.0
  %v1672 = vand.u32 %v103, 4294901760
  %v1673 = vsub.f32 %v103, %v1672
  %1674 = vmatpush1.msra.mxu0 %v1673
  %1675 = vmatprep.subr.mxu0 0.0
  %v1676 = vand.u32 %v102, 4294901760
  %v1677 = vsub.f32 %v102, %v1676
  %1678 = vmatpush1.msra.mxu0 %v1677
  %1679 = vmatprep.subr.mxu0 0.0
  %v1680 = vand.u32 %v101, 4294901760
  %v1681 = vsub.f32 %v101, %v1680
  %1682 = vmatpush1.msra.mxu0 %v1681
  %1683 = vmatprep.subr.mxu0 0.0
  %v1684 = vand.u32 %v100, 4294901760
  %v1685 = vsub.f32 %v100, %v1684
  %1686 = vmatpush1.msra.mxu0 %v1685
  %1687 = vmatprep.subr.mxu0 0.0
  %v1688 = vand.u32 %v99, 4294901760
  %v1689 = vsub.f32 %v99, %v1688
  %1690 = vmatpush1.msra.mxu0 %v1689
  %1691 = vmatprep.subr.mxu0 0.0
  %v1692 = vand.u32 %v98, 4294901760
  %v1693 = vsub.f32 %v98, %v1692
  %1694 = vmatpush1.msra.mxu0 %v1693
  %1695 = vmatprep.subr.mxu0 0.0
  %v1696 = vand.u32 %v97, 4294901760
  %v1697 = vsub.f32 %v97, %v1696
  %1698 = vmatpush1.msra.mxu0 %v1697
  %1699 = vmatprep.subr.mxu0 0.0
  %v1700 = vand.u32 %v96, 4294901760
  %v1701 = vsub.f32 %v96, %v1700
  %1702 = vmatpush1.msra.mxu0 %v1701
  %1703 = vmatprep.subr.mxu0 0.0
  %v1704 = vand.u32 %v95, 4294901760
  %v1705 = vsub.f32 %v95, %v1704
  %1706 = vmatpush1.msra.mxu0 %v1705
  %1707 = vmatprep.subr.mxu0 0.0
  %v1708 = vand.u32 %v94, 4294901760
  %v1709 = vsub.f32 %v94, %v1708
  %1710 = vmatpush1.msra.mxu0 %v1709
  %1711 = vmatprep.subr.mxu0 0.0
  %1712 = vmatpush2.msra.mxu0 0.0
  %1713 = vmatprep.subr.mxu0 0.0
  %1714 = vmatpush2.msra.mxu0 0.0
  %1715 = vmatprep.subr.mxu0 0.0
  %1716 = vmatpush2.msra.mxu0 0.0
  %1717 = vmatprep.subr.mxu0 0.0
  %1718 = vmatpush2.msra.mxu0 0.0
  %1719 = vmatprep.subr.mxu0 0.0
  %1720 = vmatpush2.msra.mxu0 0.0
  %1721 = vmatprep.subr.mxu0 0.0
  %1722 = vmatpush2.msra.mxu0 0.0
  %1723 = vmatprep.subr.mxu0 0.0
  %1724 = vmatpush2.msra.mxu0 0.0
  %1725 = vmatprep.subr.mxu0 0.0
  %1726 = vmatpush2.msra.mxu0 0.0
  %1727 = vmatprep.subr.mxu0 0.0
  %1728 = vmatpush2.msra.mxu0 0.0
  %1729 = vmatprep.subr.mxu0 0.0
  %1730 = vmatpush2.msra.mxu0 0.0
  %1731 = vmatprep.subr.mxu0 0.0
  %1732 = vmatpush2.msra.mxu0 0.0
  %1733 = vmatprep.subr.mxu0 0.0
  %1734 = vmatpush2.msra.mxu0 0.0
  %1735 = vmatprep.subr.mxu0 0.0
  %1736 = vmatpush2.msra.mxu0 0.0
  %1737 = vmatprep.subr.mxu0 0.0
  %1738 = vmatpush2.msra.mxu0 0.0
  %1739 = vmatprep.subr.mxu0 0.0
  %1740 = vmatpush2.msra.mxu0 0.0
  %1741 = vmatprep.subr.mxu0 0.0
  %1742 = vmatpush2.msra.mxu0 0.0
  %1743 = vmatprep.mubr.f32.mxu0 0.0
  %v1744 = vand.u32 %v1400, 4294901760
  %v1745 = vsub.f32 %v1400, %v1744
  %1746 = vmatmul.mubr.f32.gmra.mxu0 %v1745
  %v1747 = vpop.f32.mrf.mxu0
  %v1748 = vadd.f32 %v1644, %v1747
  %v1749 = vpop.f32.mrf.mxu0
  %1750 = vdwg.mxu0
  %1751 = vmatprep.subr.mxu0 0.0
  %v1752 = vand.u32 %v109, 4294901760
  %1753 = vmatpush1.msra.mxu0 %v1752
  %1754 = vmatprep.subr.mxu0 0.0
  %v1755 = vand.u32 %v108, 4294901760
  %1756 = vmatpush1.msra.mxu0 %v1755
  %1757 = vmatprep.subr.mxu0 0.0
  %v1758 = vand.u32 %v107, 4294901760
  %1759 = vmatpush1.msra.mxu0 %v1758
  %1760 = vmatprep.subr.mxu0 0.0
  %v1761 = vand.u32 %v106, 4294901760
  %1762 = vmatpush1.msra.mxu0 %v1761
  %1763 = vmatprep.subr.mxu0 0.0
  %v1764 = vand.u32 %v105, 4294901760
  %1765 = vmatpush1.msra.mxu0 %v1764
  %1766 = vmatprep.subr.mxu0 0.0
  %v1767 = vand.u32 %v104, 4294901760
  %1768 = vmatpush1.msra.mxu0 %v1767
  %1769 = vmatprep.subr.mxu0 0.0
  %v1770 = vand.u32 %v103, 4294901760
  %1771 = vmatpush1.msra.mxu0 %v1770
  %1772 = vmatprep.subr.mxu0 0.0
  %v1773 = vand.u32 %v102, 4294901760
  %1774 = vmatpush1.msra.mxu0 %v1773
  %1775 = vmatprep.subr.mxu0 0.0
  %v1776 = vand.u32 %v101, 4294901760
  %1777 = vmatpush1.msra.mxu0 %v1776
  %1778 = vmatprep.subr.mxu0 0.0
  %v1779 = vand.u32 %v100, 4294901760
  %1780 = vmatpush1.msra.mxu0 %v1779
  %1781 = vmatprep.subr.mxu0 0.0
  %v1782 = vand.u32 %v99, 4294901760
  %1783 = vmatpush1.msra.mxu0 %v1782
  %1784 = vmatprep.subr.mxu0 0.0
  %v1785 = vand.u32 %v98, 4294901760
  %1786 = vmatpush1.msra.mxu0 %v1785
  %1787 = vmatprep.subr.mxu0 0.0
  %v1788 = vand.u32 %v97, 4294901760
  %1789 = vmatpush1.msra.mxu0 %v1788
  %1790 = vmatprep.subr.mxu0 0.0
  %v1791 = vand.u32 %v96, 4294901760
  %1792 = vmatpush1.msra.mxu0 %v1791
  %1793 = vmatprep.subr.mxu0 0.0
  %v1794 = vand.u32 %v95, 4294901760
  %1795 = vmatpush1.msra.mxu0 %v1794
  %1796 = vmatprep.subr.mxu0 0.0
  %v1797 = vand.u32 %v94, 4294901760
  %1798 = vmatpush1.msra.mxu0 %v1797
  %1799 = vmatprep.subr.mxu0 0.0
  %1800 = vmatpush2.msra.mxu0 0.0
  %1801 = vmatprep.subr.mxu0 0.0
  %1802 = vmatpush2.msra.mxu0 0.0
  %1803 = vmatprep.subr.mxu0 0.0
  %1804 = vmatpush2.msra.mxu0 0.0
  %1805 = vmatprep.subr.mxu0 0.0
  %1806 = vmatpush2.msra.mxu0 0.0
  %1807 = vmatprep.subr.mxu0 0.0
  %1808 = vmatpush2.msra.mxu0 0.0
  %1809 = vmatprep.subr.mxu0 0.0
  %1810 = vmatpush2.msra.mxu0 0.0
  %1811 = vmatprep.subr.mxu0 0.0
  %1812 = vmatpush2.msra.mxu0 0.0
  %1813 = vmatprep.subr.mxu0 0.0
  %1814 = vmatpush2.msra.mxu0 0.0
  %1815 = vmatprep.subr.mxu0 0.0
  %1816 = vmatpush2.msra.mxu0 0.0
  %1817 = vmatprep.subr.mxu0 0.0
  %1818 = vmatpush2.msra.mxu0 0.0
  %1819 = vmatprep.subr.mxu0 0.0
  %1820 = vmatpush2.msra.mxu0 0.0
  %1821 = vmatprep.subr.mxu0 0.0
  %1822 = vmatpush2.msra.mxu0 0.0
  %1823 = vmatprep.subr.mxu0 0.0
  %1824 = vmatpush2.msra.mxu0 0.0
  %1825 = vmatprep.subr.mxu0 0.0
  %1826 = vmatpush2.msra.mxu0 0.0
  %1827 = vmatprep.subr.mxu0 0.0
  %1828 = vmatpush2.msra.mxu0 0.0
  %1829 = vmatprep.subr.mxu0 0.0
  %1830 = vmatpush2.msra.mxu0 0.0
  %1831 = vmatprep.mubr.f32.mxu0 0.0
  %v1832 = vand.u32 %v1400, 4294901760
  %v1833 = vsub.f32 %v1400, %v1832
  %v1834 = vand.u32 %v1833, 4294901760
  %1835 = vmatmul.mubr.f32.gmra.mxu0 %v1834
  %v1836 = vpop.f32.mrf.mxu0
  %v1837 = vadd.f32 %v1748, %v1836
  %v1838 = vpop.f32.mrf.mxu0
  %1839 = vdwg.mxu0
  %1840 = vmatprep.subr.mxu0 0.0
  %v1841 = vand.u32 %v109, 4294901760
  %v1842 = vsub.f32 %v109, %v1841
  %v1843 = vand.u32 %v1842, 4294901760
  %1844 = vmatpush1.msra.mxu0 %v1843
  %1845 = vmatprep.subr.mxu0 0.0
  %v1846 = vand.u32 %v108, 4294901760
  %v1847 = vsub.f32 %v108, %v1846
  %v1848 = vand.u32 %v1847, 4294901760
  %1849 = vmatpush1.msra.mxu0 %v1848
  %1850 = vmatprep.subr.mxu0 0.0
  %v1851 = vand.u32 %v107, 4294901760
  %v1852 = vsub.f32 %v107, %v1851
  %v1853 = vand.u32 %v1852, 4294901760
  %1854 = vmatpush1.msra.mxu0 %v1853
  %1855 = vmatprep.subr.mxu0 0.0
  %v1856 = vand.u32 %v106, 4294901760
  %v1857 = vsub.f32 %v106, %v1856
  %v1858 = vand.u32 %v1857, 4294901760
  %1859 = vmatpush1.msra.mxu0 %v1858
  %1860 = vmatprep.subr.mxu0 0.0
  %v1861 = vand.u32 %v105, 4294901760
  %v1862 = vsub.f32 %v105, %v1861
  %v1863 = vand.u32 %v1862, 4294901760
  %1864 = vmatpush1.msra.mxu0 %v1863
  %1865 = vmatprep.subr.mxu0 0.0
  %v1866 = vand.u32 %v104, 4294901760
  %v1867 = vsub.f32 %v104, %v1866
  %v1868 = vand.u32 %v1867, 4294901760
  %1869 = vmatpush1.msra.mxu0 %v1868
  %1870 = vmatprep.subr.mxu0 0.0
  %v1871 = vand.u32 %v103, 4294901760
  %v1872 = vsub.f32 %v103, %v1871
  %v1873 = vand.u32 %v1872, 4294901760
  %1874 = vmatpush1.msra.mxu0 %v1873
  %1875 = vmatprep.subr.mxu0 0.0
  %v1876 = vand.u32 %v102, 4294901760
  %v1877 = vsub.f32 %v102, %v1876
  %v1878 = vand.u32 %v1877, 4294901760
  %1879 = vmatpush1.msra.mxu0 %v1878
  %1880 = vmatprep.subr.mxu0 0.0
  %v1881 = vand.u32 %v101, 4294901760
  %v1882 = vsub.f32 %v101, %v1881
  %v1883 = vand.u32 %v1882, 4294901760
  %1884 = vmatpush1.msra.mxu0 %v1883
  %1885 = vmatprep.subr.mxu0 0.0
  %v1886 = vand.u32 %v100, 4294901760
  %v1887 = vsub.f32 %v100, %v1886
  %v1888 = vand.u32 %v1887, 4294901760
  %1889 = vmatpush1.msra.mxu0 %v1888
  %1890 = vmatprep.subr.mxu0 0.0
  %v1891 = vand.u32 %v99, 4294901760
  %v1892 = vsub.f32 %v99, %v1891
  %v1893 = vand.u32 %v1892, 4294901760
  %1894 = vmatpush1.msra.mxu0 %v1893
  %1895 = vmatprep.subr.mxu0 0.0
  %v1896 = vand.u32 %v98, 4294901760
  %v1897 = vsub.f32 %v98, %v1896
  %v1898 = vand.u32 %v1897, 4294901760
  %1899 = vmatpush1.msra.mxu0 %v1898
  %1900 = vmatprep.subr.mxu0 0.0
  %v1901 = vand.u32 %v97, 4294901760
  %v1902 = vsub.f32 %v97, %v1901
  %v1903 = vand.u32 %v1902, 4294901760
  %1904 = vmatpush1.msra.mxu0 %v1903
  %1905 = vmatprep.subr.mxu0 0.0
  %v1906 = vand.u32 %v96, 4294901760
  %v1907 = vsub.f32 %v96, %v1906
  %v1908 = vand.u32 %v1907, 4294901760
  %1909 = vmatpush1.msra.mxu0 %v1908
  %1910 = vmatprep.subr.mxu0 0.0
  %v1911 = vand.u32 %v95, 4294901760
  %v1912 = vsub.f32 %v95, %v1911
  %v1913 = vand.u32 %v1912, 4294901760
  %1914 = vmatpush1.msra.mxu0 %v1913
  %1915 = vmatprep.subr.mxu0 0.0
  %v1916 = vand.u32 %v94, 4294901760
  %v1917 = vsub.f32 %v94, %v1916
  %v1918 = vand.u32 %v1917, 4294901760
  %1919 = vmatpush1.msra.mxu0 %v1918
  %1920 = vmatprep.subr.mxu0 0.0
  %1921 = vmatpush2.msra.mxu0 0.0
  %1922 = vmatprep.subr.mxu0 0.0
  %1923 = vmatpush2.msra.mxu0 0.0
  %1924 = vmatprep.subr.mxu0 0.0
  %1925 = vmatpush2.msra.mxu0 0.0
  %1926 = vmatprep.subr.mxu0 0.0
  %1927 = vmatpush2.msra.mxu0 0.0
  %1928 = vmatprep.subr.mxu0 0.0
  %1929 = vmatpush2.msra.mxu0 0.0
  %1930 = vmatprep.subr.mxu0 0.0
  %1931 = vmatpush2.msra.mxu0 0.0
  %1932 = vmatprep.subr.mxu0 0.0
  %1933 = vmatpush2.msra.mxu0 0.0
  %1934 = vmatprep.subr.mxu0 0.0
  %1935 = vmatpush2.msra.mxu0 0.0
  %1936 = vmatprep.subr.mxu0 0.0
  %1937 = vmatpush2.msra.mxu0 0.0
  %1938 = vmatprep.subr.mxu0 0.0
  %1939 = vmatpush2.msra.mxu0 0.0
  %1940 = vmatprep.subr.mxu0 0.0
  %1941 = vmatpush2.msra.mxu0 0.0
  %1942 = vmatprep.subr.mxu0 0.0
  %1943 = vmatpush2.msra.mxu0 0.0
  %1944 = vmatprep.subr.mxu0 0.0
  %1945 = vmatpush2.msra.mxu0 0.0
  %1946 = vmatprep.subr.mxu0 0.0
  %1947 = vmatpush2.msra.mxu0 0.0
  %1948 = vmatprep.subr.mxu0 0.0
  %1949 = vmatpush2.msra.mxu0 0.0
  %1950 = vmatprep.subr.mxu0 0.0
  %1951 = vmatpush2.msra.mxu0 0.0
  %1952 = vmatprep.mubr.f32.mxu0 0.0
  %v1953 = vand.u32 %v1400, 4294901760
  %1954 = vmatmul.mubr.f32.gmra.mxu0 %v1953
  %v1955 = vpop.f32.mrf.mxu0
  %v1956 = vadd.f32 %v1837, %v1955
  %v1957 = vpop.f32.mrf.mxu0
  %1958 = vdwg.mxu0
  %1959 = vmatprep.subr.mxu0 0.0
  %v1960 = vand.u32 %v109, 4294901760
  %1961 = vmatpush1.msra.mxu0 %v1960
  %1962 = vmatprep.subr.mxu0 0.0
  %v1963 = vand.u32 %v108, 4294901760
  %1964 = vmatpush1.msra.mxu0 %v1963
  %1965 = vmatprep.subr.mxu0 0.0
  %v1966 = vand.u32 %v107, 4294901760
  %1967 = vmatpush1.msra.mxu0 %v1966
  %1968 = vmatprep.subr.mxu0 0.0
  %v1969 = vand.u32 %v106, 4294901760
  %1970 = vmatpush1.msra.mxu0 %v1969
  %1971 = vmatprep.subr.mxu0 0.0
  %v1972 = vand.u32 %v105, 4294901760
  %1973 = vmatpush1.msra.mxu0 %v1972
  %1974 = vmatprep.subr.mxu0 0.0
  %v1975 = vand.u32 %v104, 4294901760
  %1976 = vmatpush1.msra.mxu0 %v1975
  %1977 = vmatprep.subr.mxu0 0.0
  %v1978 = vand.u32 %v103, 4294901760
  %1979 = vmatpush1.msra.mxu0 %v1978
  %1980 = vmatprep.subr.mxu0 0.0
  %v1981 = vand.u32 %v102, 4294901760
  %1982 = vmatpush1.msra.mxu0 %v1981
  %1983 = vmatprep.subr.mxu0 0.0
  %v1984 = vand.u32 %v101, 4294901760
  %1985 = vmatpush1.msra.mxu0 %v1984
  %1986 = vmatprep.subr.mxu0 0.0
  %v1987 = vand.u32 %v100, 4294901760
  %1988 = vmatpush1.msra.mxu0 %v1987
  %1989 = vmatprep.subr.mxu0 0.0
  %v1990 = vand.u32 %v99, 4294901760
  %1991 = vmatpush1.msra.mxu0 %v1990
  %1992 = vmatprep.subr.mxu0 0.0
  %v1993 = vand.u32 %v98, 4294901760
  %1994 = vmatpush1.msra.mxu0 %v1993
  %1995 = vmatprep.subr.mxu0 0.0
  %v1996 = vand.u32 %v97, 4294901760
  %1997 = vmatpush1.msra.mxu0 %v1996
  %1998 = vmatprep.subr.mxu0 0.0
  %v1999 = vand.u32 %v96, 4294901760
  %2000 = vmatpush1.msra.mxu0 %v1999
  %2001 = vmatprep.subr.mxu0 0.0
  %v2002 = vand.u32 %v95, 4294901760
  %2003 = vmatpush1.msra.mxu0 %v2002
  %2004 = vmatprep.subr.mxu0 0.0
  %v2005 = vand.u32 %v94, 4294901760
  %2006 = vmatpush1.msra.mxu0 %v2005
  %2007 = vmatprep.subr.mxu0 0.0
  %2008 = vmatpush2.msra.mxu0 0.0
  %2009 = vmatprep.subr.mxu0 0.0
  %2010 = vmatpush2.msra.mxu0 0.0
  %2011 = vmatprep.subr.mxu0 0.0
  %2012 = vmatpush2.msra.mxu0 0.0
  %2013 = vmatprep.subr.mxu0 0.0
  %2014 = vmatpush2.msra.mxu0 0.0
  %2015 = vmatprep.subr.mxu0 0.0
  %2016 = vmatpush2.msra.mxu0 0.0
  %2017 = vmatprep.subr.mxu0 0.0
  %2018 = vmatpush2.msra.mxu0 0.0
  %2019 = vmatprep.subr.mxu0 0.0
  %2020 = vmatpush2.msra.mxu0 0.0
  %2021 = vmatprep.subr.mxu0 0.0
  %2022 = vmatpush2.msra.mxu0 0.0
  %2023 = vmatprep.subr.mxu0 0.0
  %2024 = vmatpush2.msra.mxu0 0.0
  %2025 = vmatprep.subr.mxu0 0.0
  %2026 = vmatpush2.msra.mxu0 0.0
  %2027 = vmatprep.subr.mxu0 0.0
  %2028 = vmatpush2.msra.mxu0 0.0
  %2029 = vmatprep.subr.mxu0 0.0
  %2030 = vmatpush2.msra.mxu0 0.0
  %2031 = vmatprep.subr.mxu0 0.0
  %2032 = vmatpush2.msra.mxu0 0.0
  %2033 = vmatprep.subr.mxu0 0.0
  %2034 = vmatpush2.msra.mxu0 0.0
  %2035 = vmatprep.subr.mxu0 0.0
  %2036 = vmatpush2.msra.mxu0 0.0
  %2037 = vmatprep.subr.mxu0 0.0
  %2038 = vmatpush2.msra.mxu0 0.0
  %2039 = vmatprep.mubr.f32.mxu0 0.0
  %v2040 = vand.u32 %v1400, 4294901760
  %2041 = vmatmul.mubr.f32.gmra.mxu0 %v2040
  %v2042 = vpop.f32.mrf.mxu0
  %v2043 = vadd.f32 %v1956, %v2042
  %v2044 = vpop.f32.mrf.mxu0
  %2045 = vdwg.mxu0
  %v2046 = vadd.f32 %v1404, %v2043
  %v2047 = vtanh.pop %v2046
  %s2048 = scalar_lea.vmem %s3, 16
  %2049 = vst [vmem:[%s2048] sm:$0xff] %v2047
  %s2050 = scalar_lea.vmem %s0, 24
  %v2051 = vld [vmem:[%s2050] sm:$0xff]
  %2052 = vmatprep.subr.mxu0 0.0
  %v2053 = vand.u32 %v109, 4294901760
  %2054 = vmatpush1.msra.mxu0 %v2053
  %2055 = vmatprep.subr.mxu0 0.0
  %v2056 = vand.u32 %v108, 4294901760
  %2057 = vmatpush1.msra.mxu0 %v2056
  %2058 = vmatprep.subr.mxu0 0.0
  %v2059 = vand.u32 %v107, 4294901760
  %2060 = vmatpush1.msra.mxu0 %v2059
  %2061 = vmatprep.subr.mxu0 0.0
  %v2062 = vand.u32 %v106, 4294901760
  %2063 = vmatpush1.msra.mxu0 %v2062
  %2064 = vmatprep.subr.mxu0 0.0
  %v2065 = vand.u32 %v105, 4294901760
  %2066 = vmatpush1.msra.mxu0 %v2065
  %2067 = vmatprep.subr.mxu0 0.0
  %v2068 = vand.u32 %v104, 4294901760
  %2069 = vmatpush1.msra.mxu0 %v2068
  %2070 = vmatprep.subr.mxu0 0.0
  %v2071 = vand.u32 %v103, 4294901760
  %2072 = vmatpush1.msra.mxu0 %v2071
  %2073 = vmatprep.subr.mxu0 0.0
  %v2074 = vand.u32 %v102, 4294901760
  %2075 = vmatpush1.msra.mxu0 %v2074
  %2076 = vmatprep.subr.mxu0 0.0
  %v2077 = vand.u32 %v101, 4294901760
  %2078 = vmatpush1.msra.mxu0 %v2077
  %2079 = vmatprep.subr.mxu0 0.0
  %v2080 = vand.u32 %v100, 4294901760
  %2081 = vmatpush1.msra.mxu0 %v2080
  %2082 = vmatprep.subr.mxu0 0.0
  %v2083 = vand.u32 %v99, 4294901760
  %2084 = vmatpush1.msra.mxu0 %v2083
  %2085 = vmatprep.subr.mxu0 0.0
  %v2086 = vand.u32 %v98, 4294901760
  %2087 = vmatpush1.msra.mxu0 %v2086
  %2088 = vmatprep.subr.mxu0 0.0
  %v2089 = vand.u32 %v97, 4294901760
  %2090 = vmatpush1.msra.mxu0 %v2089
  %2091 = vmatprep.subr.mxu0 0.0
  %v2092 = vand.u32 %v96, 4294901760
  %2093 = vmatpush1.msra.mxu0 %v2092
  %2094 = vmatprep.subr.mxu0 0.0
  %v2095 = vand.u32 %v95, 4294901760
  %2096 = vmatpush1.msra.mxu0 %v2095
  %2097 = vmatprep.subr.mxu0 0.0
  %v2098 = vand.u32 %v94, 4294901760
  %2099 = vmatpush1.msra.mxu0 %v2098
  %2100 = vmatprep.subr.mxu0 0.0
  %2101 = vmatpush2.msra.mxu0 0.0
  %2102 = vmatprep.subr.mxu0 0.0
  %2103 = vmatpush2.msra.mxu0 0.0
  %2104 = vmatprep.subr.mxu0 0.0
  %2105 = vmatpush2.msra.mxu0 0.0
  %2106 = vmatprep.subr.mxu0 0.0
  %2107 = vmatpush2.msra.mxu0 0.0
  %2108 = vmatprep.subr.mxu0 0.0
  %2109 = vmatpush2.msra.mxu0 0.0
  %2110 = vmatprep.subr.mxu0 0.0
  %2111 = vmatpush2.msra.mxu0 0.0
  %2112 = vmatprep.subr.mxu0 0.0
  %2113 = vmatpush2.msra.mxu0 0.0
  %2114 = vmatprep.subr.mxu0 0.0
  %2115 = vmatpush2.msra.mxu0 0.0
  %2116 = vmatprep.subr.mxu0 0.0
  %2117 = vmatpush2.msra.mxu0 0.0
  %2118 = vmatprep.subr.mxu0 0.0
  %2119 = vmatpush2.msra.mxu0 0.0
  %2120 = vmatprep.subr.mxu0 0.0
  %2121 = vmatpush2.msra.mxu0 0.0
  %2122 = vmatprep.subr.mxu0 0.0
  %2123 = vmatpush2.msra.mxu0 0.0
  %2124 = vmatprep.subr.mxu0 0.0
  %2125 = vmatpush2.msra.mxu0 0.0
  %2126 = vmatprep.subr.mxu0 0.0
  %2127 = vmatpush2.msra.mxu0 0.0
  %2128 = vmatprep.subr.mxu0 0.0
  %2129 = vmatpush2.msra.mxu0 0.0
  %2130 = vmatprep.subr.mxu0 0.0
  %2131 = vmatpush2.msra.mxu0 0.0
  %2132 = vmatprep.mubr.f32.mxu0 0.0
  %v2133 = vand.u32 %v2047, 4294901760
  %v2134 = vsub.f32 %v2047, %v2133
  %v2135 = vand.u32 %v2134, 4294901760
  %v2136 = vsub.f32 %v2134, %v2135
  %v2137 = vand.u32 %v2136, 4294901760
  %2138 = vmatmul.mubr.f32.gmra.mxu0 %v2137
  %v2139 = vpop.f32.mrf.mxu0
  %v2140 = vadd.f32 0.0, %v2139
  %v2141 = vpop.f32.mrf.mxu0
  %2142 = vdwg.mxu0
  %2143 = vmatprep.subr.mxu0 0.0
  %v2144 = vand.u32 %v109, 4294901760
  %v2145 = vsub.f32 %v109, %v2144
  %v2146 = vand.u32 %v2145, 4294901760
  %v2147 = vsub.f32 %v2145, %v2146
  %v2148 = vand.u32 %v2147, 4294901760
  %2149 = vmatpush1.msra.mxu0 %v2148
  %2150 = vmatprep.subr.mxu0 0.0
  %v2151 = vand.u32 %v108, 4294901760
  %v2152 = vsub.f32 %v108, %v2151
  %v2153 = vand.u32 %v2152, 4294901760
  %v2154 = vsub.f32 %v2152, %v2153
  %v2155 = vand.u32 %v2154, 4294901760
  %2156 = vmatpush1.msra.mxu0 %v2155
  %2157 = vmatprep.subr.mxu0 0.0
  %v2158 = vand.u32 %v107, 4294901760
  %v2159 = vsub.f32 %v107, %v2158
  %v2160 = vand.u32 %v2159, 4294901760
  %v2161 = vsub.f32 %v2159, %v2160
  %v2162 = vand.u32 %v2161, 4294901760
  %2163 = vmatpush1.msra.mxu0 %v2162
  %2164 = vmatprep.subr.mxu0 0.0
  %v2165 = vand.u32 %v106, 4294901760
  %v2166 = vsub.f32 %v106, %v2165
  %v2167 = vand.u32 %v2166, 4294901760
  %v2168 = vsub.f32 %v2166, %v2167
  %v2169 = vand.u32 %v2168, 4294901760
  %2170 = vmatpush1.msra.mxu0 %v2169
  %2171 = vmatprep.subr.mxu0 0.0
  %v2172 = vand.u32 %v105, 4294901760
  %v2173 = vsub.f32 %v105, %v2172
  %v2174 = vand.u32 %v2173, 4294901760
  %v2175 = vsub.f32 %v2173, %v2174
  %v2176 = vand.u32 %v2175, 4294901760
  %2177 = vmatpush1.msra.mxu0 %v2176
  %2178 = vmatprep.subr.mxu0 0.0
  %v2179 = vand.u32 %v104, 4294901760
  %v2180 = vsub.f32 %v104, %v2179
  %v2181 = vand.u32 %v2180, 4294901760
  %v2182 = vsub.f32 %v2180, %v2181
  %v2183 = vand.u32 %v2182, 4294901760
  %2184 = vmatpush1.msra.mxu0 %v2183
  %2185 = vmatprep.subr.mxu0 0.0
  %v2186 = vand.u32 %v103, 4294901760
  %v2187 = vsub.f32 %v103, %v2186
  %v2188 = vand.u32 %v2187, 4294901760
  %v2189 = vsub.f32 %v2187, %v2188
  %v2190 = vand.u32 %v2189, 4294901760
  %2191 = vmatpush1.msra.mxu0 %v2190
  %2192 = vmatprep.subr.mxu0 0.0
  %v2193 = vand.u32 %v102, 4294901760
  %v2194 = vsub.f32 %v102, %v2193
  %v2195 = vand.u32 %v2194, 4294901760
  %v2196 = vsub.f32 %v2194, %v2195
  %v2197 = vand.u32 %v2196, 4294901760
  %2198 = vmatpush1.msra.mxu0 %v2197
  %2199 = vmatprep.subr.mxu0 0.0
  %v2200 = vand.u32 %v101, 4294901760
  %v2201 = vsub.f32 %v101, %v2200
  %v2202 = vand.u32 %v2201, 4294901760
  %v2203 = vsub.f32 %v2201, %v2202
  %v2204 = vand.u32 %v2203, 4294901760
  %2205 = vmatpush1.msra.mxu0 %v2204
  %2206 = vmatprep.subr.mxu0 0.0
  %v2207 = vand.u32 %v100, 4294901760
  %v2208 = vsub.f32 %v100, %v2207
  %v2209 = vand.u32 %v2208, 4294901760
  %v2210 = vsub.f32 %v2208, %v2209
  %v2211 = vand.u32 %v2210, 4294901760
  %2212 = vmatpush1.msra.mxu0 %v2211
  %2213 = vmatprep.subr.mxu0 0.0
  %v2214 = vand.u32 %v99, 4294901760
  %v2215 = vsub.f32 %v99, %v2214
  %v2216 = vand.u32 %v2215, 4294901760
  %v2217 = vsub.f32 %v2215, %v2216
  %v2218 = vand.u32 %v2217, 4294901760
  %2219 = vmatpush1.msra.mxu0 %v2218
  %2220 = vmatprep.subr.mxu0 0.0
  %v2221 = vand.u32 %v98, 4294901760
  %v2222 = vsub.f32 %v98, %v2221
  %v2223 = vand.u32 %v2222, 4294901760
  %v2224 = vsub.f32 %v2222, %v2223
  %v2225 = vand.u32 %v2224, 4294901760
  %2226 = vmatpush1.msra.mxu0 %v2225
  %2227 = vmatprep.subr.mxu0 0.0
  %v2228 = vand.u32 %v97, 4294901760
  %v2229 = vsub.f32 %v97, %v2228
  %v2230 = vand.u32 %v2229, 4294901760
  %v2231 = vsub.f32 %v2229, %v2230
  %v2232 = vand.u32 %v2231, 4294901760
  %2233 = vmatpush1.msra.mxu0 %v2232
  %2234 = vmatprep.subr.mxu0 0.0
  %v2235 = vand.u32 %v96, 4294901760
  %v2236 = vsub.f32 %v96, %v2235
  %v2237 = vand.u32 %v2236, 4294901760
  %v2238 = vsub.f32 %v2236, %v2237
  %v2239 = vand.u32 %v2238, 4294901760
  %2240 = vmatpush1.msra.mxu0 %v2239
  %2241 = vmatprep.subr.mxu0 0.0
  %v2242 = vand.u32 %v95, 4294901760
  %v2243 = vsub.f32 %v95, %v2242
  %v2244 = vand.u32 %v2243, 4294901760
  %v2245 = vsub.f32 %v2243, %v2244
  %v2246 = vand.u32 %v2245, 4294901760
  %2247 = vmatpush1.msra.mxu0 %v2246
  %2248 = vmatprep.subr.mxu0 0.0
  %v2249 = vand.u32 %v94, 4294901760
  %v2250 = vsub.f32 %v94, %v2249
  %v2251 = vand.u32 %v2250, 4294901760
  %v2252 = vsub.f32 %v2250, %v2251
  %v2253 = vand.u32 %v2252, 4294901760
  %2254 = vmatpush1.msra.mxu0 %v2253
  %2255 = vmatprep.subr.mxu0 0.0
  %2256 = vmatpush2.msra.mxu0 0.0
  %2257 = vmatprep.subr.mxu0 0.0
  %2258 = vmatpush2.msra.mxu0 0.0
  %2259 = vmatprep.subr.mxu0 0.0
  %2260 = vmatpush2.msra.mxu0 0.0
  %2261 = vmatprep.subr.mxu0 0.0
  %2262 = vmatpush2.msra.mxu0 0.0
  %2263 = vmatprep.subr.mxu0 0.0
  %2264 = vmatpush2.msra.mxu0 0.0
  %2265 = vmatprep.subr.mxu0 0.0
  %2266 = vmatpush2.msra.mxu0 0.0
  %2267 = vmatprep.subr.mxu0 0.0
  %2268 = vmatpush2.msra.mxu0 0.0
  %2269 = vmatprep.subr.mxu0 0.0
  %2270 = vmatpush2.msra.mxu0 0.0
  %2271 = vmatprep.subr.mxu0 0.0
  %2272 = vmatpush2.msra.mxu0 0.0
  %2273 = vmatprep.subr.mxu0 0.0
  %2274 = vmatpush2.msra.mxu0 0.0
  %2275 = vmatprep.subr.mxu0 0.0
  %2276 = vmatpush2.msra.mxu0 0.0
  %2277 = vmatprep.subr.mxu0 0.0
  %2278 = vmatpush2.msra.mxu0 0.0
  %2279 = vmatprep.subr.mxu0 0.0
  %2280 = vmatpush2.msra.mxu0 0.0
  %2281 = vmatprep.subr.mxu0 0.0
  %2282 = vmatpush2.msra.mxu0 0.0
  %2283 = vmatprep.subr.mxu0 0.0
  %2284 = vmatpush2.msra.mxu0 0.0
  %2285 = vmatprep.subr.mxu0 0.0
  %2286 = vmatpush2.msra.mxu0 0.0
  %2287 = vmatprep.mubr.f32.mxu0 0.0
  %v2288 = vand.u32 %v2047, 4294901760
  %2289 = vmatmul.mubr.f32.gmra.mxu0 %v2288
  %v2290 = vpop.f32.mrf.mxu0
  %v2291 = vadd.f32 %v2140, %v2290
  %v2292 = vpop.f32.mrf.mxu0
  %2293 = vdwg.mxu0
  %2294 = vmatprep.subr.mxu0 0.0
  %v2295 = vand.u32 %v109, 4294901760
  %v2296 = vsub.f32 %v109, %v2295
  %2297 = vmatpush1.msra.mxu0 %v2296
  %2298 = vmatprep.subr.mxu0 0.0
  %v2299 = vand.u32 %v108, 4294901760
  %v2300 = vsub.f32 %v108, %v2299
  %2301 = vmatpush1.msra.mxu0 %v2300
  %2302 = vmatprep.subr.mxu0 0.0
  %v2303 = vand.u32 %v107, 4294901760
  %v2304 = vsub.f32 %v107, %v2303
  %2305 = vmatpush1.msra.mxu0 %v2304
  %2306 = vmatprep.subr.mxu0 0.0
  %v2307 = vand.u32 %v106, 4294901760
  %v2308 = vsub.f32 %v106, %v2307
  %2309 = vmatpush1.msra.mxu0 %v2308
  %2310 = vmatprep.subr.mxu0 0.0
  %v2311 = vand.u32 %v105, 4294901760
  %v2312 = vsub.f32 %v105, %v2311
  %2313 = vmatpush1.msra.mxu0 %v2312
  %2314 = vmatprep.subr.mxu0 0.0
  %v2315 = vand.u32 %v104, 4294901760
  %v2316 = vsub.f32 %v104, %v2315
  %2317 = vmatpush1.msra.mxu0 %v2316
  %2318 = vmatprep.subr.mxu0 0.0
  %v2319 = vand.u32 %v103, 4294901760
  %v2320 = vsub.f32 %v103, %v2319
  %2321 = vmatpush1.msra.mxu0 %v2320
  %2322 = vmatprep.subr.mxu0 0.0
  %v2323 = vand.u32 %v102, 4294901760
  %v2324 = vsub.f32 %v102, %v2323
  %2325 = vmatpush1.msra.mxu0 %v2324
  %2326 = vmatprep.subr.mxu0 0.0
  %v2327 = vand.u32 %v101, 4294901760
  %v2328 = vsub.f32 %v101, %v2327
  %2329 = vmatpush1.msra.mxu0 %v2328
  %2330 = vmatprep.subr.mxu0 0.0
  %v2331 = vand.u32 %v100, 4294901760
  %v2332 = vsub.f32 %v100, %v2331
  %2333 = vmatpush1.msra.mxu0 %v2332
  %2334 = vmatprep.subr.mxu0 0.0
  %v2335 = vand.u32 %v99, 4294901760
  %v2336 = vsub.f32 %v99, %v2335
  %2337 = vmatpush1.msra.mxu0 %v2336
  %2338 = vmatprep.subr.mxu0 0.0
  %v2339 = vand.u32 %v98, 4294901760
  %v2340 = vsub.f32 %v98, %v2339
  %2341 = vmatpush1.msra.mxu0 %v2340
  %2342 = vmatprep.subr.mxu0 0.0
  %v2343 = vand.u32 %v97, 4294901760
  %v2344 = vsub.f32 %v97, %v2343
  %2345 = vmatpush1.msra.mxu0 %v2344
  %2346 = vmatprep.subr.mxu0 0.0
  %v2347 = vand.u32 %v96, 4294901760
  %v2348 = vsub.f32 %v96, %v2347
  %2349 = vmatpush1.msra.mxu0 %v2348
  %2350 = vmatprep.subr.mxu0 0.0
  %v2351 = vand.u32 %v95, 4294901760
  %v2352 = vsub.f32 %v95, %v2351
  %2353 = vmatpush1.msra.mxu0 %v2352
  %2354 = vmatprep.subr.mxu0 0.0
  %v2355 = vand.u32 %v94, 4294901760
  %v2356 = vsub.f32 %v94, %v2355
  %2357 = vmatpush1.msra.mxu0 %v2356
  %2358 = vmatprep.subr.mxu0 0.0
  %2359 = vmatpush2.msra.mxu0 0.0
  %2360 = vmatprep.subr.mxu0 0.0
  %2361 = vmatpush2.msra.mxu0 0.0
  %2362 = vmatprep.subr.mxu0 0.0
  %2363 = vmatpush2.msra.mxu0 0.0
  %2364 = vmatprep.subr.mxu0 0.0
  %2365 = vmatpush2.msra.mxu0 0.0
  %2366 = vmatprep.subr.mxu0 0.0
  %2367 = vmatpush2.msra.mxu0 0.0
  %2368 = vmatprep.subr.mxu0 0.0
  %2369 = vmatpush2.msra.mxu0 0.0
  %2370 = vmatprep.subr.mxu0 0.0
  %2371 = vmatpush2.msra.mxu0 0.0
  %2372 = vmatprep.subr.mxu0 0.0
  %2373 = vmatpush2.msra.mxu0 0.0
  %2374 = vmatprep.subr.mxu0 0.0
  %2375 = vmatpush2.msra.mxu0 0.0
  %2376 = vmatprep.subr.mxu0 0.0
  %2377 = vmatpush2.msra.mxu0 0.0
  %2378 = vmatprep.subr.mxu0 0.0
  %2379 = vmatpush2.msra.mxu0 0.0
  %2380 = vmatprep.subr.mxu0 0.0
  %2381 = vmatpush2.msra.mxu0 0.0
  %2382 = vmatprep.subr.mxu0 0.0
  %2383 = vmatpush2.msra.mxu0 0.0
  %2384 = vmatprep.subr.mxu0 0.0
  %2385 = vmatpush2.msra.mxu0 0.0
  %2386 = vmatprep.subr.mxu0 0.0
  %2387 = vmatpush2.msra.mxu0 0.0
  %2388 = vmatprep.subr.mxu0 0.0
  %2389 = vmatpush2.msra.mxu0 0.0
  %2390 = vmatprep.mubr.f32.mxu0 0.0
  %v2391 = vand.u32 %v2047, 4294901760
  %v2392 = vsub.f32 %v2047, %v2391
  %2393 = vmatmul.mubr.f32.gmra.mxu0 %v2392
  %v2394 = vpop.f32.mrf.mxu0
  %v2395 = vadd.f32 %v2291, %v2394
  %v2396 = vpop.f32.mrf.mxu0
  %2397 = vdwg.mxu0
  %2398 = vmatprep.subr.mxu0 0.0
  %v2399 = vand.u32 %v109, 4294901760
  %2400 = vmatpush1.msra.mxu0 %v2399
  %2401 = vmatprep.subr.mxu0 0.0
  %v2402 = vand.u32 %v108, 4294901760
  %2403 = vmatpush1.msra.mxu0 %v2402
  %2404 = vmatprep.subr.mxu0 0.0
  %v2405 = vand.u32 %v107, 4294901760
  %2406 = vmatpush1.msra.mxu0 %v2405
  %2407 = vmatprep.subr.mxu0 0.0
  %v2408 = vand.u32 %v106, 4294901760
  %2409 = vmatpush1.msra.mxu0 %v2408
  %2410 = vmatprep.subr.mxu0 0.0
  %v2411 = vand.u32 %v105, 4294901760
  %2412 = vmatpush1.msra.mxu0 %v2411
  %2413 = vmatprep.subr.mxu0 0.0
  %v2414 = vand.u32 %v104, 4294901760
  %2415 = vmatpush1.msra.mxu0 %v2414
  %2416 = vmatprep.subr.mxu0 0.0
  %v2417 = vand.u32 %v103, 4294901760
  %2418 = vmatpush1.msra.mxu0 %v2417
  %2419 = vmatprep.subr.mxu0 0.0
  %v2420 = vand.u32 %v102, 4294901760
  %2421 = vmatpush1.msra.mxu0 %v2420
  %2422 = vmatprep.subr.mxu0 0.0
  %v2423 = vand.u32 %v101, 4294901760
  %2424 = vmatpush1.msra.mxu0 %v2423
  %2425 = vmatprep.subr.mxu0 0.0
  %v2426 = vand.u32 %v100, 4294901760
  %2427 = vmatpush1.msra.mxu0 %v2426
  %2428 = vmatprep.subr.mxu0 0.0
  %v2429 = vand.u32 %v99, 4294901760
  %2430 = vmatpush1.msra.mxu0 %v2429
  %2431 = vmatprep.subr.mxu0 0.0
  %v2432 = vand.u32 %v98, 4294901760
  %2433 = vmatpush1.msra.mxu0 %v2432
  %2434 = vmatprep.subr.mxu0 0.0
  %v2435 = vand.u32 %v97, 4294901760
  %2436 = vmatpush1.msra.mxu0 %v2435
  %2437 = vmatprep.subr.mxu0 0.0
  %v2438 = vand.u32 %v96, 4294901760
  %2439 = vmatpush1.msra.mxu0 %v2438
  %2440 = vmatprep.subr.mxu0 0.0
  %v2441 = vand.u32 %v95, 4294901760
  %2442 = vmatpush1.msra.mxu0 %v2441
  %2443 = vmatprep.subr.mxu0 0.0
  %v2444 = vand.u32 %v94, 4294901760
  %2445 = vmatpush1.msra.mxu0 %v2444
  %2446 = vmatprep.subr.mxu0 0.0
  %2447 = vmatpush2.msra.mxu0 0.0
  %2448 = vmatprep.subr.mxu0 0.0
  %2449 = vmatpush2.msra.mxu0 0.0
  %2450 = vmatprep.subr.mxu0 0.0
  %2451 = vmatpush2.msra.mxu0 0.0
  %2452 = vmatprep.subr.mxu0 0.0
  %2453 = vmatpush2.msra.mxu0 0.0
  %2454 = vmatprep.subr.mxu0 0.0
  %2455 = vmatpush2.msra.mxu0 0.0
  %2456 = vmatprep.subr.mxu0 0.0
  %2457 = vmatpush2.msra.mxu0 0.0
  %2458 = vmatprep.subr.mxu0 0.0
  %2459 = vmatpush2.msra.mxu0 0.0
  %2460 = vmatprep.subr.mxu0 0.0
  %2461 = vmatpush2.msra.mxu0 0.0
  %2462 = vmatprep.subr.mxu0 0.0
  %2463 = vmatpush2.msra.mxu0 0.0
  %2464 = vmatprep.subr.mxu0 0.0
  %2465 = vmatpush2.msra.mxu0 0.0
  %2466 = vmatprep.subr.mxu0 0.0
  %2467 = vmatpush2.msra.mxu0 0.0
  %2468 = vmatprep.subr.mxu0 0.0
  %2469 = vmatpush2.msra.mxu0 0.0
  %2470 = vmatprep.subr.mxu0 0.0
  %2471 = vmatpush2.msra.mxu0 0.0
  %2472 = vmatprep.subr.mxu0 0.0
  %2473 = vmatpush2.msra.mxu0 0.0
  %2474 = vmatprep.subr.mxu0 0.0
  %2475 = vmatpush2.msra.mxu0 0.0
  %2476 = vmatprep.subr.mxu0 0.0
  %2477 = vmatpush2.msra.mxu0 0.0
  %2478 = vmatprep.mubr.f32.mxu0 0.0
  %v2479 = vand.u32 %v2047, 4294901760
  %v2480 = vsub.f32 %v2047, %v2479
  %v2481 = vand.u32 %v2480, 4294901760
  %2482 = vmatmul.mubr.f32.gmra.mxu0 %v2481
  %v2483 = vpop.f32.mrf.mxu0
  %v2484 = vadd.f32 %v2395, %v2483
  %v2485 = vpop.f32.mrf.mxu0
  %2486 = vdwg.mxu0
  %2487 = vmatprep.subr.mxu0 0.0
  %v2488 = vand.u32 %v109, 4294901760
  %v2489 = vsub.f32 %v109, %v2488
  %v2490 = vand.u32 %v2489, 4294901760
  %2491 = vmatpush1.msra.mxu0 %v2490
  %2492 = vmatprep.subr.mxu0 0.0
  %v2493 = vand.u32 %v108, 4294901760
  %v2494 = vsub.f32 %v108, %v2493
  %v2495 = vand.u32 %v2494, 4294901760
  %2496 = vmatpush1.msra.mxu0 %v2495
  %2497 = vmatprep.subr.mxu0 0.0
  %v2498 = vand.u32 %v107, 4294901760
  %v2499 = vsub.f32 %v107, %v2498
  %v2500 = vand.u32 %v2499, 4294901760
  %2501 = vmatpush1.msra.mxu0 %v2500
  %2502 = vmatprep.subr.mxu0 0.0
  %v2503 = vand.u32 %v106, 4294901760
  %v2504 = vsub.f32 %v106, %v2503
  %v2505 = vand.u32 %v2504, 4294901760
  %2506 = vmatpush1.msra.mxu0 %v2505
  %2507 = vmatprep.subr.mxu0 0.0
  %v2508 = vand.u32 %v105, 4294901760
  %v2509 = vsub.f32 %v105, %v2508
  %v2510 = vand.u32 %v2509, 4294901760
  %2511 = vmatpush1.msra.mxu0 %v2510
  %2512 = vmatprep.subr.mxu0 0.0
  %v2513 = vand.u32 %v104, 4294901760
  %v2514 = vsub.f32 %v104, %v2513
  %v2515 = vand.u32 %v2514, 4294901760
  %2516 = vmatpush1.msra.mxu0 %v2515
  %2517 = vmatprep.subr.mxu0 0.0
  %v2518 = vand.u32 %v103, 4294901760
  %v2519 = vsub.f32 %v103, %v2518
  %v2520 = vand.u32 %v2519, 4294901760
  %2521 = vmatpush1.msra.mxu0 %v2520
  %2522 = vmatprep.subr.mxu0 0.0
  %v2523 = vand.u32 %v102, 4294901760
  %v2524 = vsub.f32 %v102, %v2523
  %v2525 = vand.u32 %v2524, 4294901760
  %2526 = vmatpush1.msra.mxu0 %v2525
  %2527 = vmatprep.subr.mxu0 0.0
  %v2528 = vand.u32 %v101, 4294901760
  %v2529 = vsub.f32 %v101, %v2528
  %v2530 = vand.u32 %v2529, 4294901760
  %2531 = vmatpush1.msra.mxu0 %v2530
  %2532 = vmatprep.subr.mxu0 0.0
  %v2533 = vand.u32 %v100, 4294901760
  %v2534 = vsub.f32 %v100, %v2533
  %v2535 = vand.u32 %v2534, 4294901760
  %2536 = vmatpush1.msra.mxu0 %v2535
  %2537 = vmatprep.subr.mxu0 0.0
  %v2538 = vand.u32 %v99, 4294901760
  %v2539 = vsub.f32 %v99, %v2538
  %v2540 = vand.u32 %v2539, 4294901760
  %2541 = vmatpush1.msra.mxu0 %v2540
  %2542 = vmatprep.subr.mxu0 0.0
  %v2543 = vand.u32 %v98, 4294901760
  %v2544 = vsub.f32 %v98, %v2543
  %v2545 = vand.u32 %v2544, 4294901760
  %2546 = vmatpush1.msra.mxu0 %v2545
  %2547 = vmatprep.subr.mxu0 0.0
  %v2548 = vand.u32 %v97, 4294901760
  %v2549 = vsub.f32 %v97, %v2548
  %v2550 = vand.u32 %v2549, 4294901760
  %2551 = vmatpush1.msra.mxu0 %v2550
  %2552 = vmatprep.subr.mxu0 0.0
  %v2553 = vand.u32 %v96, 4294901760
  %v2554 = vsub.f32 %v96, %v2553
  %v2555 = vand.u32 %v2554, 4294901760
  %2556 = vmatpush1.msra.mxu0 %v2555
  %2557 = vmatprep.subr.mxu0 0.0
  %v2558 = vand.u32 %v95, 4294901760
  %v2559 = vsub.f32 %v95, %v2558
  %v2560 = vand.u32 %v2559, 4294901760
  %2561 = vmatpush1.msra.mxu0 %v2560
  %2562 = vmatprep.subr.mxu0 0.0
  %v2563 = vand.u32 %v94, 4294901760
  %v2564 = vsub.f32 %v94, %v2563
  %v2565 = vand.u32 %v2564, 4294901760
  %2566 = vmatpush1.msra.mxu0 %v2565
  %2567 = vmatprep.subr.mxu0 0.0
  %2568 = vmatpush2.msra.mxu0 0.0
  %2569 = vmatprep.subr.mxu0 0.0
  %2570 = vmatpush2.msra.mxu0 0.0
  %2571 = vmatprep.subr.mxu0 0.0
  %2572 = vmatpush2.msra.mxu0 0.0
  %2573 = vmatprep.subr.mxu0 0.0
  %2574 = vmatpush2.msra.mxu0 0.0
  %2575 = vmatprep.subr.mxu0 0.0
  %2576 = vmatpush2.msra.mxu0 0.0
  %2577 = vmatprep.subr.mxu0 0.0
  %2578 = vmatpush2.msra.mxu0 0.0
  %2579 = vmatprep.subr.mxu0 0.0
  %2580 = vmatpush2.msra.mxu0 0.0
  %2581 = vmatprep.subr.mxu0 0.0
  %2582 = vmatpush2.msra.mxu0 0.0
  %2583 = vmatprep.subr.mxu0 0.0
  %2584 = vmatpush2.msra.mxu0 0.0
  %2585 = vmatprep.subr.mxu0 0.0
  %2586 = vmatpush2.msra.mxu0 0.0
  %2587 = vmatprep.subr.mxu0 0.0
  %2588 = vmatpush2.msra.mxu0 0.0
  %2589 = vmatprep.subr.mxu0 0.0
  %2590 = vmatpush2.msra.mxu0 0.0
  %2591 = vmatprep.subr.mxu0 0.0
  %2592 = vmatpush2.msra.mxu0 0.0
  %2593 = vmatprep.subr.mxu0 0.0
  %2594 = vmatpush2.msra.mxu0 0.0
  %2595 = vmatprep.subr.mxu0 0.0
  %2596 = vmatpush2.msra.mxu0 0.0
  %2597 = vmatprep.subr.mxu0 0.0
  %2598 = vmatpush2.msra.mxu0 0.0
  %2599 = vmatprep.mubr.f32.mxu0 0.0
  %v2600 = vand.u32 %v2047, 4294901760
  %2601 = vmatmul.mubr.f32.gmra.mxu0 %v2600
  %v2602 = vpop.f32.mrf.mxu0
  %v2603 = vadd.f32 %v2484, %v2602
  %v2604 = vpop.f32.mrf.mxu0
  %2605 = vdwg.mxu0
  %2606 = vmatprep.subr.mxu0 0.0
  %v2607 = vand.u32 %v109, 4294901760
  %2608 = vmatpush1.msra.mxu0 %v2607
  %2609 = vmatprep.subr.mxu0 0.0
  %v2610 = vand.u32 %v108, 4294901760
  %2611 = vmatpush1.msra.mxu0 %v2610
  %2612 = vmatprep.subr.mxu0 0.0
  %v2613 = vand.u32 %v107, 4294901760
  %2614 = vmatpush1.msra.mxu0 %v2613
  %2615 = vmatprep.subr.mxu0 0.0
  %v2616 = vand.u32 %v106, 4294901760
  %2617 = vmatpush1.msra.mxu0 %v2616
  %2618 = vmatprep.subr.mxu0 0.0
  %v2619 = vand.u32 %v105, 4294901760
  %2620 = vmatpush1.msra.mxu0 %v2619
  %2621 = vmatprep.subr.mxu0 0.0
  %v2622 = vand.u32 %v104, 4294901760
  %2623 = vmatpush1.msra.mxu0 %v2622
  %2624 = vmatprep.subr.mxu0 0.0
  %v2625 = vand.u32 %v103, 4294901760
  %2626 = vmatpush1.msra.mxu0 %v2625
  %2627 = vmatprep.subr.mxu0 0.0
  %v2628 = vand.u32 %v102, 4294901760
  %2629 = vmatpush1.msra.mxu0 %v2628
  %2630 = vmatprep.subr.mxu0 0.0
  %v2631 = vand.u32 %v101, 4294901760
  %2632 = vmatpush1.msra.mxu0 %v2631
  %2633 = vmatprep.subr.mxu0 0.0
  %v2634 = vand.u32 %v100, 4294901760
  %2635 = vmatpush1.msra.mxu0 %v2634
  %2636 = vmatprep.subr.mxu0 0.0
  %v2637 = vand.u32 %v99, 4294901760
  %2638 = vmatpush1.msra.mxu0 %v2637
  %2639 = vmatprep.subr.mxu0 0.0
  %v2640 = vand.u32 %v98, 4294901760
  %2641 = vmatpush1.msra.mxu0 %v2640
  %2642 = vmatprep.subr.mxu0 0.0
  %v2643 = vand.u32 %v97, 4294901760
  %2644 = vmatpush1.msra.mxu0 %v2643
  %2645 = vmatprep.subr.mxu0 0.0
  %v2646 = vand.u32 %v96, 4294901760
  %2647 = vmatpush1.msra.mxu0 %v2646
  %2648 = vmatprep.subr.mxu0 0.0
  %v2649 = vand.u32 %v95, 4294901760
  %2650 = vmatpush1.msra.mxu0 %v2649
  %2651 = vmatprep.subr.mxu0 0.0
  %v2652 = vand.u32 %v94, 4294901760
  %2653 = vmatpush1.msra.mxu0 %v2652
  %2654 = vmatprep.subr.mxu0 0.0
  %2655 = vmatpush2.msra.mxu0 0.0
  %2656 = vmatprep.subr.mxu0 0.0
  %2657 = vmatpush2.msra.mxu0 0.0
  %2658 = vmatprep.subr.mxu0 0.0
  %2659 = vmatpush2.msra.mxu0 0.0
  %2660 = vmatprep.subr.mxu0 0.0
  %2661 = vmatpush2.msra.mxu0 0.0
  %2662 = vmatprep.subr.mxu0 0.0
  %2663 = vmatpush2.msra.mxu0 0.0
  %2664 = vmatprep.subr.mxu0 0.0
  %2665 = vmatpush2.msra.mxu0 0.0
  %2666 = vmatprep.subr.mxu0 0.0
  %2667 = vmatpush2.msra.mxu0 0.0
  %2668 = vmatprep.subr.mxu0 0.0
  %2669 = vmatpush2.msra.mxu0 0.0
  %2670 = vmatprep.subr.mxu0 0.0
  %2671 = vmatpush2.msra.mxu0 0.0
  %2672 = vmatprep.subr.mxu0 0.0
  %2673 = vmatpush2.msra.mxu0 0.0
  %2674 = vmatprep.subr.mxu0 0.0
  %2675 = vmatpush2.msra.mxu0 0.0
  %2676 = vmatprep.subr.mxu0 0.0
  %2677 = vmatpush2.msra.mxu0 0.0
  %2678 = vmatprep.subr.mxu0 0.0
  %2679 = vmatpush2.msra.mxu0 0.0
  %2680 = vmatprep.subr.mxu0 0.0
  %2681 = vmatpush2.msra.mxu0 0.0
  %2682 = vmatprep.subr.mxu0 0.0
  %2683 = vmatpush2.msra.mxu0 0.0
  %2684 = vmatprep.subr.mxu0 0.0
  %2685 = vmatpush2.msra.mxu0 0.0
  %2686 = vmatprep.mubr.f32.mxu0 0.0
  %v2687 = vand.u32 %v2047, 4294901760
  %2688 = vmatmul.mubr.f32.gmra.mxu0 %v2687
  %v2689 = vpop.f32.mrf.mxu0
  %v2690 = vadd.f32 %v2603, %v2689
  %v2691 = vpop.f32.mrf.mxu0
  %2692 = vdwg.mxu0
  %v2693 = vadd.f32 %v2051, %v2690
  %v2694 = vtanh.pop %v2693
  %s2695 = scalar_lea.vmem %s3, 24
  %2696 = vst [vmem:[%s2695] sm:$0xff] %v2694
  %s2697 = scalar_lea.vmem %s0, 32
  %v2698 = vld [vmem:[%s2697] sm:$0xff]
  %2699 = vmatprep.subr.mxu0 0.0
  %v2700 = vand.u32 %v109, 4294901760
  %2701 = vmatpush1.msra.mxu0 %v2700
  %2702 = vmatprep.subr.mxu0 0.0
  %v2703 = vand.u32 %v108, 4294901760
  %2704 = vmatpush1.msra.mxu0 %v2703
  %2705 = vmatprep.subr.mxu0 0.0
  %v2706 = vand.u32 %v107, 4294901760
  %2707 = vmatpush1.msra.mxu0 %v2706
  %2708 = vmatprep.subr.mxu0 0.0
  %v2709 = vand.u32 %v106, 4294901760
  %2710 = vmatpush1.msra.mxu0 %v2709
  %2711 = vmatprep.subr.mxu0 0.0
  %v2712 = vand.u32 %v105, 4294901760
  %2713 = vmatpush1.msra.mxu0 %v2712
  %2714 = vmatprep.subr.mxu0 0.0
  %v2715 = vand.u32 %v104, 4294901760
  %2716 = vmatpush1.msra.mxu0 %v2715
  %2717 = vmatprep.subr.mxu0 0.0
  %v2718 = vand.u32 %v103, 4294901760
  %2719 = vmatpush1.msra.mxu0 %v2718
  %2720 = vmatprep.subr.mxu0 0.0
  %v2721 = vand.u32 %v102, 4294901760
  %2722 = vmatpush1.msra.mxu0 %v2721
  %2723 = vmatprep.subr.mxu0 0.0
  %v2724 = vand.u32 %v101, 4294901760
  %2725 = vmatpush1.msra.mxu0 %v2724
  %2726 = vmatprep.subr.mxu0 0.0
  %v2727 = vand.u32 %v100, 4294901760
  %2728 = vmatpush1.msra.mxu0 %v2727
  %2729 = vmatprep.subr.mxu0 0.0
  %v2730 = vand.u32 %v99, 4294901760
  %2731 = vmatpush1.msra.mxu0 %v2730
  %2732 = vmatprep.subr.mxu0 0.0
  %v2733 = vand.u32 %v98, 4294901760
  %2734 = vmatpush1.msra.mxu0 %v2733
  %2735 = vmatprep.subr.mxu0 0.0
  %v2736 = vand.u32 %v97, 4294901760
  %2737 = vmatpush1.msra.mxu0 %v2736
  %2738 = vmatprep.subr.mxu0 0.0
  %v2739 = vand.u32 %v96, 4294901760
  %2740 = vmatpush1.msra.mxu0 %v2739
  %2741 = vmatprep.subr.mxu0 0.0
  %v2742 = vand.u32 %v95, 4294901760
  %2743 = vmatpush1.msra.mxu0 %v2742
  %2744 = vmatprep.subr.mxu0 0.0
  %v2745 = vand.u32 %v94, 4294901760
  %2746 = vmatpush1.msra.mxu0 %v2745
  %2747 = vmatprep.subr.mxu0 0.0
  %2748 = vmatpush2.msra.mxu0 0.0
  %2749 = vmatprep.subr.mxu0 0.0
  %2750 = vmatpush2.msra.mxu0 0.0
  %2751 = vmatprep.subr.mxu0 0.0
  %2752 = vmatpush2.msra.mxu0 0.0
  %2753 = vmatprep.subr.mxu0 0.0
  %2754 = vmatpush2.msra.mxu0 0.0
  %2755 = vmatprep.subr.mxu0 0.0
  %2756 = vmatpush2.msra.mxu0 0.0
  %2757 = vmatprep.subr.mxu0 0.0
  %2758 = vmatpush2.msra.mxu0 0.0
  %2759 = vmatprep.subr.mxu0 0.0
  %2760 = vmatpush2.msra.mxu0 0.0
  %2761 = vmatprep.subr.mxu0 0.0
  %2762 = vmatpush2.msra.mxu0 0.0
  %2763 = vmatprep.subr.mxu0 0.0
  %2764 = vmatpush2.msra.mxu0 0.0
  %2765 = vmatprep.subr.mxu0 0.0
  %2766 = vmatpush2.msra.mxu0 0.0
  %2767 = vmatprep.subr.mxu0 0.0
  %2768 = vmatpush2.msra.mxu0 0.0
  %2769 = vmatprep.subr.mxu0 0.0
  %2770 = vmatpush2.msra.mxu0 0.0
  %2771 = vmatprep.subr.mxu0 0.0
  %2772 = vmatpush2.msra.mxu0 0.0
  %2773 = vmatprep.subr.mxu0 0.0
  %2774 = vmatpush2.msra.mxu0 0.0
  %2775 = vmatprep.subr.mxu0 0.0
  %2776 = vmatpush2.msra.mxu0 0.0
  %2777 = vmatprep.subr.mxu0 0.0
  %2778 = vmatpush2.msra.mxu0 0.0
  %2779 = vmatprep.mubr.f32.mxu0 0.0
  %v2780 = vand.u32 %v2694, 4294901760
  %v2781 = vsub.f32 %v2694, %v2780
  %v2782 = vand.u32 %v2781, 4294901760
  %v2783 = vsub.f32 %v2781, %v2782
  %v2784 = vand.u32 %v2783, 4294901760
  %2785 = vmatmul.mubr.f32.gmra.mxu0 %v2784
  %v2786 = vpop.f32.mrf.mxu0
  %v2787 = vadd.f32 0.0, %v2786
  %v2788 = vpop.f32.mrf.mxu0
  %2789 = vdwg.mxu0
  %2790 = vmatprep.subr.mxu0 0.0
  %v2791 = vand.u32 %v109, 4294901760
  %v2792 = vsub.f32 %v109, %v2791
  %v2793 = vand.u32 %v2792, 4294901760
  %v2794 = vsub.f32 %v2792, %v2793
  %v2795 = vand.u32 %v2794, 4294901760
  %2796 = vmatpush1.msra.mxu0 %v2795
  %2797 = vmatprep.subr.mxu0 0.0
  %v2798 = vand.u32 %v108, 4294901760
  %v2799 = vsub.f32 %v108, %v2798
  %v2800 = vand.u32 %v2799, 4294901760
  %v2801 = vsub.f32 %v2799, %v2800
  %v2802 = vand.u32 %v2801, 4294901760
  %2803 = vmatpush1.msra.mxu0 %v2802
  %2804 = vmatprep.subr.mxu0 0.0
  %v2805 = vand.u32 %v107, 4294901760
  %v2806 = vsub.f32 %v107, %v2805
  %v2807 = vand.u32 %v2806, 4294901760
  %v2808 = vsub.f32 %v2806, %v2807
  %v2809 = vand.u32 %v2808, 4294901760
  %2810 = vmatpush1.msra.mxu0 %v2809
  %2811 = vmatprep.subr.mxu0 0.0
  %v2812 = vand.u32 %v106, 4294901760
  %v2813 = vsub.f32 %v106, %v2812
  %v2814 = vand.u32 %v2813, 4294901760
  %v2815 = vsub.f32 %v2813, %v2814
  %v2816 = vand.u32 %v2815, 4294901760
  %2817 = vmatpush1.msra.mxu0 %v2816
  %2818 = vmatprep.subr.mxu0 0.0
  %v2819 = vand.u32 %v105, 4294901760
  %v2820 = vsub.f32 %v105, %v2819
  %v2821 = vand.u32 %v2820, 4294901760
  %v2822 = vsub.f32 %v2820, %v2821
  %v2823 = vand.u32 %v2822, 4294901760
  %2824 = vmatpush1.msra.mxu0 %v2823
  %2825 = vmatprep.subr.mxu0 0.0
  %v2826 = vand.u32 %v104, 4294901760
  %v2827 = vsub.f32 %v104, %v2826
  %v2828 = vand.u32 %v2827, 4294901760
  %v2829 = vsub.f32 %v2827, %v2828
  %v2830 = vand.u32 %v2829, 4294901760
  %2831 = vmatpush1.msra.mxu0 %v2830
  %2832 = vmatprep.subr.mxu0 0.0
  %v2833 = vand.u32 %v103, 4294901760
  %v2834 = vsub.f32 %v103, %v2833
  %v2835 = vand.u32 %v2834, 4294901760
  %v2836 = vsub.f32 %v2834, %v2835
  %v2837 = vand.u32 %v2836, 4294901760
  %2838 = vmatpush1.msra.mxu0 %v2837
  %2839 = vmatprep.subr.mxu0 0.0
  %v2840 = vand.u32 %v102, 4294901760
  %v2841 = vsub.f32 %v102, %v2840
  %v2842 = vand.u32 %v2841, 4294901760
  %v2843 = vsub.f32 %v2841, %v2842
  %v2844 = vand.u32 %v2843, 4294901760
  %2845 = vmatpush1.msra.mxu0 %v2844
  %2846 = vmatprep.subr.mxu0 0.0
  %v2847 = vand.u32 %v101, 4294901760
  %v2848 = vsub.f32 %v101, %v2847
  %v2849 = vand.u32 %v2848, 4294901760
  %v2850 = vsub.f32 %v2848, %v2849
  %v2851 = vand.u32 %v2850, 4294901760
  %2852 = vmatpush1.msra.mxu0 %v2851
  %2853 = vmatprep.subr.mxu0 0.0
  %v2854 = vand.u32 %v100, 4294901760
  %v2855 = vsub.f32 %v100, %v2854
  %v2856 = vand.u32 %v2855, 4294901760
  %v2857 = vsub.f32 %v2855, %v2856
  %v2858 = vand.u32 %v2857, 4294901760
  %2859 = vmatpush1.msra.mxu0 %v2858
  %2860 = vmatprep.subr.mxu0 0.0
  %v2861 = vand.u32 %v99, 4294901760
  %v2862 = vsub.f32 %v99, %v2861
  %v2863 = vand.u32 %v2862, 4294901760
  %v2864 = vsub.f32 %v2862, %v2863
  %v2865 = vand.u32 %v2864, 4294901760
  %2866 = vmatpush1.msra.mxu0 %v2865
  %2867 = vmatprep.subr.mxu0 0.0
  %v2868 = vand.u32 %v98, 4294901760
  %v2869 = vsub.f32 %v98, %v2868
  %v2870 = vand.u32 %v2869, 4294901760
  %v2871 = vsub.f32 %v2869, %v2870
  %v2872 = vand.u32 %v2871, 4294901760
  %2873 = vmatpush1.msra.mxu0 %v2872
  %2874 = vmatprep.subr.mxu0 0.0
  %v2875 = vand.u32 %v97, 4294901760
  %v2876 = vsub.f32 %v97, %v2875
  %v2877 = vand.u32 %v2876, 4294901760
  %v2878 = vsub.f32 %v2876, %v2877
  %v2879 = vand.u32 %v2878, 4294901760
  %2880 = vmatpush1.msra.mxu0 %v2879
  %2881 = vmatprep.subr.mxu0 0.0
  %v2882 = vand.u32 %v96, 4294901760
  %v2883 = vsub.f32 %v96, %v2882
  %v2884 = vand.u32 %v2883, 4294901760
  %v2885 = vsub.f32 %v2883, %v2884
  %v2886 = vand.u32 %v2885, 4294901760
  %2887 = vmatpush1.msra.mxu0 %v2886
  %2888 = vmatprep.subr.mxu0 0.0
  %v2889 = vand.u32 %v95, 4294901760
  %v2890 = vsub.f32 %v95, %v2889
  %v2891 = vand.u32 %v2890, 4294901760
  %v2892 = vsub.f32 %v2890, %v2891
  %v2893 = vand.u32 %v2892, 4294901760
  %2894 = vmatpush1.msra.mxu0 %v2893
  %2895 = vmatprep.subr.mxu0 0.0
  %v2896 = vand.u32 %v94, 4294901760
  %v2897 = vsub.f32 %v94, %v2896
  %v2898 = vand.u32 %v2897, 4294901760
  %v2899 = vsub.f32 %v2897, %v2898
  %v2900 = vand.u32 %v2899, 4294901760
  %2901 = vmatpush1.msra.mxu0 %v2900
  %2902 = vmatprep.subr.mxu0 0.0
  %2903 = vmatpush2.msra.mxu0 0.0
  %2904 = vmatprep.subr.mxu0 0.0
  %2905 = vmatpush2.msra.mxu0 0.0
  %2906 = vmatprep.subr.mxu0 0.0
  %2907 = vmatpush2.msra.mxu0 0.0
  %2908 = vmatprep.subr.mxu0 0.0
  %2909 = vmatpush2.msra.mxu0 0.0
  %2910 = vmatprep.subr.mxu0 0.0
  %2911 = vmatpush2.msra.mxu0 0.0
  %2912 = vmatprep.subr.mxu0 0.0
  %2913 = vmatpush2.msra.mxu0 0.0
  %2914 = vmatprep.subr.mxu0 0.0
  %2915 = vmatpush2.msra.mxu0 0.0
  %2916 = vmatprep.subr.mxu0 0.0
  %2917 = vmatpush2.msra.mxu0 0.0
  %2918 = vmatprep.subr.mxu0 0.0
  %2919 = vmatpush2.msra.mxu0 0.0
  %2920 = vmatprep.subr.mxu0 0.0
  %2921 = vmatpush2.msra.mxu0 0.0
  %2922 = vmatprep.subr.mxu0 0.0
  %2923 = vmatpush2.msra.mxu0 0.0
  %2924 = vmatprep.subr.mxu0 0.0
  %2925 = vmatpush2.msra.mxu0 0.0
  %2926 = vmatprep.subr.mxu0 0.0
  %2927 = vmatpush2.msra.mxu0 0.0
  %2928 = vmatprep.subr.mxu0 0.0
  %2929 = vmatpush2.msra.mxu0 0.0
  %2930 = vmatprep.subr.mxu0 0.0
  %2931 = vmatpush2.msra.mxu0 0.0
  %2932 = vmatprep.subr.mxu0 0.0
  %2933 = vmatpush2.msra.mxu0 0.0
  %2934 = vmatprep.mubr.f32.mxu0 0.0
  %v2935 = vand.u32 %v2694, 4294901760
  %2936 = vmatmul.mubr.f32.gmra.mxu0 %v2935
  %v2937 = vpop.f32.mrf.mxu0
  %v2938 = vadd.f32 %v2787, %v2937
  %v2939 = vpop.f32.mrf.mxu0
  %2940 = vdwg.mxu0
  %2941 = vmatprep.subr.mxu0 0.0
  %v2942 = vand.u32 %v109, 4294901760
  %v2943 = vsub.f32 %v109, %v2942
  %2944 = vmatpush1.msra.mxu0 %v2943
  %2945 = vmatprep.subr.mxu0 0.0
  %v2946 = vand.u32 %v108, 4294901760
  %v2947 = vsub.f32 %v108, %v2946
  %2948 = vmatpush1.msra.mxu0 %v2947
  %2949 = vmatprep.subr.mxu0 0.0
  %v2950 = vand.u32 %v107, 4294901760
  %v2951 = vsub.f32 %v107, %v2950
  %2952 = vmatpush1.msra.mxu0 %v2951
  %2953 = vmatprep.subr.mxu0 0.0
  %v2954 = vand.u32 %v106, 4294901760
  %v2955 = vsub.f32 %v106, %v2954
  %2956 = vmatpush1.msra.mxu0 %v2955
  %2957 = vmatprep.subr.mxu0 0.0
  %v2958 = vand.u32 %v105, 4294901760
  %v2959 = vsub.f32 %v105, %v2958
  %2960 = vmatpush1.msra.mxu0 %v2959
  %2961 = vmatprep.subr.mxu0 0.0
  %v2962 = vand.u32 %v104, 4294901760
  %v2963 = vsub.f32 %v104, %v2962
  %2964 = vmatpush1.msra.mxu0 %v2963
  %2965 = vmatprep.subr.mxu0 0.0
  %v2966 = vand.u32 %v103, 4294901760
  %v2967 = vsub.f32 %v103, %v2966
  %2968 = vmatpush1.msra.mxu0 %v2967
  %2969 = vmatprep.subr.mxu0 0.0
  %v2970 = vand.u32 %v102, 4294901760
  %v2971 = vsub.f32 %v102, %v2970
  %2972 = vmatpush1.msra.mxu0 %v2971
  %2973 = vmatprep.subr.mxu0 0.0
  %v2974 = vand.u32 %v101, 4294901760
  %v2975 = vsub.f32 %v101, %v2974
  %2976 = vmatpush1.msra.mxu0 %v2975
  %2977 = vmatprep.subr.mxu0 0.0
  %v2978 = vand.u32 %v100, 4294901760
  %v2979 = vsub.f32 %v100, %v2978
  %2980 = vmatpush1.msra.mxu0 %v2979
  %2981 = vmatprep.subr.mxu0 0.0
  %v2982 = vand.u32 %v99, 4294901760
  %v2983 = vsub.f32 %v99, %v2982
  %2984 = vmatpush1.msra.mxu0 %v2983
  %2985 = vmatprep.subr.mxu0 0.0
  %v2986 = vand.u32 %v98, 4294901760
  %v2987 = vsub.f32 %v98, %v2986
  %2988 = vmatpush1.msra.mxu0 %v2987
  %2989 = vmatprep.subr.mxu0 0.0
  %v2990 = vand.u32 %v97, 4294901760
  %v2991 = vsub.f32 %v97, %v2990
  %2992 = vmatpush1.msra.mxu0 %v2991
  %2993 = vmatprep.subr.mxu0 0.0
  %v2994 = vand.u32 %v96, 4294901760
  %v2995 = vsub.f32 %v96, %v2994
  %2996 = vmatpush1.msra.mxu0 %v2995
  %2997 = vmatprep.subr.mxu0 0.0
  %v2998 = vand.u32 %v95, 4294901760
  %v2999 = vsub.f32 %v95, %v2998
  %3000 = vmatpush1.msra.mxu0 %v2999
  %3001 = vmatprep.subr.mxu0 0.0
  %v3002 = vand.u32 %v94, 4294901760
  %v3003 = vsub.f32 %v94, %v3002
  %3004 = vmatpush1.msra.mxu0 %v3003
  %3005 = vmatprep.subr.mxu0 0.0
  %3006 = vmatpush2.msra.mxu0 0.0
  %3007 = vmatprep.subr.mxu0 0.0
  %3008 = vmatpush2.msra.mxu0 0.0
  %3009 = vmatprep.subr.mxu0 0.0
  %3010 = vmatpush2.msra.mxu0 0.0
  %3011 = vmatprep.subr.mxu0 0.0
  %3012 = vmatpush2.msra.mxu0 0.0
  %3013 = vmatprep.subr.mxu0 0.0
  %3014 = vmatpush2.msra.mxu0 0.0
  %3015 = vmatprep.subr.mxu0 0.0
  %3016 = vmatpush2.msra.mxu0 0.0
  %3017 = vmatprep.subr.mxu0 0.0
  %3018 = vmatpush2.msra.mxu0 0.0
  %3019 = vmatprep.subr.mxu0 0.0
  %3020 = vmatpush2.msra.mxu0 0.0
  %3021 = vmatprep.subr.mxu0 0.0
  %3022 = vmatpush2.msra.mxu0 0.0
  %3023 = vmatprep.subr.mxu0 0.0
  %3024 = vmatpush2.msra.mxu0 0.0
  %3025 = vmatprep.subr.mxu0 0.0
  %3026 = vmatpush2.msra.mxu0 0.0
  %3027 = vmatprep.subr.mxu0 0.0
  %3028 = vmatpush2.msra.mxu0 0.0
  %3029 = vmatprep.subr.mxu0 0.0
  %3030 = vmatpush2.msra.mxu0 0.0
  %3031 = vmatprep.subr.mxu0 0.0
  %3032 = vmatpush2.msra.mxu0 0.0
  %3033 = vmatprep.subr.mxu0 0.0
  %3034 = vmatpush2.msra.mxu0 0.0
  %3035 = vmatprep.subr.mxu0 0.0
  %3036 = vmatpush2.msra.mxu0 0.0
  %3037 = vmatprep.mubr.f32.mxu0 0.0
  %v3038 = vand.u32 %v2694, 4294901760
  %v3039 = vsub.f32 %v2694, %v3038
  %3040 = vmatmul.mubr.f32.gmra.mxu0 %v3039
  %v3041 = vpop.f32.mrf.mxu0
  %v3042 = vadd.f32 %v2938, %v3041
  %v3043 = vpop.f32.mrf.mxu0
  %3044 = vdwg.mxu0
  %3045 = vmatprep.subr.mxu0 0.0
  %v3046 = vand.u32 %v109, 4294901760
  %3047 = vmatpush1.msra.mxu0 %v3046
  %3048 = vmatprep.subr.mxu0 0.0
  %v3049 = vand.u32 %v108, 4294901760
  %3050 = vmatpush1.msra.mxu0 %v3049
  %3051 = vmatprep.subr.mxu0 0.0
  %v3052 = vand.u32 %v107, 4294901760
  %3053 = vmatpush1.msra.mxu0 %v3052
  %3054 = vmatprep.subr.mxu0 0.0
  %v3055 = vand.u32 %v106, 4294901760
  %3056 = vmatpush1.msra.mxu0 %v3055
  %3057 = vmatprep.subr.mxu0 0.0
  %v3058 = vand.u32 %v105, 4294901760
  %3059 = vmatpush1.msra.mxu0 %v3058
  %3060 = vmatprep.subr.mxu0 0.0
  %v3061 = vand.u32 %v104, 4294901760
  %3062 = vmatpush1.msra.mxu0 %v3061
  %3063 = vmatprep.subr.mxu0 0.0
  %v3064 = vand.u32 %v103, 4294901760
  %3065 = vmatpush1.msra.mxu0 %v3064
  %3066 = vmatprep.subr.mxu0 0.0
  %v3067 = vand.u32 %v102, 4294901760
  %3068 = vmatpush1.msra.mxu0 %v3067
  %3069 = vmatprep.subr.mxu0 0.0
  %v3070 = vand.u32 %v101, 4294901760
  %3071 = vmatpush1.msra.mxu0 %v3070
  %3072 = vmatprep.subr.mxu0 0.0
  %v3073 = vand.u32 %v100, 4294901760
  %3074 = vmatpush1.msra.mxu0 %v3073
  %3075 = vmatprep.subr.mxu0 0.0
  %v3076 = vand.u32 %v99, 4294901760
  %3077 = vmatpush1.msra.mxu0 %v3076
  %3078 = vmatprep.subr.mxu0 0.0
  %v3079 = vand.u32 %v98, 4294901760
  %3080 = vmatpush1.msra.mxu0 %v3079
  %3081 = vmatprep.subr.mxu0 0.0
  %v3082 = vand.u32 %v97, 4294901760
  %3083 = vmatpush1.msra.mxu0 %v3082
  %3084 = vmatprep.subr.mxu0 0.0
  %v3085 = vand.u32 %v96, 4294901760
  %3086 = vmatpush1.msra.mxu0 %v3085
  %3087 = vmatprep.subr.mxu0 0.0
  %v3088 = vand.u32 %v95, 4294901760
  %3089 = vmatpush1.msra.mxu0 %v3088
  %3090 = vmatprep.subr.mxu0 0.0
  %v3091 = vand.u32 %v94, 4294901760
  %3092 = vmatpush1.msra.mxu0 %v3091
  %3093 = vmatprep.subr.mxu0 0.0
  %3094 = vmatpush2.msra.mxu0 0.0
  %3095 = vmatprep.subr.mxu0 0.0
  %3096 = vmatpush2.msra.mxu0 0.0
  %3097 = vmatprep.subr.mxu0 0.0
  %3098 = vmatpush2.msra.mxu0 0.0
  %3099 = vmatprep.subr.mxu0 0.0
  %3100 = vmatpush2.msra.mxu0 0.0
  %3101 = vmatprep.subr.mxu0 0.0
  %3102 = vmatpush2.msra.mxu0 0.0
  %3103 = vmatprep.subr.mxu0 0.0
  %3104 = vmatpush2.msra.mxu0 0.0
  %3105 = vmatprep.subr.mxu0 0.0
  %3106 = vmatpush2.msra.mxu0 0.0
  %3107 = vmatprep.subr.mxu0 0.0
  %3108 = vmatpush2.msra.mxu0 0.0
  %3109 = vmatprep.subr.mxu0 0.0
  %3110 = vmatpush2.msra.mxu0 0.0
  %3111 = vmatprep.subr.mxu0 0.0
  %3112 = vmatpush2.msra.mxu0 0.0
  %3113 = vmatprep.subr.mxu0 0.0
  %3114 = vmatpush2.msra.mxu0 0.0
  %3115 = vmatprep.subr.mxu0 0.0
  %3116 = vmatpush2.msra.mxu0 0.0
  %3117 = vmatprep.subr.mxu0 0.0
  %3118 = vmatpush2.msra.mxu0 0.0
  %3119 = vmatprep.subr.mxu0 0.0
  %3120 = vmatpush2.msra.mxu0 0.0
  %3121 = vmatprep.subr.mxu0 0.0
  %3122 = vmatpush2.msra.mxu0 0.0
  %3123 = vmatprep.subr.mxu0 0.0
  %3124 = vmatpush2.msra.mxu0 0.0
  %3125 = vmatprep.mubr.f32.mxu0 0.0
  %v3126 = vand.u32 %v2694, 4294901760
  %v3127 = vsub.f32 %v2694, %v3126
  %v3128 = vand.u32 %v3127, 4294901760
  %3129 = vmatmul.mubr.f32.gmra.mxu0 %v3128
  %v3130 = vpop.f32.mrf.mxu0
  %v3131 = vadd.f32 %v3042, %v3130
  %v3132 = vpop.f32.mrf.mxu0
  %3133 = vdwg.mxu0
  %3134 = vmatprep.subr.mxu0 0.0
  %v3135 = vand.u32 %v109, 4294901760
  %v3136 = vsub.f32 %v109, %v3135
  %v3137 = vand.u32 %v3136, 4294901760
  %3138 = vmatpush1.msra.mxu0 %v3137
  %3139 = vmatprep.subr.mxu0 0.0
  %v3140 = vand.u32 %v108, 4294901760
  %v3141 = vsub.f32 %v108, %v3140
  %v3142 = vand.u32 %v3141, 4294901760
  %3143 = vmatpush1.msra.mxu0 %v3142
  %3144 = vmatprep.subr.mxu0 0.0
  %v3145 = vand.u32 %v107, 4294901760
  %v3146 = vsub.f32 %v107, %v3145
  %v3147 = vand.u32 %v3146, 4294901760
  %3148 = vmatpush1.msra.mxu0 %v3147
  %3149 = vmatprep.subr.mxu0 0.0
  %v3150 = vand.u32 %v106, 4294901760
  %v3151 = vsub.f32 %v106, %v3150
  %v3152 = vand.u32 %v3151, 4294901760
  %3153 = vmatpush1.msra.mxu0 %v3152
  %3154 = vmatprep.subr.mxu0 0.0
  %v3155 = vand.u32 %v105, 4294901760
  %v3156 = vsub.f32 %v105, %v3155
  %v3157 = vand.u32 %v3156, 4294901760
  %3158 = vmatpush1.msra.mxu0 %v3157
  %3159 = vmatprep.subr.mxu0 0.0
  %v3160 = vand.u32 %v104, 4294901760
  %v3161 = vsub.f32 %v104, %v3160
  %v3162 = vand.u32 %v3161, 4294901760
  %3163 = vmatpush1.msra.mxu0 %v3162
  %3164 = vmatprep.subr.mxu0 0.0
  %v3165 = vand.u32 %v103, 4294901760
  %v3166 = vsub.f32 %v103, %v3165
  %v3167 = vand.u32 %v3166, 4294901760
  %3168 = vmatpush1.msra.mxu0 %v3167
  %3169 = vmatprep.subr.mxu0 0.0
  %v3170 = vand.u32 %v102, 4294901760
  %v3171 = vsub.f32 %v102, %v3170
  %v3172 = vand.u32 %v3171, 4294901760
  %3173 = vmatpush1.msra.mxu0 %v3172
  %3174 = vmatprep.subr.mxu0 0.0
  %v3175 = vand.u32 %v101, 4294901760
  %v3176 = vsub.f32 %v101, %v3175
  %v3177 = vand.u32 %v3176, 4294901760
  %3178 = vmatpush1.msra.mxu0 %v3177
  %3179 = vmatprep.subr.mxu0 0.0
  %v3180 = vand.u32 %v100, 4294901760
  %v3181 = vsub.f32 %v100, %v3180
  %v3182 = vand.u32 %v3181, 4294901760
  %3183 = vmatpush1.msra.mxu0 %v3182
  %3184 = vmatprep.subr.mxu0 0.0
  %v3185 = vand.u32 %v99, 4294901760
  %v3186 = vsub.f32 %v99, %v3185
  %v3187 = vand.u32 %v3186, 4294901760
  %3188 = vmatpush1.msra.mxu0 %v3187
  %3189 = vmatprep.subr.mxu0 0.0
  %v3190 = vand.u32 %v98, 4294901760
  %v3191 = vsub.f32 %v98, %v3190
  %v3192 = vand.u32 %v3191, 4294901760
  %3193 = vmatpush1.msra.mxu0 %v3192
  %3194 = vmatprep.subr.mxu0 0.0
  %v3195 = vand.u32 %v97, 4294901760
  %v3196 = vsub.f32 %v97, %v3195
  %v3197 = vand.u32 %v3196, 4294901760
  %3198 = vmatpush1.msra.mxu0 %v3197
  %3199 = vmatprep.subr.mxu0 0.0
  %v3200 = vand.u32 %v96, 4294901760
  %v3201 = vsub.f32 %v96, %v3200
  %v3202 = vand.u32 %v3201, 4294901760
  %3203 = vmatpush1.msra.mxu0 %v3202
  %3204 = vmatprep.subr.mxu0 0.0
  %v3205 = vand.u32 %v95, 4294901760
  %v3206 = vsub.f32 %v95, %v3205
  %v3207 = vand.u32 %v3206, 4294901760
  %3208 = vmatpush1.msra.mxu0 %v3207
  %3209 = vmatprep.subr.mxu0 0.0
  %v3210 = vand.u32 %v94, 4294901760
  %v3211 = vsub.f32 %v94, %v3210
  %v3212 = vand.u32 %v3211, 4294901760
  %3213 = vmatpush1.msra.mxu0 %v3212
  %3214 = vmatprep.subr.mxu0 0.0
  %3215 = vmatpush2.msra.mxu0 0.0
  %3216 = vmatprep.subr.mxu0 0.0
  %3217 = vmatpush2.msra.mxu0 0.0
  %3218 = vmatprep.subr.mxu0 0.0
  %3219 = vmatpush2.msra.mxu0 0.0
  %3220 = vmatprep.subr.mxu0 0.0
  %3221 = vmatpush2.msra.mxu0 0.0
  %3222 = vmatprep.subr.mxu0 0.0
  %3223 = vmatpush2.msra.mxu0 0.0
  %3224 = vmatprep.subr.mxu0 0.0
  %3225 = vmatpush2.msra.mxu0 0.0
  %3226 = vmatprep.subr.mxu0 0.0
  %3227 = vmatpush2.msra.mxu0 0.0
  %3228 = vmatprep.subr.mxu0 0.0
  %3229 = vmatpush2.msra.mxu0 0.0
  %3230 = vmatprep.subr.mxu0 0.0
  %3231 = vmatpush2.msra.mxu0 0.0
  %3232 = vmatprep.subr.mxu0 0.0
  %3233 = vmatpush2.msra.mxu0 0.0
  %3234 = vmatprep.subr.mxu0 0.0
  %3235 = vmatpush2.msra.mxu0 0.0
  %3236 = vmatprep.subr.mxu0 0.0
  %3237 = vmatpush2.msra.mxu0 0.0
  %3238 = vmatprep.subr.mxu0 0.0
  %3239 = vmatpush2.msra.mxu0 0.0
  %3240 = vmatprep.subr.mxu0 0.0
  %3241 = vmatpush2.msra.mxu0 0.0
  %3242 = vmatprep.subr.mxu0 0.0
  %3243 = vmatpush2.msra.mxu0 0.0
  %3244 = vmatprep.subr.mxu0 0.0
  %3245 = vmatpush2.msra.mxu0 0.0
  %3246 = vmatprep.mubr.f32.mxu0 0.0
  %v3247 = vand.u32 %v2694, 4294901760
  %3248 = vmatmul.mubr.f32.gmra.mxu0 %v3247
  %v3249 = vpop.f32.mrf.mxu0
  %v3250 = vadd.f32 %v3131, %v3249
  %v3251 = vpop.f32.mrf.mxu0
  %3252 = vdwg.mxu0
  %3253 = vmatprep.subr.mxu0 0.0
  %v3254 = vand.u32 %v109, 4294901760
  %3255 = vmatpush1.msra.mxu0 %v3254
  %3256 = vmatprep.subr.mxu0 0.0
  %v3257 = vand.u32 %v108, 4294901760
  %3258 = vmatpush1.msra.mxu0 %v3257
  %3259 = vmatprep.subr.mxu0 0.0
  %v3260 = vand.u32 %v107, 4294901760
  %3261 = vmatpush1.msra.mxu0 %v3260
  %3262 = vmatprep.subr.mxu0 0.0
  %v3263 = vand.u32 %v106, 4294901760
  %3264 = vmatpush1.msra.mxu0 %v3263
  %3265 = vmatprep.subr.mxu0 0.0
  %v3266 = vand.u32 %v105, 4294901760
  %3267 = vmatpush1.msra.mxu0 %v3266
  %3268 = vmatprep.subr.mxu0 0.0
  %v3269 = vand.u32 %v104, 4294901760
  %3270 = vmatpush1.msra.mxu0 %v3269
  %3271 = vmatprep.subr.mxu0 0.0
  %v3272 = vand.u32 %v103, 4294901760
  %3273 = vmatpush1.msra.mxu0 %v3272
  %3274 = vmatprep.subr.mxu0 0.0
  %v3275 = vand.u32 %v102, 4294901760
  %3276 = vmatpush1.msra.mxu0 %v3275
  %3277 = vmatprep.subr.mxu0 0.0
  %v3278 = vand.u32 %v101, 4294901760
  %3279 = vmatpush1.msra.mxu0 %v3278
  %3280 = vmatprep.subr.mxu0 0.0
  %v3281 = vand.u32 %v100, 4294901760
  %3282 = vmatpush1.msra.mxu0 %v3281
  %3283 = vmatprep.subr.mxu0 0.0
  %v3284 = vand.u32 %v99, 4294901760
  %3285 = vmatpush1.msra.mxu0 %v3284
  %3286 = vmatprep.subr.mxu0 0.0
  %v3287 = vand.u32 %v98, 4294901760
  %3288 = vmatpush1.msra.mxu0 %v3287
  %3289 = vmatprep.subr.mxu0 0.0
  %v3290 = vand.u32 %v97, 4294901760
  %3291 = vmatpush1.msra.mxu0 %v3290
  %3292 = vmatprep.subr.mxu0 0.0
  %v3293 = vand.u32 %v96, 4294901760
  %3294 = vmatpush1.msra.mxu0 %v3293
  %3295 = vmatprep.subr.mxu0 0.0
  %v3296 = vand.u32 %v95, 4294901760
  %3297 = vmatpush1.msra.mxu0 %v3296
  %3298 = vmatprep.subr.mxu0 0.0
  %v3299 = vand.u32 %v94, 4294901760
  %3300 = vmatpush1.msra.mxu0 %v3299
  %3301 = vmatprep.subr.mxu0 0.0
  %3302 = vmatpush2.msra.mxu0 0.0
  %3303 = vmatprep.subr.mxu0 0.0
  %3304 = vmatpush2.msra.mxu0 0.0
  %3305 = vmatprep.subr.mxu0 0.0
  %3306 = vmatpush2.msra.mxu0 0.0
  %3307 = vmatprep.subr.mxu0 0.0
  %3308 = vmatpush2.msra.mxu0 0.0
  %3309 = vmatprep.subr.mxu0 0.0
  %3310 = vmatpush2.msra.mxu0 0.0
  %3311 = vmatprep.subr.mxu0 0.0
  %3312 = vmatpush2.msra.mxu0 0.0
  %3313 = vmatprep.subr.mxu0 0.0
  %3314 = vmatpush2.msra.mxu0 0.0
  %3315 = vmatprep.subr.mxu0 0.0
  %3316 = vmatpush2.msra.mxu0 0.0
  %3317 = vmatprep.subr.mxu0 0.0
  %3318 = vmatpush2.msra.mxu0 0.0
  %3319 = vmatprep.subr.mxu0 0.0
  %3320 = vmatpush2.msra.mxu0 0.0
  %3321 = vmatprep.subr.mxu0 0.0
  %3322 = vmatpush2.msra.mxu0 0.0
  %3323 = vmatprep.subr.mxu0 0.0
  %3324 = vmatpush2.msra.mxu0 0.0
  %3325 = vmatprep.subr.mxu0 0.0
  %3326 = vmatpush2.msra.mxu0 0.0
  %3327 = vmatprep.subr.mxu0 0.0
  %3328 = vmatpush2.msra.mxu0 0.0
  %3329 = vmatprep.subr.mxu0 0.0
  %3330 = vmatpush2.msra.mxu0 0.0
  %3331 = vmatprep.subr.mxu0 0.0
  %3332 = vmatpush2.msra.mxu0 0.0
  %3333 = vmatprep.mubr.f32.mxu0 0.0
  %v3334 = vand.u32 %v2694, 4294901760
  %3335 = vmatmul.mubr.f32.gmra.mxu0 %v3334
  %v3336 = vpop.f32.mrf.mxu0
  %v3337 = vadd.f32 %v3250, %v3336
  %v3338 = vpop.f32.mrf.mxu0
  %3339 = vdwg.mxu0
  %v3340 = vadd.f32 %v2698, %v3337
  %v3341 = vtanh.pop %v3340
  %s3342 = scalar_lea.vmem %s3, 32
  %3343 = vst [vmem:[%s3342] sm:$0xff] %v3341
  %s3344 = scalar_lea.vmem %s0, 40
  %v3345 = vld [vmem:[%s3344] sm:$0xff]
  %3346 = vmatprep.subr.mxu0 0.0
  %v3347 = vand.u32 %v109, 4294901760
  %3348 = vmatpush1.msra.mxu0 %v3347
  %3349 = vmatprep.subr.mxu0 0.0
  %v3350 = vand.u32 %v108, 4294901760
  %3351 = vmatpush1.msra.mxu0 %v3350
  %3352 = vmatprep.subr.mxu0 0.0
  %v3353 = vand.u32 %v107, 4294901760
  %3354 = vmatpush1.msra.mxu0 %v3353
  %3355 = vmatprep.subr.mxu0 0.0
  %v3356 = vand.u32 %v106, 4294901760
  %3357 = vmatpush1.msra.mxu0 %v3356
  %3358 = vmatprep.subr.mxu0 0.0
  %v3359 = vand.u32 %v105, 4294901760
  %3360 = vmatpush1.msra.mxu0 %v3359
  %3361 = vmatprep.subr.mxu0 0.0
  %v3362 = vand.u32 %v104, 4294901760
  %3363 = vmatpush1.msra.mxu0 %v3362
  %3364 = vmatprep.subr.mxu0 0.0
  %v3365 = vand.u32 %v103, 4294901760
  %3366 = vmatpush1.msra.mxu0 %v3365
  %3367 = vmatprep.subr.mxu0 0.0
  %v3368 = vand.u32 %v102, 4294901760
  %3369 = vmatpush1.msra.mxu0 %v3368
  %3370 = vmatprep.subr.mxu0 0.0
  %v3371 = vand.u32 %v101, 4294901760
  %3372 = vmatpush1.msra.mxu0 %v3371
  %3373 = vmatprep.subr.mxu0 0.0
  %v3374 = vand.u32 %v100, 4294901760
  %3375 = vmatpush1.msra.mxu0 %v3374
  %3376 = vmatprep.subr.mxu0 0.0
  %v3377 = vand.u32 %v99, 4294901760
  %3378 = vmatpush1.msra.mxu0 %v3377
  %3379 = vmatprep.subr.mxu0 0.0
  %v3380 = vand.u32 %v98, 4294901760
  %3381 = vmatpush1.msra.mxu0 %v3380
  %3382 = vmatprep.subr.mxu0 0.0
  %v3383 = vand.u32 %v97, 4294901760
  %3384 = vmatpush1.msra.mxu0 %v3383
  %3385 = vmatprep.subr.mxu0 0.0
  %v3386 = vand.u32 %v96, 4294901760
  %3387 = vmatpush1.msra.mxu0 %v3386
  %3388 = vmatprep.subr.mxu0 0.0
  %v3389 = vand.u32 %v95, 4294901760
  %3390 = vmatpush1.msra.mxu0 %v3389
  %3391 = vmatprep.subr.mxu0 0.0
  %v3392 = vand.u32 %v94, 4294901760
  %3393 = vmatpush1.msra.mxu0 %v3392
  %3394 = vmatprep.subr.mxu0 0.0
  %3395 = vmatpush2.msra.mxu0 0.0
  %3396 = vmatprep.subr.mxu0 0.0
  %3397 = vmatpush2.msra.mxu0 0.0
  %3398 = vmatprep.subr.mxu0 0.0
  %3399 = vmatpush2.msra.mxu0 0.0
  %3400 = vmatprep.subr.mxu0 0.0
  %3401 = vmatpush2.msra.mxu0 0.0
  %3402 = vmatprep.subr.mxu0 0.0
  %3403 = vmatpush2.msra.mxu0 0.0
  %3404 = vmatprep.subr.mxu0 0.0
  %3405 = vmatpush2.msra.mxu0 0.0
  %3406 = vmatprep.subr.mxu0 0.0
  %3407 = vmatpush2.msra.mxu0 0.0
  %3408 = vmatprep.subr.mxu0 0.0
  %3409 = vmatpush2.msra.mxu0 0.0
  %3410 = vmatprep.subr.mxu0 0.0
  %3411 = vmatpush2.msra.mxu0 0.0
  %3412 = vmatprep.subr.mxu0 0.0
  %3413 = vmatpush2.msra.mxu0 0.0
  %3414 = vmatprep.subr.mxu0 0.0
  %3415 = vmatpush2.msra.mxu0 0.0
  %3416 = vmatprep.subr.mxu0 0.0
  %3417 = vmatpush2.msra.mxu0 0.0
  %3418 = vmatprep.subr.mxu0 0.0
  %3419 = vmatpush2.msra.mxu0 0.0
  %3420 = vmatprep.subr.mxu0 0.0
  %3421 = vmatpush2.msra.mxu0 0.0
  %3422 = vmatprep.subr.mxu0 0.0
  %3423 = vmatpush2.msra.mxu0 0.0
  %3424 = vmatprep.subr.mxu0 0.0
  %3425 = vmatpush2.msra.mxu0 0.0
  %3426 = vmatprep.mubr.f32.mxu0 0.0
  %v3427 = vand.u32 %v3341, 4294901760
  %v3428 = vsub.f32 %v3341, %v3427
  %v3429 = vand.u32 %v3428, 4294901760
  %v3430 = vsub.f32 %v3428, %v3429
  %v3431 = vand.u32 %v3430, 4294901760
  %3432 = vmatmul.mubr.f32.gmra.mxu0 %v3431
  %v3433 = vpop.f32.mrf.mxu0
  %v3434 = vadd.f32 0.0, %v3433
  %v3435 = vpop.f32.mrf.mxu0
  %3436 = vdwg.mxu0
  %3437 = vmatprep.subr.mxu0 0.0
  %v3438 = vand.u32 %v109, 4294901760
  %v3439 = vsub.f32 %v109, %v3438
  %v3440 = vand.u32 %v3439, 4294901760
  %v3441 = vsub.f32 %v3439, %v3440
  %v3442 = vand.u32 %v3441, 4294901760
  %3443 = vmatpush1.msra.mxu0 %v3442
  %3444 = vmatprep.subr.mxu0 0.0
  %v3445 = vand.u32 %v108, 4294901760
  %v3446 = vsub.f32 %v108, %v3445
  %v3447 = vand.u32 %v3446, 4294901760
  %v3448 = vsub.f32 %v3446, %v3447
  %v3449 = vand.u32 %v3448, 4294901760
  %3450 = vmatpush1.msra.mxu0 %v3449
  %3451 = vmatprep.subr.mxu0 0.0
  %v3452 = vand.u32 %v107, 4294901760
  %v3453 = vsub.f32 %v107, %v3452
  %v3454 = vand.u32 %v3453, 4294901760
  %v3455 = vsub.f32 %v3453, %v3454
  %v3456 = vand.u32 %v3455, 4294901760
  %3457 = vmatpush1.msra.mxu0 %v3456
  %3458 = vmatprep.subr.mxu0 0.0
  %v3459 = vand.u32 %v106, 4294901760
  %v3460 = vsub.f32 %v106, %v3459
  %v3461 = vand.u32 %v3460, 4294901760
  %v3462 = vsub.f32 %v3460, %v3461
  %v3463 = vand.u32 %v3462, 4294901760
  %3464 = vmatpush1.msra.mxu0 %v3463
  %3465 = vmatprep.subr.mxu0 0.0
  %v3466 = vand.u32 %v105, 4294901760
  %v3467 = vsub.f32 %v105, %v3466
  %v3468 = vand.u32 %v3467, 4294901760
  %v3469 = vsub.f32 %v3467, %v3468
  %v3470 = vand.u32 %v3469, 4294901760
  %3471 = vmatpush1.msra.mxu0 %v3470
  %3472 = vmatprep.subr.mxu0 0.0
  %v3473 = vand.u32 %v104, 4294901760
  %v3474 = vsub.f32 %v104, %v3473
  %v3475 = vand.u32 %v3474, 4294901760
  %v3476 = vsub.f32 %v3474, %v3475
  %v3477 = vand.u32 %v3476, 4294901760
  %3478 = vmatpush1.msra.mxu0 %v3477
  %3479 = vmatprep.subr.mxu0 0.0
  %v3480 = vand.u32 %v103, 4294901760
  %v3481 = vsub.f32 %v103, %v3480
  %v3482 = vand.u32 %v3481, 4294901760
  %v3483 = vsub.f32 %v3481, %v3482
  %v3484 = vand.u32 %v3483, 4294901760
  %3485 = vmatpush1.msra.mxu0 %v3484
  %3486 = vmatprep.subr.mxu0 0.0
  %v3487 = vand.u32 %v102, 4294901760
  %v3488 = vsub.f32 %v102, %v3487
  %v3489 = vand.u32 %v3488, 4294901760
  %v3490 = vsub.f32 %v3488, %v3489
  %v3491 = vand.u32 %v3490, 4294901760
  %3492 = vmatpush1.msra.mxu0 %v3491
  %3493 = vmatprep.subr.mxu0 0.0
  %v3494 = vand.u32 %v101, 4294901760
  %v3495 = vsub.f32 %v101, %v3494
  %v3496 = vand.u32 %v3495, 4294901760
  %v3497 = vsub.f32 %v3495, %v3496
  %v3498 = vand.u32 %v3497, 4294901760
  %3499 = vmatpush1.msra.mxu0 %v3498
  %3500 = vmatprep.subr.mxu0 0.0
  %v3501 = vand.u32 %v100, 4294901760
  %v3502 = vsub.f32 %v100, %v3501
  %v3503 = vand.u32 %v3502, 4294901760
  %v3504 = vsub.f32 %v3502, %v3503
  %v3505 = vand.u32 %v3504, 4294901760
  %3506 = vmatpush1.msra.mxu0 %v3505
  %3507 = vmatprep.subr.mxu0 0.0
  %v3508 = vand.u32 %v99, 4294901760
  %v3509 = vsub.f32 %v99, %v3508
  %v3510 = vand.u32 %v3509, 4294901760
  %v3511 = vsub.f32 %v3509, %v3510
  %v3512 = vand.u32 %v3511, 4294901760
  %3513 = vmatpush1.msra.mxu0 %v3512
  %3514 = vmatprep.subr.mxu0 0.0
  %v3515 = vand.u32 %v98, 4294901760
  %v3516 = vsub.f32 %v98, %v3515
  %v3517 = vand.u32 %v3516, 4294901760
  %v3518 = vsub.f32 %v3516, %v3517
  %v3519 = vand.u32 %v3518, 4294901760
  %3520 = vmatpush1.msra.mxu0 %v3519
  %3521 = vmatprep.subr.mxu0 0.0
  %v3522 = vand.u32 %v97, 4294901760
  %v3523 = vsub.f32 %v97, %v3522
  %v3524 = vand.u32 %v3523, 4294901760
  %v3525 = vsub.f32 %v3523, %v3524
  %v3526 = vand.u32 %v3525, 4294901760
  %3527 = vmatpush1.msra.mxu0 %v3526
  %3528 = vmatprep.subr.mxu0 0.0
  %v3529 = vand.u32 %v96, 4294901760
  %v3530 = vsub.f32 %v96, %v3529
  %v3531 = vand.u32 %v3530, 4294901760
  %v3532 = vsub.f32 %v3530, %v3531
  %v3533 = vand.u32 %v3532, 4294901760
  %3534 = vmatpush1.msra.mxu0 %v3533
  %3535 = vmatprep.subr.mxu0 0.0
  %v3536 = vand.u32 %v95, 4294901760
  %v3537 = vsub.f32 %v95, %v3536
  %v3538 = vand.u32 %v3537, 4294901760
  %v3539 = vsub.f32 %v3537, %v3538
  %v3540 = vand.u32 %v3539, 4294901760
  %3541 = vmatpush1.msra.mxu0 %v3540
  %3542 = vmatprep.subr.mxu0 0.0
  %v3543 = vand.u32 %v94, 4294901760
  %v3544 = vsub.f32 %v94, %v3543
  %v3545 = vand.u32 %v3544, 4294901760
  %v3546 = vsub.f32 %v3544, %v3545
  %v3547 = vand.u32 %v3546, 4294901760
  %3548 = vmatpush1.msra.mxu0 %v3547
  %3549 = vmatprep.subr.mxu0 0.0
  %3550 = vmatpush2.msra.mxu0 0.0
  %3551 = vmatprep.subr.mxu0 0.0
  %3552 = vmatpush2.msra.mxu0 0.0
  %3553 = vmatprep.subr.mxu0 0.0
  %3554 = vmatpush2.msra.mxu0 0.0
  %3555 = vmatprep.subr.mxu0 0.0
  %3556 = vmatpush2.msra.mxu0 0.0
  %3557 = vmatprep.subr.mxu0 0.0
  %3558 = vmatpush2.msra.mxu0 0.0
  %3559 = vmatprep.subr.mxu0 0.0
  %3560 = vmatpush2.msra.mxu0 0.0
  %3561 = vmatprep.subr.mxu0 0.0
  %3562 = vmatpush2.msra.mxu0 0.0
  %3563 = vmatprep.subr.mxu0 0.0
  %3564 = vmatpush2.msra.mxu0 0.0
  %3565 = vmatprep.subr.mxu0 0.0
  %3566 = vmatpush2.msra.mxu0 0.0
  %3567 = vmatprep.subr.mxu0 0.0
  %3568 = vmatpush2.msra.mxu0 0.0
  %3569 = vmatprep.subr.mxu0 0.0
  %3570 = vmatpush2.msra.mxu0 0.0
  %3571 = vmatprep.subr.mxu0 0.0
  %3572 = vmatpush2.msra.mxu0 0.0
  %3573 = vmatprep.subr.mxu0 0.0
  %3574 = vmatpush2.msra.mxu0 0.0
  %3575 = vmatprep.subr.mxu0 0.0
  %3576 = vmatpush2.msra.mxu0 0.0
  %3577 = vmatprep.subr.mxu0 0.0
  %3578 = vmatpush2.msra.mxu0 0.0
  %3579 = vmatprep.subr.mxu0 0.0
  %3580 = vmatpush2.msra.mxu0 0.0
  %3581 = vmatprep.mubr.f32.mxu0 0.0
  %v3582 = vand.u32 %v3341, 4294901760
  %3583 = vmatmul.mubr.f32.gmra.mxu0 %v3582
  %v3584 = vpop.f32.mrf.mxu0
  %v3585 = vadd.f32 %v3434, %v3584
  %v3586 = vpop.f32.mrf.mxu0
  %3587 = vdwg.mxu0
  %3588 = vmatprep.subr.mxu0 0.0
  %v3589 = vand.u32 %v109, 4294901760
  %v3590 = vsub.f32 %v109, %v3589
  %3591 = vmatpush1.msra.mxu0 %v3590
  %3592 = vmatprep.subr.mxu0 0.0
  %v3593 = vand.u32 %v108, 4294901760
  %v3594 = vsub.f32 %v108, %v3593
  %3595 = vmatpush1.msra.mxu0 %v3594
  %3596 = vmatprep.subr.mxu0 0.0
  %v3597 = vand.u32 %v107, 4294901760
  %v3598 = vsub.f32 %v107, %v3597
  %3599 = vmatpush1.msra.mxu0 %v3598
  %3600 = vmatprep.subr.mxu0 0.0
  %v3601 = vand.u32 %v106, 4294901760
  %v3602 = vsub.f32 %v106, %v3601
  %3603 = vmatpush1.msra.mxu0 %v3602
  %3604 = vmatprep.subr.mxu0 0.0
  %v3605 = vand.u32 %v105, 4294901760
  %v3606 = vsub.f32 %v105, %v3605
  %3607 = vmatpush1.msra.mxu0 %v3606
  %3608 = vmatprep.subr.mxu0 0.0
  %v3609 = vand.u32 %v104, 4294901760
  %v3610 = vsub.f32 %v104, %v3609
  %3611 = vmatpush1.msra.mxu0 %v3610
  %3612 = vmatprep.subr.mxu0 0.0
  %v3613 = vand.u32 %v103, 4294901760
  %v3614 = vsub.f32 %v103, %v3613
  %3615 = vmatpush1.msra.mxu0 %v3614
  %3616 = vmatprep.subr.mxu0 0.0
  %v3617 = vand.u32 %v102, 4294901760
  %v3618 = vsub.f32 %v102, %v3617
  %3619 = vmatpush1.msra.mxu0 %v3618
  %3620 = vmatprep.subr.mxu0 0.0
  %v3621 = vand.u32 %v101, 4294901760
  %v3622 = vsub.f32 %v101, %v3621
  %3623 = vmatpush1.msra.mxu0 %v3622
  %3624 = vmatprep.subr.mxu0 0.0
  %v3625 = vand.u32 %v100, 4294901760
  %v3626 = vsub.f32 %v100, %v3625
  %3627 = vmatpush1.msra.mxu0 %v3626
  %3628 = vmatprep.subr.mxu0 0.0
  %v3629 = vand.u32 %v99, 4294901760
  %v3630 = vsub.f32 %v99, %v3629
  %3631 = vmatpush1.msra.mxu0 %v3630
  %3632 = vmatprep.subr.mxu0 0.0
  %v3633 = vand.u32 %v98, 4294901760
  %v3634 = vsub.f32 %v98, %v3633
  %3635 = vmatpush1.msra.mxu0 %v3634
  %3636 = vmatprep.subr.mxu0 0.0
  %v3637 = vand.u32 %v97, 4294901760
  %v3638 = vsub.f32 %v97, %v3637
  %3639 = vmatpush1.msra.mxu0 %v3638
  %3640 = vmatprep.subr.mxu0 0.0
  %v3641 = vand.u32 %v96, 4294901760
  %v3642 = vsub.f32 %v96, %v3641
  %3643 = vmatpush1.msra.mxu0 %v3642
  %3644 = vmatprep.subr.mxu0 0.0
  %v3645 = vand.u32 %v95, 4294901760
  %v3646 = vsub.f32 %v95, %v3645
  %3647 = vmatpush1.msra.mxu0 %v3646
  %3648 = vmatprep.subr.mxu0 0.0
  %v3649 = vand.u32 %v94, 4294901760
  %v3650 = vsub.f32 %v94, %v3649
  %3651 = vmatpush1.msra.mxu0 %v3650
  %3652 = vmatprep.subr.mxu0 0.0
  %3653 = vmatpush2.msra.mxu0 0.0
  %3654 = vmatprep.subr.mxu0 0.0
  %3655 = vmatpush2.msra.mxu0 0.0
  %3656 = vmatprep.subr.mxu0 0.0
  %3657 = vmatpush2.msra.mxu0 0.0
  %3658 = vmatprep.subr.mxu0 0.0
  %3659 = vmatpush2.msra.mxu0 0.0
  %3660 = vmatprep.subr.mxu0 0.0
  %3661 = vmatpush2.msra.mxu0 0.0
  %3662 = vmatprep.subr.mxu0 0.0
  %3663 = vmatpush2.msra.mxu0 0.0
  %3664 = vmatprep.subr.mxu0 0.0
  %3665 = vmatpush2.msra.mxu0 0.0
  %3666 = vmatprep.subr.mxu0 0.0
  %3667 = vmatpush2.msra.mxu0 0.0
  %3668 = vmatprep.subr.mxu0 0.0
  %3669 = vmatpush2.msra.mxu0 0.0
  %3670 = vmatprep.subr.mxu0 0.0
  %3671 = vmatpush2.msra.mxu0 0.0
  %3672 = vmatprep.subr.mxu0 0.0
  %3673 = vmatpush2.msra.mxu0 0.0
  %3674 = vmatprep.subr.mxu0 0.0
  %3675 = vmatpush2.msra.mxu0 0.0
  %3676 = vmatprep.subr.mxu0 0.0
  %3677 = vmatpush2.msra.mxu0 0.0
  %3678 = vmatprep.subr.mxu0 0.0
  %3679 = vmatpush2.msra.mxu0 0.0
  %3680 = vmatprep.subr.mxu0 0.0
  %3681 = vmatpush2.msra.mxu0 0.0
  %3682 = vmatprep.subr.mxu0 0.0
  %3683 = vmatpush2.msra.mxu0 0.0
  %3684 = vmatprep.mubr.f32.mxu0 0.0
  %v3685 = vand.u32 %v3341, 4294901760
  %v3686 = vsub.f32 %v3341, %v3685
  %3687 = vmatmul.mubr.f32.gmra.mxu0 %v3686
  %v3688 = vpop.f32.mrf.mxu0
  %v3689 = vadd.f32 %v3585, %v3688
  %v3690 = vpop.f32.mrf.mxu0
  %3691 = vdwg.mxu0
  %3692 = vmatprep.subr.mxu0 0.0
  %v3693 = vand.u32 %v109, 4294901760
  %3694 = vmatpush1.msra.mxu0 %v3693
  %3695 = vmatprep.subr.mxu0 0.0
  %v3696 = vand.u32 %v108, 4294901760
  %3697 = vmatpush1.msra.mxu0 %v3696
  %3698 = vmatprep.subr.mxu0 0.0
  %v3699 = vand.u32 %v107, 4294901760
  %3700 = vmatpush1.msra.mxu0 %v3699
  %3701 = vmatprep.subr.mxu0 0.0
  %v3702 = vand.u32 %v106, 4294901760
  %3703 = vmatpush1.msra.mxu0 %v3702
  %3704 = vmatprep.subr.mxu0 0.0
  %v3705 = vand.u32 %v105, 4294901760
  %3706 = vmatpush1.msra.mxu0 %v3705
  %3707 = vmatprep.subr.mxu0 0.0
  %v3708 = vand.u32 %v104, 4294901760
  %3709 = vmatpush1.msra.mxu0 %v3708
  %3710 = vmatprep.subr.mxu0 0.0
  %v3711 = vand.u32 %v103, 4294901760
  %3712 = vmatpush1.msra.mxu0 %v3711
  %3713 = vmatprep.subr.mxu0 0.0
  %v3714 = vand.u32 %v102, 4294901760
  %3715 = vmatpush1.msra.mxu0 %v3714
  %3716 = vmatprep.subr.mxu0 0.0
  %v3717 = vand.u32 %v101, 4294901760
  %3718 = vmatpush1.msra.mxu0 %v3717
  %3719 = vmatprep.subr.mxu0 0.0
  %v3720 = vand.u32 %v100, 4294901760
  %3721 = vmatpush1.msra.mxu0 %v3720
  %3722 = vmatprep.subr.mxu0 0.0
  %v3723 = vand.u32 %v99, 4294901760
  %3724 = vmatpush1.msra.mxu0 %v3723
  %3725 = vmatprep.subr.mxu0 0.0
  %v3726 = vand.u32 %v98, 4294901760
  %3727 = vmatpush1.msra.mxu0 %v3726
  %3728 = vmatprep.subr.mxu0 0.0
  %v3729 = vand.u32 %v97, 4294901760
  %3730 = vmatpush1.msra.mxu0 %v3729
  %3731 = vmatprep.subr.mxu0 0.0
  %v3732 = vand.u32 %v96, 4294901760
  %3733 = vmatpush1.msra.mxu0 %v3732
  %3734 = vmatprep.subr.mxu0 0.0
  %v3735 = vand.u32 %v95, 4294901760
  %3736 = vmatpush1.msra.mxu0 %v3735
  %3737 = vmatprep.subr.mxu0 0.0
  %v3738 = vand.u32 %v94, 4294901760
  %3739 = vmatpush1.msra.mxu0 %v3738
  %3740 = vmatprep.subr.mxu0 0.0
  %3741 = vmatpush2.msra.mxu0 0.0
  %3742 = vmatprep.subr.mxu0 0.0
  %3743 = vmatpush2.msra.mxu0 0.0
  %3744 = vmatprep.subr.mxu0 0.0
  %3745 = vmatpush2.msra.mxu0 0.0
  %3746 = vmatprep.subr.mxu0 0.0
  %3747 = vmatpush2.msra.mxu0 0.0
  %3748 = vmatprep.subr.mxu0 0.0
  %3749 = vmatpush2.msra.mxu0 0.0
  %3750 = vmatprep.subr.mxu0 0.0
  %3751 = vmatpush2.msra.mxu0 0.0
  %3752 = vmatprep.subr.mxu0 0.0
  %3753 = vmatpush2.msra.mxu0 0.0
  %3754 = vmatprep.subr.mxu0 0.0
  %3755 = vmatpush2.msra.mxu0 0.0
  %3756 = vmatprep.subr.mxu0 0.0
  %3757 = vmatpush2.msra.mxu0 0.0
  %3758 = vmatprep.subr.mxu0 0.0
  %3759 = vmatpush2.msra.mxu0 0.0
  %3760 = vmatprep.subr.mxu0 0.0
  %3761 = vmatpush2.msra.mxu0 0.0
  %3762 = vmatprep.subr.mxu0 0.0
  %3763 = vmatpush2.msra.mxu0 0.0
  %3764 = vmatprep.subr.mxu0 0.0
  %3765 = vmatpush2.msra.mxu0 0.0
  %3766 = vmatprep.subr.mxu0 0.0
  %3767 = vmatpush2.msra.mxu0 0.0
  %3768 = vmatprep.subr.mxu0 0.0
  %3769 = vmatpush2.msra.mxu0 0.0
  %3770 = vmatprep.subr.mxu0 0.0
  %3771 = vmatpush2.msra.mxu0 0.0
  %3772 = vmatprep.mubr.f32.mxu0 0.0
  %v3773 = vand.u32 %v3341, 4294901760
  %v3774 = vsub.f32 %v3341, %v3773
  %v3775 = vand.u32 %v3774, 4294901760
  %3776 = vmatmul.mubr.f32.gmra.mxu0 %v3775
  %v3777 = vpop.f32.mrf.mxu0
  %v3778 = vadd.f32 %v3689, %v3777
  %v3779 = vpop.f32.mrf.mxu0
  %3780 = vdwg.mxu0
  %3781 = vmatprep.subr.mxu0 0.0
  %v3782 = vand.u32 %v109, 4294901760
  %v3783 = vsub.f32 %v109, %v3782
  %v3784 = vand.u32 %v3783, 4294901760
  %3785 = vmatpush1.msra.mxu0 %v3784
  %3786 = vmatprep.subr.mxu0 0.0
  %v3787 = vand.u32 %v108, 4294901760
  %v3788 = vsub.f32 %v108, %v3787
  %v3789 = vand.u32 %v3788, 4294901760
  %3790 = vmatpush1.msra.mxu0 %v3789
  %3791 = vmatprep.subr.mxu0 0.0
  %v3792 = vand.u32 %v107, 4294901760
  %v3793 = vsub.f32 %v107, %v3792
  %v3794 = vand.u32 %v3793, 4294901760
  %3795 = vmatpush1.msra.mxu0 %v3794
  %3796 = vmatprep.subr.mxu0 0.0
  %v3797 = vand.u32 %v106, 4294901760
  %v3798 = vsub.f32 %v106, %v3797
  %v3799 = vand.u32 %v3798, 4294901760
  %3800 = vmatpush1.msra.mxu0 %v3799
  %3801 = vmatprep.subr.mxu0 0.0
  %v3802 = vand.u32 %v105, 4294901760
  %v3803 = vsub.f32 %v105, %v3802
  %v3804 = vand.u32 %v3803, 4294901760
  %3805 = vmatpush1.msra.mxu0 %v3804
  %3806 = vmatprep.subr.mxu0 0.0
  %v3807 = vand.u32 %v104, 4294901760
  %v3808 = vsub.f32 %v104, %v3807
  %v3809 = vand.u32 %v3808, 4294901760
  %3810 = vmatpush1.msra.mxu0 %v3809
  %3811 = vmatprep.subr.mxu0 0.0
  %v3812 = vand.u32 %v103, 4294901760
  %v3813 = vsub.f32 %v103, %v3812
  %v3814 = vand.u32 %v3813, 4294901760
  %3815 = vmatpush1.msra.mxu0 %v3814
  %3816 = vmatprep.subr.mxu0 0.0
  %v3817 = vand.u32 %v102, 4294901760
  %v3818 = vsub.f32 %v102, %v3817
  %v3819 = vand.u32 %v3818, 4294901760
  %3820 = vmatpush1.msra.mxu0 %v3819
  %3821 = vmatprep.subr.mxu0 0.0
  %v3822 = vand.u32 %v101, 4294901760
  %v3823 = vsub.f32 %v101, %v3822
  %v3824 = vand.u32 %v3823, 4294901760
  %3825 = vmatpush1.msra.mxu0 %v3824
  %3826 = vmatprep.subr.mxu0 0.0
  %v3827 = vand.u32 %v100, 4294901760
  %v3828 = vsub.f32 %v100, %v3827
  %v3829 = vand.u32 %v3828, 4294901760
  %3830 = vmatpush1.msra.mxu0 %v3829
  %3831 = vmatprep.subr.mxu0 0.0
  %v3832 = vand.u32 %v99, 4294901760
  %v3833 = vsub.f32 %v99, %v3832
  %v3834 = vand.u32 %v3833, 4294901760
  %3835 = vmatpush1.msra.mxu0 %v3834
  %3836 = vmatprep.subr.mxu0 0.0
  %v3837 = vand.u32 %v98, 4294901760
  %v3838 = vsub.f32 %v98, %v3837
  %v3839 = vand.u32 %v3838, 4294901760
  %3840 = vmatpush1.msra.mxu0 %v3839
  %3841 = vmatprep.subr.mxu0 0.0
  %v3842 = vand.u32 %v97, 4294901760
  %v3843 = vsub.f32 %v97, %v3842
  %v3844 = vand.u32 %v3843, 4294901760
  %3845 = vmatpush1.msra.mxu0 %v3844
  %3846 = vmatprep.subr.mxu0 0.0
  %v3847 = vand.u32 %v96, 4294901760
  %v3848 = vsub.f32 %v96, %v3847
  %v3849 = vand.u32 %v3848, 4294901760
  %3850 = vmatpush1.msra.mxu0 %v3849
  %3851 = vmatprep.subr.mxu0 0.0
  %v3852 = vand.u32 %v95, 4294901760
  %v3853 = vsub.f32 %v95, %v3852
  %v3854 = vand.u32 %v3853, 4294901760
  %3855 = vmatpush1.msra.mxu0 %v3854
  %3856 = vmatprep.subr.mxu0 0.0
  %v3857 = vand.u32 %v94, 4294901760
  %v3858 = vsub.f32 %v94, %v3857
  %v3859 = vand.u32 %v3858, 4294901760
  %3860 = vmatpush1.msra.mxu0 %v3859
  %3861 = vmatprep.subr.mxu0 0.0
  %3862 = vmatpush2.msra.mxu0 0.0
  %3863 = vmatprep.subr.mxu0 0.0
  %3864 = vmatpush2.msra.mxu0 0.0
  %3865 = vmatprep.subr.mxu0 0.0
  %3866 = vmatpush2.msra.mxu0 0.0
  %3867 = vmatprep.subr.mxu0 0.0
  %3868 = vmatpush2.msra.mxu0 0.0
  %3869 = vmatprep.subr.mxu0 0.0
  %3870 = vmatpush2.msra.mxu0 0.0
  %3871 = vmatprep.subr.mxu0 0.0
  %3872 = vmatpush2.msra.mxu0 0.0
  %3873 = vmatprep.subr.mxu0 0.0
  %3874 = vmatpush2.msra.mxu0 0.0
  %3875 = vmatprep.subr.mxu0 0.0
  %3876 = vmatpush2.msra.mxu0 0.0
  %3877 = vmatprep.subr.mxu0 0.0
  %3878 = vmatpush2.msra.mxu0 0.0
  %3879 = vmatprep.subr.mxu0 0.0
  %3880 = vmatpush2.msra.mxu0 0.0
  %3881 = vmatprep.subr.mxu0 0.0
  %3882 = vmatpush2.msra.mxu0 0.0
  %3883 = vmatprep.subr.mxu0 0.0
  %3884 = vmatpush2.msra.mxu0 0.0
  %3885 = vmatprep.subr.mxu0 0.0
  %3886 = vmatpush2.msra.mxu0 0.0
  %3887 = vmatprep.subr.mxu0 0.0
  %3888 = vmatpush2.msra.mxu0 0.0
  %3889 = vmatprep.subr.mxu0 0.0
  %3890 = vmatpush2.msra.mxu0 0.0
  %3891 = vmatprep.subr.mxu0 0.0
  %3892 = vmatpush2.msra.mxu0 0.0
  %3893 = vmatprep.mubr.f32.mxu0 0.0
  %v3894 = vand.u32 %v3341, 4294901760
  %3895 = vmatmul.mubr.f32.gmra.mxu0 %v3894
  %v3896 = vpop.f32.mrf.mxu0
  %v3897 = vadd.f32 %v3778, %v3896
  %v3898 = vpop.f32.mrf.mxu0
  %3899 = vdwg.mxu0
  %3900 = vmatprep.subr.mxu0 0.0
  %v3901 = vand.u32 %v109, 4294901760
  %3902 = vmatpush1.msra.mxu0 %v3901
  %3903 = vmatprep.subr.mxu0 0.0
  %v3904 = vand.u32 %v108, 4294901760
  %3905 = vmatpush1.msra.mxu0 %v3904
  %3906 = vmatprep.subr.mxu0 0.0
  %v3907 = vand.u32 %v107, 4294901760
  %3908 = vmatpush1.msra.mxu0 %v3907
  %3909 = vmatprep.subr.mxu0 0.0
  %v3910 = vand.u32 %v106, 4294901760
  %3911 = vmatpush1.msra.mxu0 %v3910
  %3912 = vmatprep.subr.mxu0 0.0
  %v3913 = vand.u32 %v105, 4294901760
  %3914 = vmatpush1.msra.mxu0 %v3913
  %3915 = vmatprep.subr.mxu0 0.0
  %v3916 = vand.u32 %v104, 4294901760
  %3917 = vmatpush1.msra.mxu0 %v3916
  %3918 = vmatprep.subr.mxu0 0.0
  %v3919 = vand.u32 %v103, 4294901760
  %3920 = vmatpush1.msra.mxu0 %v3919
  %3921 = vmatprep.subr.mxu0 0.0
  %v3922 = vand.u32 %v102, 4294901760
  %3923 = vmatpush1.msra.mxu0 %v3922
  %3924 = vmatprep.subr.mxu0 0.0
  %v3925 = vand.u32 %v101, 4294901760
  %3926 = vmatpush1.msra.mxu0 %v3925
  %3927 = vmatprep.subr.mxu0 0.0
  %v3928 = vand.u32 %v100, 4294901760
  %3929 = vmatpush1.msra.mxu0 %v3928
  %3930 = vmatprep.subr.mxu0 0.0
  %v3931 = vand.u32 %v99, 4294901760
  %3932 = vmatpush1.msra.mxu0 %v3931
  %3933 = vmatprep.subr.mxu0 0.0
  %v3934 = vand.u32 %v98, 4294901760
  %3935 = vmatpush1.msra.mxu0 %v3934
  %3936 = vmatprep.subr.mxu0 0.0
  %v3937 = vand.u32 %v97, 4294901760
  %3938 = vmatpush1.msra.mxu0 %v3937
  %3939 = vmatprep.subr.mxu0 0.0
  %v3940 = vand.u32 %v96, 4294901760
  %3941 = vmatpush1.msra.mxu0 %v3940
  %3942 = vmatprep.subr.mxu0 0.0
  %v3943 = vand.u32 %v95, 4294901760
  %3944 = vmatpush1.msra.mxu0 %v3943
  %3945 = vmatprep.subr.mxu0 0.0
  %v3946 = vand.u32 %v94, 4294901760
  %3947 = vmatpush1.msra.mxu0 %v3946
  %3948 = vmatprep.subr.mxu0 0.0
  %3949 = vmatpush2.msra.mxu0 0.0
  %3950 = vmatprep.subr.mxu0 0.0
  %3951 = vmatpush2.msra.mxu0 0.0
  %3952 = vmatprep.subr.mxu0 0.0
  %3953 = vmatpush2.msra.mxu0 0.0
  %3954 = vmatprep.subr.mxu0 0.0
  %3955 = vmatpush2.msra.mxu0 0.0
  %3956 = vmatprep.subr.mxu0 0.0
  %3957 = vmatpush2.msra.mxu0 0.0
  %3958 = vmatprep.subr.mxu0 0.0
  %3959 = vmatpush2.msra.mxu0 0.0
  %3960 = vmatprep.subr.mxu0 0.0
  %3961 = vmatpush2.msra.mxu0 0.0
  %3962 = vmatprep.subr.mxu0 0.0
  %3963 = vmatpush2.msra.mxu0 0.0
  %3964 = vmatprep.subr.mxu0 0.0
  %3965 = vmatpush2.msra.mxu0 0.0
  %3966 = vmatprep.subr.mxu0 0.0
  %3967 = vmatpush2.msra.mxu0 0.0
  %3968 = vmatprep.subr.mxu0 0.0
  %3969 = vmatpush2.msra.mxu0 0.0
  %3970 = vmatprep.subr.mxu0 0.0
  %3971 = vmatpush2.msra.mxu0 0.0
  %3972 = vmatprep.subr.mxu0 0.0
  %3973 = vmatpush2.msra.mxu0 0.0
  %3974 = vmatprep.subr.mxu0 0.0
  %3975 = vmatpush2.msra.mxu0 0.0
  %3976 = vmatprep.subr.mxu0 0.0
  %3977 = vmatpush2.msra.mxu0 0.0
  %3978 = vmatprep.subr.mxu0 0.0
  %3979 = vmatpush2.msra.mxu0 0.0
  %3980 = vmatprep.mubr.f32.mxu0 0.0
  %v3981 = vand.u32 %v3341, 4294901760
  %3982 = vmatmul.mubr.f32.gmra.mxu0 %v3981
  %v3983 = vpop.f32.mrf.mxu0
  %v3984 = vadd.f32 %v3897, %v3983
  %v3985 = vpop.f32.mrf.mxu0
  %3986 = vdwg.mxu0
  %v3987 = vadd.f32 %v3345, %v3984
  %v3988 = vtanh.pop %v3987
  %s3989 = scalar_lea.vmem %s3, 40
  %3990 = vst [vmem:[%s3989] sm:$0xff] %v3988
  %s3991 = scalar_lea.vmem %s0, 48
  %v3992 = vld [vmem:[%s3991] sm:$0xff]
  %3993 = vmatprep.subr.mxu0 0.0
  %v3994 = vand.u32 %v109, 4294901760
  %3995 = vmatpush1.msra.mxu0 %v3994
  %3996 = vmatprep.subr.mxu0 0.0
  %v3997 = vand.u32 %v108, 4294901760
  %3998 = vmatpush1.msra.mxu0 %v3997
  %3999 = vmatprep.subr.mxu0 0.0
  %v4000 = vand.u32 %v107, 4294901760
  %4001 = vmatpush1.msra.mxu0 %v4000
  %4002 = vmatprep.subr.mxu0 0.0
  %v4003 = vand.u32 %v106, 4294901760
  %4004 = vmatpush1.msra.mxu0 %v4003
  %4005 = vmatprep.subr.mxu0 0.0
  %v4006 = vand.u32 %v105, 4294901760
  %4007 = vmatpush1.msra.mxu0 %v4006
  %4008 = vmatprep.subr.mxu0 0.0
  %v4009 = vand.u32 %v104, 4294901760
  %4010 = vmatpush1.msra.mxu0 %v4009
  %4011 = vmatprep.subr.mxu0 0.0
  %v4012 = vand.u32 %v103, 4294901760
  %4013 = vmatpush1.msra.mxu0 %v4012
  %4014 = vmatprep.subr.mxu0 0.0
  %v4015 = vand.u32 %v102, 4294901760
  %4016 = vmatpush1.msra.mxu0 %v4015
  %4017 = vmatprep.subr.mxu0 0.0
  %v4018 = vand.u32 %v101, 4294901760
  %4019 = vmatpush1.msra.mxu0 %v4018
  %4020 = vmatprep.subr.mxu0 0.0
  %v4021 = vand.u32 %v100, 4294901760
  %4022 = vmatpush1.msra.mxu0 %v4021
  %4023 = vmatprep.subr.mxu0 0.0
  %v4024 = vand.u32 %v99, 4294901760
  %4025 = vmatpush1.msra.mxu0 %v4024
  %4026 = vmatprep.subr.mxu0 0.0
  %v4027 = vand.u32 %v98, 4294901760
  %4028 = vmatpush1.msra.mxu0 %v4027
  %4029 = vmatprep.subr.mxu0 0.0
  %v4030 = vand.u32 %v97, 4294901760
  %4031 = vmatpush1.msra.mxu0 %v4030
  %4032 = vmatprep.subr.mxu0 0.0
  %v4033 = vand.u32 %v96, 4294901760
  %4034 = vmatpush1.msra.mxu0 %v4033
  %4035 = vmatprep.subr.mxu0 0.0
  %v4036 = vand.u32 %v95, 4294901760
  %4037 = vmatpush1.msra.mxu0 %v4036
  %4038 = vmatprep.subr.mxu0 0.0
  %v4039 = vand.u32 %v94, 4294901760
  %4040 = vmatpush1.msra.mxu0 %v4039
  %4041 = vmatprep.subr.mxu0 0.0
  %4042 = vmatpush2.msra.mxu0 0.0
  %4043 = vmatprep.subr.mxu0 0.0
  %4044 = vmatpush2.msra.mxu0 0.0
  %4045 = vmatprep.subr.mxu0 0.0
  %4046 = vmatpush2.msra.mxu0 0.0
  %4047 = vmatprep.subr.mxu0 0.0
  %4048 = vmatpush2.msra.mxu0 0.0
  %4049 = vmatprep.subr.mxu0 0.0
  %4050 = vmatpush2.msra.mxu0 0.0
  %4051 = vmatprep.subr.mxu0 0.0
  %4052 = vmatpush2.msra.mxu0 0.0
  %4053 = vmatprep.subr.mxu0 0.0
  %4054 = vmatpush2.msra.mxu0 0.0
  %4055 = vmatprep.subr.mxu0 0.0
  %4056 = vmatpush2.msra.mxu0 0.0
  %4057 = vmatprep.subr.mxu0 0.0
  %4058 = vmatpush2.msra.mxu0 0.0
  %4059 = vmatprep.subr.mxu0 0.0
  %4060 = vmatpush2.msra.mxu0 0.0
  %4061 = vmatprep.subr.mxu0 0.0
  %4062 = vmatpush2.msra.mxu0 0.0
  %4063 = vmatprep.subr.mxu0 0.0
  %4064 = vmatpush2.msra.mxu0 0.0
  %4065 = vmatprep.subr.mxu0 0.0
  %4066 = vmatpush2.msra.mxu0 0.0
  %4067 = vmatprep.subr.mxu0 0.0
  %4068 = vmatpush2.msra.mxu0 0.0
  %4069 = vmatprep.subr.mxu0 0.0
  %4070 = vmatpush2.msra.mxu0 0.0
  %4071 = vmatprep.subr.mxu0 0.0
  %4072 = vmatpush2.msra.mxu0 0.0
  %4073 = vmatprep.mubr.f32.mxu0 0.0
  %v4074 = vand.u32 %v3988, 4294901760
  %v4075 = vsub.f32 %v3988, %v4074
  %v4076 = vand.u32 %v4075, 4294901760
  %v4077 = vsub.f32 %v4075, %v4076
  %v4078 = vand.u32 %v4077, 4294901760
  %4079 = vmatmul.mubr.f32.gmra.mxu0 %v4078
  %v4080 = vpop.f32.mrf.mxu0
  %v4081 = vadd.f32 0.0, %v4080
  %v4082 = vpop.f32.mrf.mxu0
  %4083 = vdwg.mxu0
  %4084 = vmatprep.subr.mxu0 0.0
  %v4085 = vand.u32 %v109, 4294901760
  %v4086 = vsub.f32 %v109, %v4085
  %v4087 = vand.u32 %v4086, 4294901760
  %v4088 = vsub.f32 %v4086, %v4087
  %v4089 = vand.u32 %v4088, 4294901760
  %4090 = vmatpush1.msra.mxu0 %v4089
  %4091 = vmatprep.subr.mxu0 0.0
  %v4092 = vand.u32 %v108, 4294901760
  %v4093 = vsub.f32 %v108, %v4092
  %v4094 = vand.u32 %v4093, 4294901760
  %v4095 = vsub.f32 %v4093, %v4094
  %v4096 = vand.u32 %v4095, 4294901760
  %4097 = vmatpush1.msra.mxu0 %v4096
  %4098 = vmatprep.subr.mxu0 0.0
  %v4099 = vand.u32 %v107, 4294901760
  %v4100 = vsub.f32 %v107, %v4099
  %v4101 = vand.u32 %v4100, 4294901760
  %v4102 = vsub.f32 %v4100, %v4101
  %v4103 = vand.u32 %v4102, 4294901760
  %4104 = vmatpush1.msra.mxu0 %v4103
  %4105 = vmatprep.subr.mxu0 0.0
  %v4106 = vand.u32 %v106, 4294901760
  %v4107 = vsub.f32 %v106, %v4106
  %v4108 = vand.u32 %v4107, 4294901760
  %v4109 = vsub.f32 %v4107, %v4108
  %v4110 = vand.u32 %v4109, 4294901760
  %4111 = vmatpush1.msra.mxu0 %v4110
  %4112 = vmatprep.subr.mxu0 0.0
  %v4113 = vand.u32 %v105, 4294901760
  %v4114 = vsub.f32 %v105, %v4113
  %v4115 = vand.u32 %v4114, 4294901760
  %v4116 = vsub.f32 %v4114, %v4115
  %v4117 = vand.u32 %v4116, 4294901760
  %4118 = vmatpush1.msra.mxu0 %v4117
  %4119 = vmatprep.subr.mxu0 0.0
  %v4120 = vand.u32 %v104, 4294901760
  %v4121 = vsub.f32 %v104, %v4120
  %v4122 = vand.u32 %v4121, 4294901760
  %v4123 = vsub.f32 %v4121, %v4122
  %v4124 = vand.u32 %v4123, 4294901760
  %4125 = vmatpush1.msra.mxu0 %v4124
  %4126 = vmatprep.subr.mxu0 0.0
  %v4127 = vand.u32 %v103, 4294901760
  %v4128 = vsub.f32 %v103, %v4127
  %v4129 = vand.u32 %v4128, 4294901760
  %v4130 = vsub.f32 %v4128, %v4129
  %v4131 = vand.u32 %v4130, 4294901760
  %4132 = vmatpush1.msra.mxu0 %v4131
  %4133 = vmatprep.subr.mxu0 0.0
  %v4134 = vand.u32 %v102, 4294901760
  %v4135 = vsub.f32 %v102, %v4134
  %v4136 = vand.u32 %v4135, 4294901760
  %v4137 = vsub.f32 %v4135, %v4136
  %v4138 = vand.u32 %v4137, 4294901760
  %4139 = vmatpush1.msra.mxu0 %v4138
  %4140 = vmatprep.subr.mxu0 0.0
  %v4141 = vand.u32 %v101, 4294901760
  %v4142 = vsub.f32 %v101, %v4141
  %v4143 = vand.u32 %v4142, 4294901760
  %v4144 = vsub.f32 %v4142, %v4143
  %v4145 = vand.u32 %v4144, 4294901760
  %4146 = vmatpush1.msra.mxu0 %v4145
  %4147 = vmatprep.subr.mxu0 0.0
  %v4148 = vand.u32 %v100, 4294901760
  %v4149 = vsub.f32 %v100, %v4148
  %v4150 = vand.u32 %v4149, 4294901760
  %v4151 = vsub.f32 %v4149, %v4150
  %v4152 = vand.u32 %v4151, 4294901760
  %4153 = vmatpush1.msra.mxu0 %v4152
  %4154 = vmatprep.subr.mxu0 0.0
  %v4155 = vand.u32 %v99, 4294901760
  %v4156 = vsub.f32 %v99, %v4155
  %v4157 = vand.u32 %v4156, 4294901760
  %v4158 = vsub.f32 %v4156, %v4157
  %v4159 = vand.u32 %v4158, 4294901760
  %4160 = vmatpush1.msra.mxu0 %v4159
  %4161 = vmatprep.subr.mxu0 0.0
  %v4162 = vand.u32 %v98, 4294901760
  %v4163 = vsub.f32 %v98, %v4162
  %v4164 = vand.u32 %v4163, 4294901760
  %v4165 = vsub.f32 %v4163, %v4164
  %v4166 = vand.u32 %v4165, 4294901760
  %4167 = vmatpush1.msra.mxu0 %v4166
  %4168 = vmatprep.subr.mxu0 0.0
  %v4169 = vand.u32 %v97, 4294901760
  %v4170 = vsub.f32 %v97, %v4169
  %v4171 = vand.u32 %v4170, 4294901760
  %v4172 = vsub.f32 %v4170, %v4171
  %v4173 = vand.u32 %v4172, 4294901760
  %4174 = vmatpush1.msra.mxu0 %v4173
  %4175 = vmatprep.subr.mxu0 0.0
  %v4176 = vand.u32 %v96, 4294901760
  %v4177 = vsub.f32 %v96, %v4176
  %v4178 = vand.u32 %v4177, 4294901760
  %v4179 = vsub.f32 %v4177, %v4178
  %v4180 = vand.u32 %v4179, 4294901760
  %4181 = vmatpush1.msra.mxu0 %v4180
  %4182 = vmatprep.subr.mxu0 0.0
  %v4183 = vand.u32 %v95, 4294901760
  %v4184 = vsub.f32 %v95, %v4183
  %v4185 = vand.u32 %v4184, 4294901760
  %v4186 = vsub.f32 %v4184, %v4185
  %v4187 = vand.u32 %v4186, 4294901760
  %4188 = vmatpush1.msra.mxu0 %v4187
  %4189 = vmatprep.subr.mxu0 0.0
  %v4190 = vand.u32 %v94, 4294901760
  %v4191 = vsub.f32 %v94, %v4190
  %v4192 = vand.u32 %v4191, 4294901760
  %v4193 = vsub.f32 %v4191, %v4192
  %v4194 = vand.u32 %v4193, 4294901760
  %4195 = vmatpush1.msra.mxu0 %v4194
  %4196 = vmatprep.subr.mxu0 0.0
  %4197 = vmatpush2.msra.mxu0 0.0
  %4198 = vmatprep.subr.mxu0 0.0
  %4199 = vmatpush2.msra.mxu0 0.0
  %4200 = vmatprep.subr.mxu0 0.0
  %4201 = vmatpush2.msra.mxu0 0.0
  %4202 = vmatprep.subr.mxu0 0.0
  %4203 = vmatpush2.msra.mxu0 0.0
  %4204 = vmatprep.subr.mxu0 0.0
  %4205 = vmatpush2.msra.mxu0 0.0
  %4206 = vmatprep.subr.mxu0 0.0
  %4207 = vmatpush2.msra.mxu0 0.0
  %4208 = vmatprep.subr.mxu0 0.0
  %4209 = vmatpush2.msra.mxu0 0.0
  %4210 = vmatprep.subr.mxu0 0.0
  %4211 = vmatpush2.msra.mxu0 0.0
  %4212 = vmatprep.subr.mxu0 0.0
  %4213 = vmatpush2.msra.mxu0 0.0
  %4214 = vmatprep.subr.mxu0 0.0
  %4215 = vmatpush2.msra.mxu0 0.0
  %4216 = vmatprep.subr.mxu0 0.0
  %4217 = vmatpush2.msra.mxu0 0.0
  %4218 = vmatprep.subr.mxu0 0.0
  %4219 = vmatpush2.msra.mxu0 0.0
  %4220 = vmatprep.subr.mxu0 0.0
  %4221 = vmatpush2.msra.mxu0 0.0
  %4222 = vmatprep.subr.mxu0 0.0
  %4223 = vmatpush2.msra.mxu0 0.0
  %4224 = vmatprep.subr.mxu0 0.0
  %4225 = vmatpush2.msra.mxu0 0.0
  %4226 = vmatprep.subr.mxu0 0.0
  %4227 = vmatpush2.msra.mxu0 0.0
  %4228 = vmatprep.mubr.f32.mxu0 0.0
  %v4229 = vand.u32 %v3988, 4294901760
  %4230 = vmatmul.mubr.f32.gmra.mxu0 %v4229
  %v4231 = vpop.f32.mrf.mxu0
  %v4232 = vadd.f32 %v4081, %v4231
  %v4233 = vpop.f32.mrf.mxu0
  %4234 = vdwg.mxu0
  %4235 = vmatprep.subr.mxu0 0.0
  %v4236 = vand.u32 %v109, 4294901760
  %v4237 = vsub.f32 %v109, %v4236
  %4238 = vmatpush1.msra.mxu0 %v4237
  %4239 = vmatprep.subr.mxu0 0.0
  %v4240 = vand.u32 %v108, 4294901760
  %v4241 = vsub.f32 %v108, %v4240
  %4242 = vmatpush1.msra.mxu0 %v4241
  %4243 = vmatprep.subr.mxu0 0.0
  %v4244 = vand.u32 %v107, 4294901760
  %v4245 = vsub.f32 %v107, %v4244
  %4246 = vmatpush1.msra.mxu0 %v4245
  %4247 = vmatprep.subr.mxu0 0.0
  %v4248 = vand.u32 %v106, 4294901760
  %v4249 = vsub.f32 %v106, %v4248
  %4250 = vmatpush1.msra.mxu0 %v4249
  %4251 = vmatprep.subr.mxu0 0.0
  %v4252 = vand.u32 %v105, 4294901760
  %v4253 = vsub.f32 %v105, %v4252
  %4254 = vmatpush1.msra.mxu0 %v4253
  %4255 = vmatprep.subr.mxu0 0.0
  %v4256 = vand.u32 %v104, 4294901760
  %v4257 = vsub.f32 %v104, %v4256
  %4258 = vmatpush1.msra.mxu0 %v4257
  %4259 = vmatprep.subr.mxu0 0.0
  %v4260 = vand.u32 %v103, 4294901760
  %v4261 = vsub.f32 %v103, %v4260
  %4262 = vmatpush1.msra.mxu0 %v4261
  %4263 = vmatprep.subr.mxu0 0.0
  %v4264 = vand.u32 %v102, 4294901760
  %v4265 = vsub.f32 %v102, %v4264
  %4266 = vmatpush1.msra.mxu0 %v4265
  %4267 = vmatprep.subr.mxu0 0.0
  %v4268 = vand.u32 %v101, 4294901760
  %v4269 = vsub.f32 %v101, %v4268
  %4270 = vmatpush1.msra.mxu0 %v4269
  %4271 = vmatprep.subr.mxu0 0.0
  %v4272 = vand.u32 %v100, 4294901760
  %v4273 = vsub.f32 %v100, %v4272
  %4274 = vmatpush1.msra.mxu0 %v4273
  %4275 = vmatprep.subr.mxu0 0.0
  %v4276 = vand.u32 %v99, 4294901760
  %v4277 = vsub.f32 %v99, %v4276
  %4278 = vmatpush1.msra.mxu0 %v4277
  %4279 = vmatprep.subr.mxu0 0.0
  %v4280 = vand.u32 %v98, 4294901760
  %v4281 = vsub.f32 %v98, %v4280
  %4282 = vmatpush1.msra.mxu0 %v4281
  %4283 = vmatprep.subr.mxu0 0.0
  %v4284 = vand.u32 %v97, 4294901760
  %v4285 = vsub.f32 %v97, %v4284
  %4286 = vmatpush1.msra.mxu0 %v4285
  %4287 = vmatprep.subr.mxu0 0.0
  %v4288 = vand.u32 %v96, 4294901760
  %v4289 = vsub.f32 %v96, %v4288
  %4290 = vmatpush1.msra.mxu0 %v4289
  %4291 = vmatprep.subr.mxu0 0.0
  %v4292 = vand.u32 %v95, 4294901760
  %v4293 = vsub.f32 %v95, %v4292
  %4294 = vmatpush1.msra.mxu0 %v4293
  %4295 = vmatprep.subr.mxu0 0.0
  %v4296 = vand.u32 %v94, 4294901760
  %v4297 = vsub.f32 %v94, %v4296
  %4298 = vmatpush1.msra.mxu0 %v4297
  %4299 = vmatprep.subr.mxu0 0.0
  %4300 = vmatpush2.msra.mxu0 0.0
  %4301 = vmatprep.subr.mxu0 0.0
  %4302 = vmatpush2.msra.mxu0 0.0
  %4303 = vmatprep.subr.mxu0 0.0
  %4304 = vmatpush2.msra.mxu0 0.0
  %4305 = vmatprep.subr.mxu0 0.0
  %4306 = vmatpush2.msra.mxu0 0.0
  %4307 = vmatprep.subr.mxu0 0.0
  %4308 = vmatpush2.msra.mxu0 0.0
  %4309 = vmatprep.subr.mxu0 0.0
  %4310 = vmatpush2.msra.mxu0 0.0
  %4311 = vmatprep.subr.mxu0 0.0
  %4312 = vmatpush2.msra.mxu0 0.0
  %4313 = vmatprep.subr.mxu0 0.0
  %4314 = vmatpush2.msra.mxu0 0.0
  %4315 = vmatprep.subr.mxu0 0.0
  %4316 = vmatpush2.msra.mxu0 0.0
  %4317 = vmatprep.subr.mxu0 0.0
  %4318 = vmatpush2.msra.mxu0 0.0
  %4319 = vmatprep.subr.mxu0 0.0
  %4320 = vmatpush2.msra.mxu0 0.0
  %4321 = vmatprep.subr.mxu0 0.0
  %4322 = vmatpush2.msra.mxu0 0.0
  %4323 = vmatprep.subr.mxu0 0.0
  %4324 = vmatpush2.msra.mxu0 0.0
  %4325 = vmatprep.subr.mxu0 0.0
  %4326 = vmatpush2.msra.mxu0 0.0
  %4327 = vmatprep.subr.mxu0 0.0
  %4328 = vmatpush2.msra.mxu0 0.0
  %4329 = vmatprep.subr.mxu0 0.0
  %4330 = vmatpush2.msra.mxu0 0.0
  %4331 = vmatprep.mubr.f32.mxu0 0.0
  %v4332 = vand.u32 %v3988, 4294901760
  %v4333 = vsub.f32 %v3988, %v4332
  %4334 = vmatmul.mubr.f32.gmra.mxu0 %v4333
  %v4335 = vpop.f32.mrf.mxu0
  %v4336 = vadd.f32 %v4232, %v4335
  %v4337 = vpop.f32.mrf.mxu0
  %4338 = vdwg.mxu0
  %4339 = vmatprep.subr.mxu0 0.0
  %v4340 = vand.u32 %v109, 4294901760
  %4341 = vmatpush1.msra.mxu0 %v4340
  %4342 = vmatprep.subr.mxu0 0.0
  %v4343 = vand.u32 %v108, 4294901760
  %4344 = vmatpush1.msra.mxu0 %v4343
  %4345 = vmatprep.subr.mxu0 0.0
  %v4346 = vand.u32 %v107, 4294901760
  %4347 = vmatpush1.msra.mxu0 %v4346
  %4348 = vmatprep.subr.mxu0 0.0
  %v4349 = vand.u32 %v106, 4294901760
  %4350 = vmatpush1.msra.mxu0 %v4349
  %4351 = vmatprep.subr.mxu0 0.0
  %v4352 = vand.u32 %v105, 4294901760
  %4353 = vmatpush1.msra.mxu0 %v4352
  %4354 = vmatprep.subr.mxu0 0.0
  %v4355 = vand.u32 %v104, 4294901760
  %4356 = vmatpush1.msra.mxu0 %v4355
  %4357 = vmatprep.subr.mxu0 0.0
  %v4358 = vand.u32 %v103, 4294901760
  %4359 = vmatpush1.msra.mxu0 %v4358
  %4360 = vmatprep.subr.mxu0 0.0
  %v4361 = vand.u32 %v102, 4294901760
  %4362 = vmatpush1.msra.mxu0 %v4361
  %4363 = vmatprep.subr.mxu0 0.0
  %v4364 = vand.u32 %v101, 4294901760
  %4365 = vmatpush1.msra.mxu0 %v4364
  %4366 = vmatprep.subr.mxu0 0.0
  %v4367 = vand.u32 %v100, 4294901760
  %4368 = vmatpush1.msra.mxu0 %v4367
  %4369 = vmatprep.subr.mxu0 0.0
  %v4370 = vand.u32 %v99, 4294901760
  %4371 = vmatpush1.msra.mxu0 %v4370
  %4372 = vmatprep.subr.mxu0 0.0
  %v4373 = vand.u32 %v98, 4294901760
  %4374 = vmatpush1.msra.mxu0 %v4373
  %4375 = vmatprep.subr.mxu0 0.0
  %v4376 = vand.u32 %v97, 4294901760
  %4377 = vmatpush1.msra.mxu0 %v4376
  %4378 = vmatprep.subr.mxu0 0.0
  %v4379 = vand.u32 %v96, 4294901760
  %4380 = vmatpush1.msra.mxu0 %v4379
  %4381 = vmatprep.subr.mxu0 0.0
  %v4382 = vand.u32 %v95, 4294901760
  %4383 = vmatpush1.msra.mxu0 %v4382
  %4384 = vmatprep.subr.mxu0 0.0
  %v4385 = vand.u32 %v94, 4294901760
  %4386 = vmatpush1.msra.mxu0 %v4385
  %4387 = vmatprep.subr.mxu0 0.0
  %4388 = vmatpush2.msra.mxu0 0.0
  %4389 = vmatprep.subr.mxu0 0.0
  %4390 = vmatpush2.msra.mxu0 0.0
  %4391 = vmatprep.subr.mxu0 0.0
  %4392 = vmatpush2.msra.mxu0 0.0
  %4393 = vmatprep.subr.mxu0 0.0
  %4394 = vmatpush2.msra.mxu0 0.0
  %4395 = vmatprep.subr.mxu0 0.0
  %4396 = vmatpush2.msra.mxu0 0.0
  %4397 = vmatprep.subr.mxu0 0.0
  %4398 = vmatpush2.msra.mxu0 0.0
  %4399 = vmatprep.subr.mxu0 0.0
  %4400 = vmatpush2.msra.mxu0 0.0
  %4401 = vmatprep.subr.mxu0 0.0
  %4402 = vmatpush2.msra.mxu0 0.0
  %4403 = vmatprep.subr.mxu0 0.0
  %4404 = vmatpush2.msra.mxu0 0.0
  %4405 = vmatprep.subr.mxu0 0.0
  %4406 = vmatpush2.msra.mxu0 0.0
  %4407 = vmatprep.subr.mxu0 0.0
  %4408 = vmatpush2.msra.mxu0 0.0
  %4409 = vmatprep.subr.mxu0 0.0
  %4410 = vmatpush2.msra.mxu0 0.0
  %4411 = vmatprep.subr.mxu0 0.0
  %4412 = vmatpush2.msra.mxu0 0.0
  %4413 = vmatprep.subr.mxu0 0.0
  %4414 = vmatpush2.msra.mxu0 0.0
  %4415 = vmatprep.subr.mxu0 0.0
  %4416 = vmatpush2.msra.mxu0 0.0
  %4417 = vmatprep.subr.mxu0 0.0
  %4418 = vmatpush2.msra.mxu0 0.0
  %4419 = vmatprep.mubr.f32.mxu0 0.0
  %v4420 = vand.u32 %v3988, 4294901760
  %v4421 = vsub.f32 %v3988, %v4420
  %v4422 = vand.u32 %v4421, 4294901760
  %4423 = vmatmul.mubr.f32.gmra.mxu0 %v4422
  %v4424 = vpop.f32.mrf.mxu0
  %v4425 = vadd.f32 %v4336, %v4424
  %v4426 = vpop.f32.mrf.mxu0
  %4427 = vdwg.mxu0
  %4428 = vmatprep.subr.mxu0 0.0
  %v4429 = vand.u32 %v109, 4294901760
  %v4430 = vsub.f32 %v109, %v4429
  %v4431 = vand.u32 %v4430, 4294901760
  %4432 = vmatpush1.msra.mxu0 %v4431
  %4433 = vmatprep.subr.mxu0 0.0
  %v4434 = vand.u32 %v108, 4294901760
  %v4435 = vsub.f32 %v108, %v4434
  %v4436 = vand.u32 %v4435, 4294901760
  %4437 = vmatpush1.msra.mxu0 %v4436
  %4438 = vmatprep.subr.mxu0 0.0
  %v4439 = vand.u32 %v107, 4294901760
  %v4440 = vsub.f32 %v107, %v4439
  %v4441 = vand.u32 %v4440, 4294901760
  %4442 = vmatpush1.msra.mxu0 %v4441
  %4443 = vmatprep.subr.mxu0 0.0
  %v4444 = vand.u32 %v106, 4294901760
  %v4445 = vsub.f32 %v106, %v4444
  %v4446 = vand.u32 %v4445, 4294901760
  %4447 = vmatpush1.msra.mxu0 %v4446
  %4448 = vmatprep.subr.mxu0 0.0
  %v4449 = vand.u32 %v105, 4294901760
  %v4450 = vsub.f32 %v105, %v4449
  %v4451 = vand.u32 %v4450, 4294901760
  %4452 = vmatpush1.msra.mxu0 %v4451
  %4453 = vmatprep.subr.mxu0 0.0
  %v4454 = vand.u32 %v104, 4294901760
  %v4455 = vsub.f32 %v104, %v4454
  %v4456 = vand.u32 %v4455, 4294901760
  %4457 = vmatpush1.msra.mxu0 %v4456
  %4458 = vmatprep.subr.mxu0 0.0
  %v4459 = vand.u32 %v103, 4294901760
  %v4460 = vsub.f32 %v103, %v4459
  %v4461 = vand.u32 %v4460, 4294901760
  %4462 = vmatpush1.msra.mxu0 %v4461
  %4463 = vmatprep.subr.mxu0 0.0
  %v4464 = vand.u32 %v102, 4294901760
  %v4465 = vsub.f32 %v102, %v4464
  %v4466 = vand.u32 %v4465, 4294901760
  %4467 = vmatpush1.msra.mxu0 %v4466
  %4468 = vmatprep.subr.mxu0 0.0
  %v4469 = vand.u32 %v101, 4294901760
  %v4470 = vsub.f32 %v101, %v4469
  %v4471 = vand.u32 %v4470, 4294901760
  %4472 = vmatpush1.msra.mxu0 %v4471
  %4473 = vmatprep.subr.mxu0 0.0
  %v4474 = vand.u32 %v100, 4294901760
  %v4475 = vsub.f32 %v100, %v4474
  %v4476 = vand.u32 %v4475, 4294901760
  %4477 = vmatpush1.msra.mxu0 %v4476
  %4478 = vmatprep.subr.mxu0 0.0
  %v4479 = vand.u32 %v99, 4294901760
  %v4480 = vsub.f32 %v99, %v4479
  %v4481 = vand.u32 %v4480, 4294901760
  %4482 = vmatpush1.msra.mxu0 %v4481
  %4483 = vmatprep.subr.mxu0 0.0
  %v4484 = vand.u32 %v98, 4294901760
  %v4485 = vsub.f32 %v98, %v4484
  %v4486 = vand.u32 %v4485, 4294901760
  %4487 = vmatpush1.msra.mxu0 %v4486
  %4488 = vmatprep.subr.mxu0 0.0
  %v4489 = vand.u32 %v97, 4294901760
  %v4490 = vsub.f32 %v97, %v4489
  %v4491 = vand.u32 %v4490, 4294901760
  %4492 = vmatpush1.msra.mxu0 %v4491
  %4493 = vmatprep.subr.mxu0 0.0
  %v4494 = vand.u32 %v96, 4294901760
  %v4495 = vsub.f32 %v96, %v4494
  %v4496 = vand.u32 %v4495, 4294901760
  %4497 = vmatpush1.msra.mxu0 %v4496
  %4498 = vmatprep.subr.mxu0 0.0
  %v4499 = vand.u32 %v95, 4294901760
  %v4500 = vsub.f32 %v95, %v4499
  %v4501 = vand.u32 %v4500, 4294901760
  %4502 = vmatpush1.msra.mxu0 %v4501
  %4503 = vmatprep.subr.mxu0 0.0
  %v4504 = vand.u32 %v94, 4294901760
  %v4505 = vsub.f32 %v94, %v4504
  %v4506 = vand.u32 %v4505, 4294901760
  %4507 = vmatpush1.msra.mxu0 %v4506
  %4508 = vmatprep.subr.mxu0 0.0
  %4509 = vmatpush2.msra.mxu0 0.0
  %4510 = vmatprep.subr.mxu0 0.0
  %4511 = vmatpush2.msra.mxu0 0.0
  %4512 = vmatprep.subr.mxu0 0.0
  %4513 = vmatpush2.msra.mxu0 0.0
  %4514 = vmatprep.subr.mxu0 0.0
  %4515 = vmatpush2.msra.mxu0 0.0
  %4516 = vmatprep.subr.mxu0 0.0
  %4517 = vmatpush2.msra.mxu0 0.0
  %4518 = vmatprep.subr.mxu0 0.0
  %4519 = vmatpush2.msra.mxu0 0.0
  %4520 = vmatprep.subr.mxu0 0.0
  %4521 = vmatpush2.msra.mxu0 0.0
  %4522 = vmatprep.subr.mxu0 0.0
  %4523 = vmatpush2.msra.mxu0 0.0
  %4524 = vmatprep.subr.mxu0 0.0
  %4525 = vmatpush2.msra.mxu0 0.0
  %4526 = vmatprep.subr.mxu0 0.0
  %4527 = vmatpush2.msra.mxu0 0.0
  %4528 = vmatprep.subr.mxu0 0.0
  %4529 = vmatpush2.msra.mxu0 0.0
  %4530 = vmatprep.subr.mxu0 0.0
  %4531 = vmatpush2.msra.mxu0 0.0
  %4532 = vmatprep.subr.mxu0 0.0
  %4533 = vmatpush2.msra.mxu0 0.0
  %4534 = vmatprep.subr.mxu0 0.0
  %4535 = vmatpush2.msra.mxu0 0.0
  %4536 = vmatprep.subr.mxu0 0.0
  %4537 = vmatpush2.msra.mxu0 0.0
  %4538 = vmatprep.subr.mxu0 0.0
  %4539 = vmatpush2.msra.mxu0 0.0
  %4540 = vmatprep.mubr.f32.mxu0 0.0
  %v4541 = vand.u32 %v3988, 4294901760
  %4542 = vmatmul.mubr.f32.gmra.mxu0 %v4541
  %v4543 = vpop.f32.mrf.mxu0
  %v4544 = vadd.f32 %v4425, %v4543
  %v4545 = vpop.f32.mrf.mxu0
  %4546 = vdwg.mxu0
  %4547 = vmatprep.subr.mxu0 0.0
  %v4548 = vand.u32 %v109, 4294901760
  %4549 = vmatpush1.msra.mxu0 %v4548
  %4550 = vmatprep.subr.mxu0 0.0
  %v4551 = vand.u32 %v108, 4294901760
  %4552 = vmatpush1.msra.mxu0 %v4551
  %4553 = vmatprep.subr.mxu0 0.0
  %v4554 = vand.u32 %v107, 4294901760
  %4555 = vmatpush1.msra.mxu0 %v4554
  %4556 = vmatprep.subr.mxu0 0.0
  %v4557 = vand.u32 %v106, 4294901760
  %4558 = vmatpush1.msra.mxu0 %v4557
  %4559 = vmatprep.subr.mxu0 0.0
  %v4560 = vand.u32 %v105, 4294901760
  %4561 = vmatpush1.msra.mxu0 %v4560
  %4562 = vmatprep.subr.mxu0 0.0
  %v4563 = vand.u32 %v104, 4294901760
  %4564 = vmatpush1.msra.mxu0 %v4563
  %4565 = vmatprep.subr.mxu0 0.0
  %v4566 = vand.u32 %v103, 4294901760
  %4567 = vmatpush1.msra.mxu0 %v4566
  %4568 = vmatprep.subr.mxu0 0.0
  %v4569 = vand.u32 %v102, 4294901760
  %4570 = vmatpush1.msra.mxu0 %v4569
  %4571 = vmatprep.subr.mxu0 0.0
  %v4572 = vand.u32 %v101, 4294901760
  %4573 = vmatpush1.msra.mxu0 %v4572
  %4574 = vmatprep.subr.mxu0 0.0
  %v4575 = vand.u32 %v100, 4294901760
  %4576 = vmatpush1.msra.mxu0 %v4575
  %4577 = vmatprep.subr.mxu0 0.0
  %v4578 = vand.u32 %v99, 4294901760
  %4579 = vmatpush1.msra.mxu0 %v4578
  %4580 = vmatprep.subr.mxu0 0.0
  %v4581 = vand.u32 %v98, 4294901760
  %4582 = vmatpush1.msra.mxu0 %v4581
  %4583 = vmatprep.subr.mxu0 0.0
  %v4584 = vand.u32 %v97, 4294901760
  %4585 = vmatpush1.msra.mxu0 %v4584
  %4586 = vmatprep.subr.mxu0 0.0
  %v4587 = vand.u32 %v96, 4294901760
  %4588 = vmatpush1.msra.mxu0 %v4587
  %4589 = vmatprep.subr.mxu0 0.0
  %v4590 = vand.u32 %v95, 4294901760
  %4591 = vmatpush1.msra.mxu0 %v4590
  %4592 = vmatprep.subr.mxu0 0.0
  %v4593 = vand.u32 %v94, 4294901760
  %4594 = vmatpush1.msra.mxu0 %v4593
  %4595 = vmatprep.subr.mxu0 0.0
  %4596 = vmatpush2.msra.mxu0 0.0
  %4597 = vmatprep.subr.mxu0 0.0
  %4598 = vmatpush2.msra.mxu0 0.0
  %4599 = vmatprep.subr.mxu0 0.0
  %4600 = vmatpush2.msra.mxu0 0.0
  %4601 = vmatprep.subr.mxu0 0.0
  %4602 = vmatpush2.msra.mxu0 0.0
  %4603 = vmatprep.subr.mxu0 0.0
  %4604 = vmatpush2.msra.mxu0 0.0
  %4605 = vmatprep.subr.mxu0 0.0
  %4606 = vmatpush2.msra.mxu0 0.0
  %4607 = vmatprep.subr.mxu0 0.0
  %4608 = vmatpush2.msra.mxu0 0.0
  %4609 = vmatprep.subr.mxu0 0.0
  %4610 = vmatpush2.msra.mxu0 0.0
  %4611 = vmatprep.subr.mxu0 0.0
  %4612 = vmatpush2.msra.mxu0 0.0
  %4613 = vmatprep.subr.mxu0 0.0
  %4614 = vmatpush2.msra.mxu0 0.0
  %4615 = vmatprep.subr.mxu0 0.0
  %4616 = vmatpush2.msra.mxu0 0.0
  %4617 = vmatprep.subr.mxu0 0.0
  %4618 = vmatpush2.msra.mxu0 0.0
  %4619 = vmatprep.subr.mxu0 0.0
  %4620 = vmatpush2.msra.mxu0 0.0
  %4621 = vmatprep.subr.mxu0 0.0
  %4622 = vmatpush2.msra.mxu0 0.0
  %4623 = vmatprep.subr.mxu0 0.0
  %4624 = vmatpush2.msra.mxu0 0.0
  %4625 = vmatprep.subr.mxu0 0.0
  %4626 = vmatpush2.msra.mxu0 0.0
  %4627 = vmatprep.mubr.f32.mxu0 0.0
  %v4628 = vand.u32 %v3988, 4294901760
  %4629 = vmatmul.mubr.f32.gmra.mxu0 %v4628
  %v4630 = vpop.f32.mrf.mxu0
  %v4631 = vadd.f32 %v4544, %v4630
  %v4632 = vpop.f32.mrf.mxu0
  %4633 = vdwg.mxu0
  %v4634 = vadd.f32 %v3992, %v4631
  %v4635 = vtanh.pop %v4634
  %s4636 = scalar_lea.vmem %s3, 48
  %4637 = vst [vmem:[%s4636] sm:$0xff] %v4635
  %s4638 = scalar_lea.vmem %s0, 56
  %v4639 = vld [vmem:[%s4638] sm:$0xff]
  %4640 = vmatprep.subr.mxu0 0.0
  %v4641 = vand.u32 %v109, 4294901760
  %4642 = vmatpush1.msra.mxu0 %v4641
  %4643 = vmatprep.subr.mxu0 0.0
  %v4644 = vand.u32 %v108, 4294901760
  %4645 = vmatpush1.msra.mxu0 %v4644
  %4646 = vmatprep.subr.mxu0 0.0
  %v4647 = vand.u32 %v107, 4294901760
  %4648 = vmatpush1.msra.mxu0 %v4647
  %4649 = vmatprep.subr.mxu0 0.0
  %v4650 = vand.u32 %v106, 4294901760
  %4651 = vmatpush1.msra.mxu0 %v4650
  %4652 = vmatprep.subr.mxu0 0.0
  %v4653 = vand.u32 %v105, 4294901760
  %4654 = vmatpush1.msra.mxu0 %v4653
  %4655 = vmatprep.subr.mxu0 0.0
  %v4656 = vand.u32 %v104, 4294901760
  %4657 = vmatpush1.msra.mxu0 %v4656
  %4658 = vmatprep.subr.mxu0 0.0
  %v4659 = vand.u32 %v103, 4294901760
  %4660 = vmatpush1.msra.mxu0 %v4659
  %4661 = vmatprep.subr.mxu0 0.0
  %v4662 = vand.u32 %v102, 4294901760
  %4663 = vmatpush1.msra.mxu0 %v4662
  %4664 = vmatprep.subr.mxu0 0.0
  %v4665 = vand.u32 %v101, 4294901760
  %4666 = vmatpush1.msra.mxu0 %v4665
  %4667 = vmatprep.subr.mxu0 0.0
  %v4668 = vand.u32 %v100, 4294901760
  %4669 = vmatpush1.msra.mxu0 %v4668
  %4670 = vmatprep.subr.mxu0 0.0
  %v4671 = vand.u32 %v99, 4294901760
  %4672 = vmatpush1.msra.mxu0 %v4671
  %4673 = vmatprep.subr.mxu0 0.0
  %v4674 = vand.u32 %v98, 4294901760
  %4675 = vmatpush1.msra.mxu0 %v4674
  %4676 = vmatprep.subr.mxu0 0.0
  %v4677 = vand.u32 %v97, 4294901760
  %4678 = vmatpush1.msra.mxu0 %v4677
  %4679 = vmatprep.subr.mxu0 0.0
  %v4680 = vand.u32 %v96, 4294901760
  %4681 = vmatpush1.msra.mxu0 %v4680
  %4682 = vmatprep.subr.mxu0 0.0
  %v4683 = vand.u32 %v95, 4294901760
  %4684 = vmatpush1.msra.mxu0 %v4683
  %4685 = vmatprep.subr.mxu0 0.0
  %v4686 = vand.u32 %v94, 4294901760
  %4687 = vmatpush1.msra.mxu0 %v4686
  %4688 = vmatprep.subr.mxu0 0.0
  %4689 = vmatpush2.msra.mxu0 0.0
  %4690 = vmatprep.subr.mxu0 0.0
  %4691 = vmatpush2.msra.mxu0 0.0
  %4692 = vmatprep.subr.mxu0 0.0
  %4693 = vmatpush2.msra.mxu0 0.0
  %4694 = vmatprep.subr.mxu0 0.0
  %4695 = vmatpush2.msra.mxu0 0.0
  %4696 = vmatprep.subr.mxu0 0.0
  %4697 = vmatpush2.msra.mxu0 0.0
  %4698 = vmatprep.subr.mxu0 0.0
  %4699 = vmatpush2.msra.mxu0 0.0
  %4700 = vmatprep.subr.mxu0 0.0
  %4701 = vmatpush2.msra.mxu0 0.0
  %4702 = vmatprep.subr.mxu0 0.0
  %4703 = vmatpush2.msra.mxu0 0.0
  %4704 = vmatprep.subr.mxu0 0.0
  %4705 = vmatpush2.msra.mxu0 0.0
  %4706 = vmatprep.subr.mxu0 0.0
  %4707 = vmatpush2.msra.mxu0 0.0
  %4708 = vmatprep.subr.mxu0 0.0
  %4709 = vmatpush2.msra.mxu0 0.0
  %4710 = vmatprep.subr.mxu0 0.0
  %4711 = vmatpush2.msra.mxu0 0.0
  %4712 = vmatprep.subr.mxu0 0.0
  %4713 = vmatpush2.msra.mxu0 0.0
  %4714 = vmatprep.subr.mxu0 0.0
  %4715 = vmatpush2.msra.mxu0 0.0
  %4716 = vmatprep.subr.mxu0 0.0
  %4717 = vmatpush2.msra.mxu0 0.0
  %4718 = vmatprep.subr.mxu0 0.0
  %4719 = vmatpush2.msra.mxu0 0.0
  %4720 = vmatprep.mubr.f32.mxu0 0.0
  %v4721 = vand.u32 %v4635, 4294901760
  %v4722 = vsub.f32 %v4635, %v4721
  %v4723 = vand.u32 %v4722, 4294901760
  %v4724 = vsub.f32 %v4722, %v4723
  %v4725 = vand.u32 %v4724, 4294901760
  %4726 = vmatmul.mubr.f32.gmra.mxu0 %v4725
  %v4727 = vpop.f32.mrf.mxu0
  %v4728 = vadd.f32 0.0, %v4727
  %v4729 = vpop.f32.mrf.mxu0
  %4730 = vdwg.mxu0
  %4731 = vmatprep.subr.mxu0 0.0
  %v4732 = vand.u32 %v109, 4294901760
  %v4733 = vsub.f32 %v109, %v4732
  %v4734 = vand.u32 %v4733, 4294901760
  %v4735 = vsub.f32 %v4733, %v4734
  %v4736 = vand.u32 %v4735, 4294901760
  %4737 = vmatpush1.msra.mxu0 %v4736
  %4738 = vmatprep.subr.mxu0 0.0
  %v4739 = vand.u32 %v108, 4294901760
  %v4740 = vsub.f32 %v108, %v4739
  %v4741 = vand.u32 %v4740, 4294901760
  %v4742 = vsub.f32 %v4740, %v4741
  %v4743 = vand.u32 %v4742, 4294901760
  %4744 = vmatpush1.msra.mxu0 %v4743
  %4745 = vmatprep.subr.mxu0 0.0
  %v4746 = vand.u32 %v107, 4294901760
  %v4747 = vsub.f32 %v107, %v4746
  %v4748 = vand.u32 %v4747, 4294901760
  %v4749 = vsub.f32 %v4747, %v4748
  %v4750 = vand.u32 %v4749, 4294901760
  %4751 = vmatpush1.msra.mxu0 %v4750
  %4752 = vmatprep.subr.mxu0 0.0
  %v4753 = vand.u32 %v106, 4294901760
  %v4754 = vsub.f32 %v106, %v4753
  %v4755 = vand.u32 %v4754, 4294901760
  %v4756 = vsub.f32 %v4754, %v4755
  %v4757 = vand.u32 %v4756, 4294901760
  %4758 = vmatpush1.msra.mxu0 %v4757
  %4759 = vmatprep.subr.mxu0 0.0
  %v4760 = vand.u32 %v105, 4294901760
  %v4761 = vsub.f32 %v105, %v4760
  %v4762 = vand.u32 %v4761, 4294901760
  %v4763 = vsub.f32 %v4761, %v4762
  %v4764 = vand.u32 %v4763, 4294901760
  %4765 = vmatpush1.msra.mxu0 %v4764
  %4766 = vmatprep.subr.mxu0 0.0
  %v4767 = vand.u32 %v104, 4294901760
  %v4768 = vsub.f32 %v104, %v4767
  %v4769 = vand.u32 %v4768, 4294901760
  %v4770 = vsub.f32 %v4768, %v4769
  %v4771 = vand.u32 %v4770, 4294901760
  %4772 = vmatpush1.msra.mxu0 %v4771
  %4773 = vmatprep.subr.mxu0 0.0
  %v4774 = vand.u32 %v103, 4294901760
  %v4775 = vsub.f32 %v103, %v4774
  %v4776 = vand.u32 %v4775, 4294901760
  %v4777 = vsub.f32 %v4775, %v4776
  %v4778 = vand.u32 %v4777, 4294901760
  %4779 = vmatpush1.msra.mxu0 %v4778
  %4780 = vmatprep.subr.mxu0 0.0
  %v4781 = vand.u32 %v102, 4294901760
  %v4782 = vsub.f32 %v102, %v4781
  %v4783 = vand.u32 %v4782, 4294901760
  %v4784 = vsub.f32 %v4782, %v4783
  %v4785 = vand.u32 %v4784, 4294901760
  %4786 = vmatpush1.msra.mxu0 %v4785
  %4787 = vmatprep.subr.mxu0 0.0
  %v4788 = vand.u32 %v101, 4294901760
  %v4789 = vsub.f32 %v101, %v4788
  %v4790 = vand.u32 %v4789, 4294901760
  %v4791 = vsub.f32 %v4789, %v4790
  %v4792 = vand.u32 %v4791, 4294901760
  %4793 = vmatpush1.msra.mxu0 %v4792
  %4794 = vmatprep.subr.mxu0 0.0
  %v4795 = vand.u32 %v100, 4294901760
  %v4796 = vsub.f32 %v100, %v4795
  %v4797 = vand.u32 %v4796, 4294901760
  %v4798 = vsub.f32 %v4796, %v4797
  %v4799 = vand.u32 %v4798, 4294901760
  %4800 = vmatpush1.msra.mxu0 %v4799
  %4801 = vmatprep.subr.mxu0 0.0
  %v4802 = vand.u32 %v99, 4294901760
  %v4803 = vsub.f32 %v99, %v4802
  %v4804 = vand.u32 %v4803, 4294901760
  %v4805 = vsub.f32 %v4803, %v4804
  %v4806 = vand.u32 %v4805, 4294901760
  %4807 = vmatpush1.msra.mxu0 %v4806
  %4808 = vmatprep.subr.mxu0 0.0
  %v4809 = vand.u32 %v98, 4294901760
  %v4810 = vsub.f32 %v98, %v4809
  %v4811 = vand.u32 %v4810, 4294901760
  %v4812 = vsub.f32 %v4810, %v4811
  %v4813 = vand.u32 %v4812, 4294901760
  %4814 = vmatpush1.msra.mxu0 %v4813
  %4815 = vmatprep.subr.mxu0 0.0
  %v4816 = vand.u32 %v97, 4294901760
  %v4817 = vsub.f32 %v97, %v4816
  %v4818 = vand.u32 %v4817, 4294901760
  %v4819 = vsub.f32 %v4817, %v4818
  %v4820 = vand.u32 %v4819, 4294901760
  %4821 = vmatpush1.msra.mxu0 %v4820
  %4822 = vmatprep.subr.mxu0 0.0
  %v4823 = vand.u32 %v96, 4294901760
  %v4824 = vsub.f32 %v96, %v4823
  %v4825 = vand.u32 %v4824, 4294901760
  %v4826 = vsub.f32 %v4824, %v4825
  %v4827 = vand.u32 %v4826, 4294901760
  %4828 = vmatpush1.msra.mxu0 %v4827
  %4829 = vmatprep.subr.mxu0 0.0
  %v4830 = vand.u32 %v95, 4294901760
  %v4831 = vsub.f32 %v95, %v4830
  %v4832 = vand.u32 %v4831, 4294901760
  %v4833 = vsub.f32 %v4831, %v4832
  %v4834 = vand.u32 %v4833, 4294901760
  %4835 = vmatpush1.msra.mxu0 %v4834
  %4836 = vmatprep.subr.mxu0 0.0
  %v4837 = vand.u32 %v94, 4294901760
  %v4838 = vsub.f32 %v94, %v4837
  %v4839 = vand.u32 %v4838, 4294901760
  %v4840 = vsub.f32 %v4838, %v4839
  %v4841 = vand.u32 %v4840, 4294901760
  %4842 = vmatpush1.msra.mxu0 %v4841
  %4843 = vmatprep.subr.mxu0 0.0
  %4844 = vmatpush2.msra.mxu0 0.0
  %4845 = vmatprep.subr.mxu0 0.0
  %4846 = vmatpush2.msra.mxu0 0.0
  %4847 = vmatprep.subr.mxu0 0.0
  %4848 = vmatpush2.msra.mxu0 0.0
  %4849 = vmatprep.subr.mxu0 0.0
  %4850 = vmatpush2.msra.mxu0 0.0
  %4851 = vmatprep.subr.mxu0 0.0
  %4852 = vmatpush2.msra.mxu0 0.0
  %4853 = vmatprep.subr.mxu0 0.0
  %4854 = vmatpush2.msra.mxu0 0.0
  %4855 = vmatprep.subr.mxu0 0.0
  %4856 = vmatpush2.msra.mxu0 0.0
  %4857 = vmatprep.subr.mxu0 0.0
  %4858 = vmatpush2.msra.mxu0 0.0
  %4859 = vmatprep.subr.mxu0 0.0
  %4860 = vmatpush2.msra.mxu0 0.0
  %4861 = vmatprep.subr.mxu0 0.0
  %4862 = vmatpush2.msra.mxu0 0.0
  %4863 = vmatprep.subr.mxu0 0.0
  %4864 = vmatpush2.msra.mxu0 0.0
  %4865 = vmatprep.subr.mxu0 0.0
  %4866 = vmatpush2.msra.mxu0 0.0
  %4867 = vmatprep.subr.mxu0 0.0
  %4868 = vmatpush2.msra.mxu0 0.0
  %4869 = vmatprep.subr.mxu0 0.0
  %4870 = vmatpush2.msra.mxu0 0.0
  %4871 = vmatprep.subr.mxu0 0.0
  %4872 = vmatpush2.msra.mxu0 0.0
  %4873 = vmatprep.subr.mxu0 0.0
  %4874 = vmatpush2.msra.mxu0 0.0
  %4875 = vmatprep.mubr.f32.mxu0 0.0
  %v4876 = vand.u32 %v4635, 4294901760
  %4877 = vmatmul.mubr.f32.gmra.mxu0 %v4876
  %v4878 = vpop.f32.mrf.mxu0
  %v4879 = vadd.f32 %v4728, %v4878
  %v4880 = vpop.f32.mrf.mxu0
  %4881 = vdwg.mxu0
  %4882 = vmatprep.subr.mxu0 0.0
  %v4883 = vand.u32 %v109, 4294901760
  %v4884 = vsub.f32 %v109, %v4883
  %4885 = vmatpush1.msra.mxu0 %v4884
  %4886 = vmatprep.subr.mxu0 0.0
  %v4887 = vand.u32 %v108, 4294901760
  %v4888 = vsub.f32 %v108, %v4887
  %4889 = vmatpush1.msra.mxu0 %v4888
  %4890 = vmatprep.subr.mxu0 0.0
  %v4891 = vand.u32 %v107, 4294901760
  %v4892 = vsub.f32 %v107, %v4891
  %4893 = vmatpush1.msra.mxu0 %v4892
  %4894 = vmatprep.subr.mxu0 0.0
  %v4895 = vand.u32 %v106, 4294901760
  %v4896 = vsub.f32 %v106, %v4895
  %4897 = vmatpush1.msra.mxu0 %v4896
  %4898 = vmatprep.subr.mxu0 0.0
  %v4899 = vand.u32 %v105, 4294901760
  %v4900 = vsub.f32 %v105, %v4899
  %4901 = vmatpush1.msra.mxu0 %v4900
  %4902 = vmatprep.subr.mxu0 0.0
  %v4903 = vand.u32 %v104, 4294901760
  %v4904 = vsub.f32 %v104, %v4903
  %4905 = vmatpush1.msra.mxu0 %v4904
  %4906 = vmatprep.subr.mxu0 0.0
  %v4907 = vand.u32 %v103, 4294901760
  %v4908 = vsub.f32 %v103, %v4907
  %4909 = vmatpush1.msra.mxu0 %v4908
  %4910 = vmatprep.subr.mxu0 0.0
  %v4911 = vand.u32 %v102, 4294901760
  %v4912 = vsub.f32 %v102, %v4911
  %4913 = vmatpush1.msra.mxu0 %v4912
  %4914 = vmatprep.subr.mxu0 0.0
  %v4915 = vand.u32 %v101, 4294901760
  %v4916 = vsub.f32 %v101, %v4915
  %4917 = vmatpush1.msra.mxu0 %v4916
  %4918 = vmatprep.subr.mxu0 0.0
  %v4919 = vand.u32 %v100, 4294901760
  %v4920 = vsub.f32 %v100, %v4919
  %4921 = vmatpush1.msra.mxu0 %v4920
  %4922 = vmatprep.subr.mxu0 0.0
  %v4923 = vand.u32 %v99, 4294901760
  %v4924 = vsub.f32 %v99, %v4923
  %4925 = vmatpush1.msra.mxu0 %v4924
  %4926 = vmatprep.subr.mxu0 0.0
  %v4927 = vand.u32 %v98, 4294901760
  %v4928 = vsub.f32 %v98, %v4927
  %4929 = vmatpush1.msra.mxu0 %v4928
  %4930 = vmatprep.subr.mxu0 0.0
  %v4931 = vand.u32 %v97, 4294901760
  %v4932 = vsub.f32 %v97, %v4931
  %4933 = vmatpush1.msra.mxu0 %v4932
  %4934 = vmatprep.subr.mxu0 0.0
  %v4935 = vand.u32 %v96, 4294901760
  %v4936 = vsub.f32 %v96, %v4935
  %4937 = vmatpush1.msra.mxu0 %v4936
  %4938 = vmatprep.subr.mxu0 0.0
  %v4939 = vand.u32 %v95, 4294901760
  %v4940 = vsub.f32 %v95, %v4939
  %4941 = vmatpush1.msra.mxu0 %v4940
  %4942 = vmatprep.subr.mxu0 0.0
  %v4943 = vand.u32 %v94, 4294901760
  %v4944 = vsub.f32 %v94, %v4943
  %4945 = vmatpush1.msra.mxu0 %v4944
  %4946 = vmatprep.subr.mxu0 0.0
  %4947 = vmatpush2.msra.mxu0 0.0
  %4948 = vmatprep.subr.mxu0 0.0
  %4949 = vmatpush2.msra.mxu0 0.0
  %4950 = vmatprep.subr.mxu0 0.0
  %4951 = vmatpush2.msra.mxu0 0.0
  %4952 = vmatprep.subr.mxu0 0.0
  %4953 = vmatpush2.msra.mxu0 0.0
  %4954 = vmatprep.subr.mxu0 0.0
  %4955 = vmatpush2.msra.mxu0 0.0
  %4956 = vmatprep.subr.mxu0 0.0
  %4957 = vmatpush2.msra.mxu0 0.0
  %4958 = vmatprep.subr.mxu0 0.0
  %4959 = vmatpush2.msra.mxu0 0.0
  %4960 = vmatprep.subr.mxu0 0.0
  %4961 = vmatpush2.msra.mxu0 0.0
  %4962 = vmatprep.subr.mxu0 0.0
  %4963 = vmatpush2.msra.mxu0 0.0
  %4964 = vmatprep.subr.mxu0 0.0
  %4965 = vmatpush2.msra.mxu0 0.0
  %4966 = vmatprep.subr.mxu0 0.0
  %4967 = vmatpush2.msra.mxu0 0.0
  %4968 = vmatprep.subr.mxu0 0.0
  %4969 = vmatpush2.msra.mxu0 0.0
  %4970 = vmatprep.subr.mxu0 0.0
  %4971 = vmatpush2.msra.mxu0 0.0
  %4972 = vmatprep.subr.mxu0 0.0
  %4973 = vmatpush2.msra.mxu0 0.0
  %4974 = vmatprep.subr.mxu0 0.0
  %4975 = vmatpush2.msra.mxu0 0.0
  %4976 = vmatprep.subr.mxu0 0.0
  %4977 = vmatpush2.msra.mxu0 0.0
  %4978 = vmatprep.mubr.f32.mxu0 0.0
  %v4979 = vand.u32 %v4635, 4294901760
  %v4980 = vsub.f32 %v4635, %v4979
  %4981 = vmatmul.mubr.f32.gmra.mxu0 %v4980
  %v4982 = vpop.f32.mrf.mxu0
  %v4983 = vadd.f32 %v4879, %v4982
  %v4984 = vpop.f32.mrf.mxu0
  %4985 = vdwg.mxu0
  %4986 = vmatprep.subr.mxu0 0.0
  %v4987 = vand.u32 %v109, 4294901760
  %4988 = vmatpush1.msra.mxu0 %v4987
  %4989 = vmatprep.subr.mxu0 0.0
  %v4990 = vand.u32 %v108, 4294901760
  %4991 = vmatpush1.msra.mxu0 %v4990
  %4992 = vmatprep.subr.mxu0 0.0
  %v4993 = vand.u32 %v107, 4294901760
  %4994 = vmatpush1.msra.mxu0 %v4993
  %4995 = vmatprep.subr.mxu0 0.0
  %v4996 = vand.u32 %v106, 4294901760
  %4997 = vmatpush1.msra.mxu0 %v4996
  %4998 = vmatprep.subr.mxu0 0.0
  %v4999 = vand.u32 %v105, 4294901760
  %5000 = vmatpush1.msra.mxu0 %v4999
  %5001 = vmatprep.subr.mxu0 0.0
  %v5002 = vand.u32 %v104, 4294901760
  %5003 = vmatpush1.msra.mxu0 %v5002
  %5004 = vmatprep.subr.mxu0 0.0
  %v5005 = vand.u32 %v103, 4294901760
  %5006 = vmatpush1.msra.mxu0 %v5005
  %5007 = vmatprep.subr.mxu0 0.0
  %v5008 = vand.u32 %v102, 4294901760
  %5009 = vmatpush1.msra.mxu0 %v5008
  %5010 = vmatprep.subr.mxu0 0.0
  %v5011 = vand.u32 %v101, 4294901760
  %5012 = vmatpush1.msra.mxu0 %v5011
  %5013 = vmatprep.subr.mxu0 0.0
  %v5014 = vand.u32 %v100, 4294901760
  %5015 = vmatpush1.msra.mxu0 %v5014
  %5016 = vmatprep.subr.mxu0 0.0
  %v5017 = vand.u32 %v99, 4294901760
  %5018 = vmatpush1.msra.mxu0 %v5017
  %5019 = vmatprep.subr.mxu0 0.0
  %v5020 = vand.u32 %v98, 4294901760
  %5021 = vmatpush1.msra.mxu0 %v5020
  %5022 = vmatprep.subr.mxu0 0.0
  %v5023 = vand.u32 %v97, 4294901760
  %5024 = vmatpush1.msra.mxu0 %v5023
  %5025 = vmatprep.subr.mxu0 0.0
  %v5026 = vand.u32 %v96, 4294901760
  %5027 = vmatpush1.msra.mxu0 %v5026
  %5028 = vmatprep.subr.mxu0 0.0
  %v5029 = vand.u32 %v95, 4294901760
  %5030 = vmatpush1.msra.mxu0 %v5029
  %5031 = vmatprep.subr.mxu0 0.0
  %v5032 = vand.u32 %v94, 4294901760
  %5033 = vmatpush1.msra.mxu0 %v5032
  %5034 = vmatprep.subr.mxu0 0.0
  %5035 = vmatpush2.msra.mxu0 0.0
  %5036 = vmatprep.subr.mxu0 0.0
  %5037 = vmatpush2.msra.mxu0 0.0
  %5038 = vmatprep.subr.mxu0 0.0
  %5039 = vmatpush2.msra.mxu0 0.0
  %5040 = vmatprep.subr.mxu0 0.0
  %5041 = vmatpush2.msra.mxu0 0.0
  %5042 = vmatprep.subr.mxu0 0.0
  %5043 = vmatpush2.msra.mxu0 0.0
  %5044 = vmatprep.subr.mxu0 0.0
  %5045 = vmatpush2.msra.mxu0 0.0
  %5046 = vmatprep.subr.mxu0 0.0
  %5047 = vmatpush2.msra.mxu0 0.0
  %5048 = vmatprep.subr.mxu0 0.0
  %5049 = vmatpush2.msra.mxu0 0.0
  %5050 = vmatprep.subr.mxu0 0.0
  %5051 = vmatpush2.msra.mxu0 0.0
  %5052 = vmatprep.subr.mxu0 0.0
  %5053 = vmatpush2.msra.mxu0 0.0
  %5054 = vmatprep.subr.mxu0 0.0
  %5055 = vmatpush2.msra.mxu0 0.0
  %5056 = vmatprep.subr.mxu0 0.0
  %5057 = vmatpush2.msra.mxu0 0.0
  %5058 = vmatprep.subr.mxu0 0.0
  %5059 = vmatpush2.msra.mxu0 0.0
  %5060 = vmatprep.subr.mxu0 0.0
  %5061 = vmatpush2.msra.mxu0 0.0
  %5062 = vmatprep.subr.mxu0 0.0
  %5063 = vmatpush2.msra.mxu0 0.0
  %5064 = vmatprep.subr.mxu0 0.0
  %5065 = vmatpush2.msra.mxu0 0.0
  %5066 = vmatprep.mubr.f32.mxu0 0.0
  %v5067 = vand.u32 %v4635, 4294901760
  %v5068 = vsub.f32 %v4635, %v5067
  %v5069 = vand.u32 %v5068, 4294901760
  %5070 = vmatmul.mubr.f32.gmra.mxu0 %v5069
  %v5071 = vpop.f32.mrf.mxu0
  %v5072 = vadd.f32 %v4983, %v5071
  %v5073 = vpop.f32.mrf.mxu0
  %5074 = vdwg.mxu0
  %5075 = vmatprep.subr.mxu0 0.0
  %v5076 = vand.u32 %v109, 4294901760
  %v5077 = vsub.f32 %v109, %v5076
  %v5078 = vand.u32 %v5077, 4294901760
  %5079 = vmatpush1.msra.mxu0 %v5078
  %5080 = vmatprep.subr.mxu0 0.0
  %v5081 = vand.u32 %v108, 4294901760
  %v5082 = vsub.f32 %v108, %v5081
  %v5083 = vand.u32 %v5082, 4294901760
  %5084 = vmatpush1.msra.mxu0 %v5083
  %5085 = vmatprep.subr.mxu0 0.0
  %v5086 = vand.u32 %v107, 4294901760
  %v5087 = vsub.f32 %v107, %v5086
  %v5088 = vand.u32 %v5087, 4294901760
  %5089 = vmatpush1.msra.mxu0 %v5088
  %5090 = vmatprep.subr.mxu0 0.0
  %v5091 = vand.u32 %v106, 4294901760
  %v5092 = vsub.f32 %v106, %v5091
  %v5093 = vand.u32 %v5092, 4294901760
  %5094 = vmatpush1.msra.mxu0 %v5093
  %5095 = vmatprep.subr.mxu0 0.0
  %v5096 = vand.u32 %v105, 4294901760
  %v5097 = vsub.f32 %v105, %v5096
  %v5098 = vand.u32 %v5097, 4294901760
  %5099 = vmatpush1.msra.mxu0 %v5098
  %5100 = vmatprep.subr.mxu0 0.0
  %v5101 = vand.u32 %v104, 4294901760
  %v5102 = vsub.f32 %v104, %v5101
  %v5103 = vand.u32 %v5102, 4294901760
  %5104 = vmatpush1.msra.mxu0 %v5103
  %5105 = vmatprep.subr.mxu0 0.0
  %v5106 = vand.u32 %v103, 4294901760
  %v5107 = vsub.f32 %v103, %v5106
  %v5108 = vand.u32 %v5107, 4294901760
  %5109 = vmatpush1.msra.mxu0 %v5108
  %5110 = vmatprep.subr.mxu0 0.0
  %v5111 = vand.u32 %v102, 4294901760
  %v5112 = vsub.f32 %v102, %v5111
  %v5113 = vand.u32 %v5112, 4294901760
  %5114 = vmatpush1.msra.mxu0 %v5113
  %5115 = vmatprep.subr.mxu0 0.0
  %v5116 = vand.u32 %v101, 4294901760
  %v5117 = vsub.f32 %v101, %v5116
  %v5118 = vand.u32 %v5117, 4294901760
  %5119 = vmatpush1.msra.mxu0 %v5118
  %5120 = vmatprep.subr.mxu0 0.0
  %v5121 = vand.u32 %v100, 4294901760
  %v5122 = vsub.f32 %v100, %v5121
  %v5123 = vand.u32 %v5122, 4294901760
  %5124 = vmatpush1.msra.mxu0 %v5123
  %5125 = vmatprep.subr.mxu0 0.0
  %v5126 = vand.u32 %v99, 4294901760
  %v5127 = vsub.f32 %v99, %v5126
  %v5128 = vand.u32 %v5127, 4294901760
  %5129 = vmatpush1.msra.mxu0 %v5128
  %5130 = vmatprep.subr.mxu0 0.0
  %v5131 = vand.u32 %v98, 4294901760
  %v5132 = vsub.f32 %v98, %v5131
  %v5133 = vand.u32 %v5132, 4294901760
  %5134 = vmatpush1.msra.mxu0 %v5133
  %5135 = vmatprep.subr.mxu0 0.0
  %v5136 = vand.u32 %v97, 4294901760
  %v5137 = vsub.f32 %v97, %v5136
  %v5138 = vand.u32 %v5137, 4294901760
  %5139 = vmatpush1.msra.mxu0 %v5138
  %5140 = vmatprep.subr.mxu0 0.0
  %v5141 = vand.u32 %v96, 4294901760
  %v5142 = vsub.f32 %v96, %v5141
  %v5143 = vand.u32 %v5142, 4294901760
  %5144 = vmatpush1.msra.mxu0 %v5143
  %5145 = vmatprep.subr.mxu0 0.0
  %v5146 = vand.u32 %v95, 4294901760
  %v5147 = vsub.f32 %v95, %v5146
  %v5148 = vand.u32 %v5147, 4294901760
  %5149 = vmatpush1.msra.mxu0 %v5148
  %5150 = vmatprep.subr.mxu0 0.0
  %v5151 = vand.u32 %v94, 4294901760
  %v5152 = vsub.f32 %v94, %v5151
  %v5153 = vand.u32 %v5152, 4294901760
  %5154 = vmatpush1.msra.mxu0 %v5153
  %5155 = vmatprep.subr.mxu0 0.0
  %5156 = vmatpush2.msra.mxu0 0.0
  %5157 = vmatprep.subr.mxu0 0.0
  %5158 = vmatpush2.msra.mxu0 0.0
  %5159 = vmatprep.subr.mxu0 0.0
  %5160 = vmatpush2.msra.mxu0 0.0
  %5161 = vmatprep.subr.mxu0 0.0
  %5162 = vmatpush2.msra.mxu0 0.0
  %5163 = vmatprep.subr.mxu0 0.0
  %5164 = vmatpush2.msra.mxu0 0.0
  %5165 = vmatprep.subr.mxu0 0.0
  %5166 = vmatpush2.msra.mxu0 0.0
  %5167 = vmatprep.subr.mxu0 0.0
  %5168 = vmatpush2.msra.mxu0 0.0
  %5169 = vmatprep.subr.mxu0 0.0
  %5170 = vmatpush2.msra.mxu0 0.0
  %5171 = vmatprep.subr.mxu0 0.0
  %5172 = vmatpush2.msra.mxu0 0.0
  %5173 = vmatprep.subr.mxu0 0.0
  %5174 = vmatpush2.msra.mxu0 0.0
  %5175 = vmatprep.subr.mxu0 0.0
  %5176 = vmatpush2.msra.mxu0 0.0
  %5177 = vmatprep.subr.mxu0 0.0
  %5178 = vmatpush2.msra.mxu0 0.0
  %5179 = vmatprep.subr.mxu0 0.0
  %5180 = vmatpush2.msra.mxu0 0.0
  %5181 = vmatprep.subr.mxu0 0.0
  %5182 = vmatpush2.msra.mxu0 0.0
  %5183 = vmatprep.subr.mxu0 0.0
  %5184 = vmatpush2.msra.mxu0 0.0
  %5185 = vmatprep.subr.mxu0 0.0
  %5186 = vmatpush2.msra.mxu0 0.0
  %5187 = vmatprep.mubr.f32.mxu0 0.0
  %v5188 = vand.u32 %v4635, 4294901760
  %5189 = vmatmul.mubr.f32.gmra.mxu0 %v5188
  %v5190 = vpop.f32.mrf.mxu0
  %v5191 = vadd.f32 %v5072, %v5190
  %v5192 = vpop.f32.mrf.mxu0
  %5193 = vdwg.mxu0
  %5194 = vmatprep.subr.mxu0 0.0
  %v5195 = vand.u32 %v109, 4294901760
  %5196 = vmatpush1.msra.mxu0 %v5195
  %5197 = vmatprep.subr.mxu0 0.0
  %v5198 = vand.u32 %v108, 4294901760
  %5199 = vmatpush1.msra.mxu0 %v5198
  %5200 = vmatprep.subr.mxu0 0.0
  %v5201 = vand.u32 %v107, 4294901760
  %5202 = vmatpush1.msra.mxu0 %v5201
  %5203 = vmatprep.subr.mxu0 0.0
  %v5204 = vand.u32 %v106, 4294901760
  %5205 = vmatpush1.msra.mxu0 %v5204
  %5206 = vmatprep.subr.mxu0 0.0
  %v5207 = vand.u32 %v105, 4294901760
  %5208 = vmatpush1.msra.mxu0 %v5207
  %5209 = vmatprep.subr.mxu0 0.0
  %v5210 = vand.u32 %v104, 4294901760
  %5211 = vmatpush1.msra.mxu0 %v5210
  %5212 = vmatprep.subr.mxu0 0.0
  %v5213 = vand.u32 %v103, 4294901760
  %5214 = vmatpush1.msra.mxu0 %v5213
  %5215 = vmatprep.subr.mxu0 0.0
  %v5216 = vand.u32 %v102, 4294901760
  %5217 = vmatpush1.msra.mxu0 %v5216
  %5218 = vmatprep.subr.mxu0 0.0
  %v5219 = vand.u32 %v101, 4294901760
  %5220 = vmatpush1.msra.mxu0 %v5219
  %5221 = vmatprep.subr.mxu0 0.0
  %v5222 = vand.u32 %v100, 4294901760
  %5223 = vmatpush1.msra.mxu0 %v5222
  %5224 = vmatprep.subr.mxu0 0.0
  %v5225 = vand.u32 %v99, 4294901760
  %5226 = vmatpush1.msra.mxu0 %v5225
  %5227 = vmatprep.subr.mxu0 0.0
  %v5228 = vand.u32 %v98, 4294901760
  %5229 = vmatpush1.msra.mxu0 %v5228
  %5230 = vmatprep.subr.mxu0 0.0
  %v5231 = vand.u32 %v97, 4294901760
  %5232 = vmatpush1.msra.mxu0 %v5231
  %5233 = vmatprep.subr.mxu0 0.0
  %v5234 = vand.u32 %v96, 4294901760
  %5235 = vmatpush1.msra.mxu0 %v5234
  %5236 = vmatprep.subr.mxu0 0.0
  %v5237 = vand.u32 %v95, 4294901760
  %5238 = vmatpush1.msra.mxu0 %v5237
  %5239 = vmatprep.subr.mxu0 0.0
  %v5240 = vand.u32 %v94, 4294901760
  %5241 = vmatpush1.msra.mxu0 %v5240
  %5242 = vmatprep.subr.mxu0 0.0
  %5243 = vmatpush2.msra.mxu0 0.0
  %5244 = vmatprep.subr.mxu0 0.0
  %5245 = vmatpush2.msra.mxu0 0.0
  %5246 = vmatprep.subr.mxu0 0.0
  %5247 = vmatpush2.msra.mxu0 0.0
  %5248 = vmatprep.subr.mxu0 0.0
  %5249 = vmatpush2.msra.mxu0 0.0
  %5250 = vmatprep.subr.mxu0 0.0
  %5251 = vmatpush2.msra.mxu0 0.0
  %5252 = vmatprep.subr.mxu0 0.0
  %5253 = vmatpush2.msra.mxu0 0.0
  %5254 = vmatprep.subr.mxu0 0.0
  %5255 = vmatpush2.msra.mxu0 0.0
  %5256 = vmatprep.subr.mxu0 0.0
  %5257 = vmatpush2.msra.mxu0 0.0
  %5258 = vmatprep.subr.mxu0 0.0
  %5259 = vmatpush2.msra.mxu0 0.0
  %5260 = vmatprep.subr.mxu0 0.0
  %5261 = vmatpush2.msra.mxu0 0.0
  %5262 = vmatprep.subr.mxu0 0.0
  %5263 = vmatpush2.msra.mxu0 0.0
  %5264 = vmatprep.subr.mxu0 0.0
  %5265 = vmatpush2.msra.mxu0 0.0
  %5266 = vmatprep.subr.mxu0 0.0
  %5267 = vmatpush2.msra.mxu0 0.0
  %5268 = vmatprep.subr.mxu0 0.0
  %5269 = vmatpush2.msra.mxu0 0.0
  %5270 = vmatprep.subr.mxu0 0.0
  %5271 = vmatpush2.msra.mxu0 0.0
  %5272 = vmatprep.subr.mxu0 0.0
  %5273 = vmatpush2.msra.mxu0 0.0
  %5274 = vmatprep.mubr.f32.mxu0 0.0
  %v5275 = vand.u32 %v4635, 4294901760
  %5276 = vmatmul.mubr.f32.gmra.mxu0 %v5275
  %v5277 = vpop.f32.mrf.mxu0
  %v5278 = vadd.f32 %v5191, %v5277
  %v5279 = vpop.f32.mrf.mxu0
  %5280 = vdwg.mxu0
  %v5281 = vadd.f32 %v4639, %v5278
  %v5282 = vtanh.pop %v5281
  %s5283 = scalar_lea.vmem %s3, 56
  %5284 = vst [vmem:[%s5283] sm:$0xff] %v5282
  %5285 = vst [vmem:[#allocation3] sm:$0xff] %v5282
  // Predicated region
  $region48: #{rnn_forward.1} parent=0 // pred_check
    _
  $region49: #{rnn_forward.1} parent=0 // pred_check_branch
    %5287 = sbr.rel (0) target = $region51
  $region50: #{rnn_forward.1} parent=0 // pred_region
    _
  $region51: #{rnn_forward.1} parent=0 // pred_fallthru
    _
  // Predicated region
  $region52: #{rnn_forward.1} parent=0 // pred_check
    _
  $region53: #{rnn_forward.1} parent=0 // pred_check_branch
    %5289 = sbr.rel (0) target = $region55
  $region54: #{rnn_forward.1} parent=0 // pred_region
    _
  $region55: #{rnn_forward.1} parent=0 // pred_fallthru
    _
  %5290 = vsyncmov [#allocation4]
  %s5291 = vpop.sfrf %5290
  %p5292 = scmp.eq.s32.totalorder %s5291, 0
  %p5293 = pneg %p5292
  %5295 = shalt.err (%p5293)

</llo_original>
